<compile_context>
chip_gen: v7x
topology: tpu7x:2x2x1
jax: 0.10.0
libtpu: 0.0.40
codegen_flags: <defaults>
</compile_context>

<pallas_src>
import functools

import jax
import jax.numpy as jnp
import numpy as np
from jax import lax
from jax.experimental import pallas as pl
from jax.experimental.pallas import tpu as pltpu


def _round_up(x, m):
    return ((x + m - 1) // m) * m


def _sigmoid(x):
    # Single EUP op (tanh) per sigmoid; exact.
    return 0.5 * jnp.tanh(0.5 * x) + 0.5


def _lstm_decoder_kernel(x_ref, wih_hbm, whh_hbm, b_ref, wout_ref, bout_ref,
                         h0_ref, c0_ref,
                         out_ref, hn_ref, cn_ref,
                         wih_vmem, whh_vmem, xg_ref, y_ref, dma_sem,
                         *, n_layers, hidden_pad, time_block, seq_len):
    """One grid step == `time_block` timesteps, all layers (layer-major)."""
    tblk = pl.program_id(0)
    L, Hp, TB = n_layers, hidden_pad, time_block
    Bp = x_ref.shape[1]
    Op = out_ref.shape[-1]
    has_tail = (seq_len % TB) != 0
    first = tblk == 0

    @pl.when(first)
    def _start():
        # Per-layer single-buffered weight DMAs; waited on right before first use.
        for l in range(L):
            pltpu.make_async_copy(wih_hbm.at[l], wih_vmem.at[l],
                                  dma_sem.at[0, l]).start()
            pltpu.make_async_copy(whh_hbm.at[l], whh_vmem.at[l],
                                  dma_sem.at[1, l]).start()
        # h_n / c_n output blocks have constant index maps -> VMEM-resident for
        # the whole grid; use them directly as the recurrent state storage.
        hn_ref[...] = h0_ref[...]
        cn_ref[...] = c0_ref[...]

    # Grid-invariant small operands: load once per grid step.
    w_out = wout_ref[...]                       # (Hp, Op)  bf16
    b_out = bout_ref[...]                       # (1, Op)   f32

    for l in range(L):
        @pl.when(first)
        def _wait(l=l):
            pltpu.make_async_copy(wih_hbm.at[l], wih_vmem.at[l],
                                  dma_sem.at[0, l]).wait()
            pltpu.make_async_copy(whh_hbm.at[l], whh_vmem.at[l],
                                  dma_sem.at[1, l]).wait()

        w_ih = wih_vmem[l]                      # (Hp, 4Hp) bf16
        w_hh = whh_vmem[l]                      # (Hp, 4Hp) bf16
        bias = b_ref[l]                         # (1, 4Hp)  f32

        # Batched input GEMM for the whole time block (off the serial path).
        # Layer 0 reads the x block; deeper layers read the previous layer's
        # output, which was written into y_ref.
        src = x_ref if l == 0 else y_ref
        xg = jnp.dot(src[...].reshape(TB * Bp, Hp), w_ih,
                     preferred_element_type=jnp.float32)
        xg_ref[...] = xg.reshape(TB, Bp, 4 * Hp)

        def step(tb, carry, w_hh=w_hh, bias=bias):
            h, c = carry                        # f32 (Bp, Hp) SSA carries
            gates = (xg_ref[tb]
                     + jnp.dot(h.astype(jnp.bfloat16), w_hh,
                               preferred_element_type=jnp.float32)
                     + bias)
            i_g = _sigmoid(gates[:, 0 * Hp:1 * Hp])
            f_g = _sigmoid(gates[:, 1 * Hp:2 * Hp])
            g_g = jnp.tanh(gates[:, 2 * Hp:3 * Hp])
            o_g = _sigmoid(gates[:, 3 * Hp:4 * Hp])
            c_new = f_g * c + i_g * g_g
            h_new = o_g * jnp.tanh(c_new)
            if has_tail:
                # Padding timesteps exist only in the last grid block; zero
                # padded weight/bias columns keep padded h/c lanes exactly 0.
                valid = (tblk * TB + tb) < seq_len
                h_new = jnp.where(valid, h_new, h)
                c_new = jnp.where(valid, c_new, c)
            y_ref[tb] = h_new.astype(jnp.bfloat16)   # input to the next layer
            return h_new, c_new

        h_fin, c_fin = lax.fori_loop(0, TB, step, (hn_ref[l], cn_ref[l]),
                                     unroll=True)
        hn_ref[l] = h_fin
        cn_ref[l] = c_fin
        # dropout between layers: eval-mode no-op

    # Batched output projection for the whole time block; Op is a multiple of
    # 128 and the block is time-major -> lane-dense unmasked stores.
    logits = jnp.dot(y_ref[...].reshape(TB * Bp, Hp), w_out,
                     preferred_element_type=jnp.float32) + b_out
    out_ref[...] = logits.reshape(TB, Bp, Op).astype(out_ref.dtype)


class BaseDecoderPallas:
    """Deterministically-initialized JAX/Pallas port of BaseDecoder (eval mode)."""

    def __init__(self, hidden_size, vocab_size, output_size, n_layers,
                 dropout=0.2, share_weight=False, seed=0, time_block=8):
        self.hidden_size = hidden_size
        self.vocab_size = vocab_size
        self.output_size = output_size
        self.n_layers = n_layers
        self.time_block = time_block
        self.hidden_pad = _round_up(hidden_size, 128)   # lane-align H
        self.output_pad = _round_up(output_size, 128)   # lane-dense logits

        H, V, O, L = hidden_size, vocab_size, output_size, n_layers
        Hp, Op = self.hidden_pad, self.output_pad

        key = jax.random.PRNGKey(seed)
        keys = jax.random.split(key, 3 + 4 * n_layers)

        # Embedding: N(0,1) init, padding_idx=0 row zeroed (PyTorch semantics).
        emb = jax.random.normal(keys[0], (V, H), jnp.float32)
        emb = emb.at[0].set(0.0)

        # Output projection: uniform(-1/sqrt(H), 1/sqrt(H)) like nn.Linear.
        k_lin = 1.0 / np.sqrt(H)
        w_out = jax.random.uniform(keys[1], (O, H), jnp.float32, -k_lin, k_lin)
        b_out = jax.random.uniform(keys[2], (O,), jnp.float32, -k_lin, k_lin)
        if share_weight:
            emb = w_out   # requires vocab_size == output_size

        # LSTM weights per layer, uniform(-1/sqrt(H), 1/sqrt(H)); gate order i,f,g,o.
        k_lstm = 1.0 / np.sqrt(H)
        wih_T, whh_T, bias = [], [], []
        for l in range(L):
            k0, k1, k2, k3 = keys[3 + 4 * l: 3 + 4 * (l + 1)]
            w_ih = jax.random.uniform(k0, (4 * H, H), jnp.float32, -k_lstm, k_lstm)
            w_hh = jax.random.uniform(k1, (4 * H, H), jnp.float32, -k_lstm, k_lstm)
            b_ih = jax.random.uniform(k2, (4 * H,), jnp.float32, -k_lstm, k_lstm)
            b_hh = jax.random.uniform(k3, (4 * H,), jnp.float32, -k_lstm, k_lstm)
            wih_T.append(w_ih.T)                  # (H, 4H)
            whh_T.append(w_hh.T)                  # (H, 4H)
            bias.append((b_ih + b_hh)[None, :])   # (1, 4H)

        # Unpadded f32 params kept for the pure-JAX reference.
        self._raw = dict(embedding=emb, wih_T=wih_T, whh_T=whh_T, bias=bias,
                         wout_T=w_out.T, bout=b_out[None, :])

        # ---- Padded kernel parameters ---------------------------------------
        def pad_gate_cols(mat):
            # (rows, 4H) -> (rows, 4Hp): each H-wide gate block lands at g*Hp.
            out = jnp.zeros((mat.shape[0], 4 * Hp), jnp.float32)
            for g in range(4):
                out = out.at[:, g * Hp: g * Hp + H].set(mat[:, g * H:(g + 1) * H])
            return out

        wih_p, whh_p, bias_p = [], [], []
        for l in range(L):
            wih_p.append(jnp.zeros((Hp, 4 * Hp), jnp.float32)
                         .at[:H].set(pad_gate_cols(wih_T[l])))
            whh_p.append(jnp.zeros((Hp, 4 * Hp), jnp.float32)
                         .at[:H].set(pad_gate_cols(whh_T[l])))
            bias_p.append(pad_gate_cols(bias[l]))               # (1, 4Hp)

        emb_p = jnp.zeros((V, Hp), jnp.float32).at[:, :H].set(emb)
        wout_p = jnp.zeros((Hp, Op), jnp.float32).at[:H, :O].set(w_out.T)
        bout_p = jnp.zeros((1, Op), jnp.float32).at[:, :O].set(b_out[None, :])

        self.params = dict(
            embedding=emb_p.astype(jnp.bfloat16),             # (V, Hp)       bf16
            wih_T=jnp.stack(wih_p).astype(jnp.bfloat16),       # (L, Hp, 4Hp)  bf16
            whh_T=jnp.stack(whh_p).astype(jnp.bfloat16),       # (L, Hp, 4Hp)  bf16
            bias=jnp.stack(bias_p),                            # (L, 1, 4Hp)   f32
            wout_T=wout_p.astype(jnp.bfloat16),                # (Hp, Op)      bf16
            bout=bout_p,                                       # (1, Op)       f32
        )

    def _vmem_limit_bytes(self, Bp, TB):
        Hp, Op, L = self.hidden_pad, self.output_pad, self.n_layers
        weights = 2 * L * Hp * 4 * Hp * 2                 # single-buffered W scratch
        xg = TB * Bp * 4 * Hp * 4
        y = TB * Bp * Hp * 2
        x_blk = 2 * TB * Bp * Hp * 2                      # double-buffered x block
        o_blk = 2 * TB * Bp * Op * 4                      # double-buffered out block
        state = 4 * 2 * L * Bp * Hp * 4                   # h0/c0/hn/cn (2-buffered)
        small = 2 * (L * 4 * Hp * 4 + Hp * Op * 2 + Op * 4)
        total = weights + xg + y + x_blk + o_blk + state + small
        return int(min(128 << 20, max(32 << 20, int(1.5 * total) + (2 << 20))))

    def __call__(self, inputs, length=None, hidden=None):
        # TODO(synk): length path (sort + pack_padded_sequence) not implemented.
        assert length is None
        p = self.params
        B, T = inputs.shape
        H, O, L = self.hidden_size, self.output_size, self.n_layers
        Hp, Op = self.hidden_pad, self.output_pad
        Bp = _round_up(B, 16)            # bf16 (16,128) sublane packing
        TB = self.time_block
        Tp = _round_up(T, TB)

        # Time-major token layout (transpose the tiny int array, not activations);
        # padded tokens are 0 == padding_idx -> embed to exact zeros.
        tok = jnp.transpose(inputs.astype(jnp.int32))                 # (T, B)
        tok = jnp.pad(tok, ((0, Tp - T), (0, Bp - B)))                # (Tp, Bp)
        x = jnp.take(p["embedding"], tok, axis=0)                     # (Tp,Bp,Hp) bf16

        if hidden is None:
            h0 = jnp.zeros((L, Bp, Hp), jnp.float32)
            c0 = jnp.zeros((L, Bp, Hp), jnp.float32)
        else:
            h0_u, c0_u = hidden
            h0 = jnp.zeros((L, Bp, Hp), jnp.float32).at[:, :B, :H].set(h0_u)
            c0 = jnp.zeros((L, Bp, Hp), jnp.float32).at[:, :B, :H].set(c0_u)

        kernel = functools.partial(_lstm_decoder_kernel, n_layers=L,
                                   hidden_pad=Hp, time_block=TB, seq_len=T)

        grid_spec = pltpu.PrefetchScalarGridSpec(
            num_scalar_prefetch=0,
            grid=(Tp // TB,),
            in_specs=[
                pl.BlockSpec((TB, Bp, Hp), lambda t: (t, 0, 0)),     # x (time-major)
                pl.BlockSpec(memory_space=pl.ANY),                   # W_ih^T (HBM)
                pl.BlockSpec(memory_space=pl.ANY),                   # W_hh^T (HBM)
                pl.BlockSpec((L, 1, 4 * Hp), lambda t: (0, 0, 0)),   # fused bias
                pl.BlockSpec((Hp, Op), lambda t: (0, 0)),            # W_out^T
                pl.BlockSpec((1, Op), lambda t: (0, 0)),             # b_out
                pl.BlockSpec((L, Bp, Hp), lambda t: (0, 0, 0)),      # h0
                pl.BlockSpec((L, Bp, Hp), lambda t: (0, 0, 0)),      # c0
            ],
            out_specs=[
                pl.BlockSpec((TB, Bp, Op), lambda t: (t, 0, 0)),     # logits
                pl.BlockSpec((L, Bp, Hp), lambda t: (0, 0, 0)),      # h_n
                pl.BlockSpec((L, Bp, Hp), lambda t: (0, 0, 0)),      # c_n
            ],
            scratch_shapes=[
                pltpu.VMEM((L, Hp, 4 * Hp), jnp.bfloat16),   # W_ih^T (single-buffered)
                pltpu.VMEM((L, Hp, 4 * Hp), jnp.bfloat16),   # W_hh^T (single-buffered)
                pltpu.VMEM((TB, Bp, 4 * Hp), jnp.float32),   # batched input-GEMM gates
                pltpu.VMEM((TB, Bp, Hp), jnp.bfloat16),      # layer I/O (time block)
                pltpu.SemaphoreType.DMA((2, L)),             # per-layer copy sems
            ],
        )

        out_t, h_n, c_n = pl.pallas_call(
            kernel,
            grid_spec=grid_spec,
            out_shape=[
                jax.ShapeDtypeStruct((Tp, Bp, Op), jnp.float32),
                jax.ShapeDtypeStruct((L, Bp, Hp), jnp.float32),
                jax.ShapeDtypeStruct((L, Bp, Hp), jnp.float32),
            ],
            compiler_params=pltpu.CompilerParams(
                dimension_semantics=("arbitrary",),          # time is a recurrence
                vmem_limit_bytes=self._vmem_limit_bytes(Bp, TB)),
        )(x, p["wih_T"], p["whh_T"], p["bias"], p["wout_T"], p["bout"], h0, c0)

        outputs = jnp.transpose(out_t, (1, 0, 2))[:B, :T, :O]   # batch-first (B,T,O)
        return outputs, (h_n[:, :B, :H], c_n[:, :B, :H])


def _reference_forward(model, inputs):
    """Pure-JAX reference with PyTorch LSTM math (eval mode).

    MXU operands are cast to bf16 (f32 accumulation) to match the kernel's
    declared matmul precision; gate math and state stay f32.
    """
    r = model._raw
    B, T = inputs.shape
    H, L = model.hidden_size, model.n_layers
    bf = jnp.bfloat16
    x = jnp.take(r["embedding"], inputs, axis=0).astype(jnp.float32)  # (B,T,H)
    h = jnp.zeros((L, B, H), jnp.float32)
    c = jnp.zeros((L, B, H), jnp.float32)
    outs = []
    for t in range(T):
        layer_in = x[:, t, :]
        new_h, new_c = [], []
        for l in range(L):
            gates = (jnp.dot(layer_in.astype(bf), r["wih_T"][l].astype(bf),
                             preferred_element_type=jnp.float32)
                     + jnp.dot(h[l].astype(bf), r["whh_T"][l].astype(bf),
                               preferred_element_type=jnp.float32)
                     + r["bias"][l])
            i_g = jax.nn.sigmoid(gates[:, 0 * H:1 * H])
            f_g = jax.nn.sigmoid(gates[:, 1 * H:2 * H])
            g_g = jnp.tanh(gates[:, 2 * H:3 * H])
            o_g = jax.nn.sigmoid(gates[:, 3 * H:4 * H])
            c_l = f_g * c[l] + i_g * g_g
            h_l = o_g * jnp.tanh(c_l)
            new_h.append(h_l)
            new_c.append(c_l)
            layer_in = h_l
        h, c = jnp.stack(new_h), jnp.stack(new_c)
        outs.append(jnp.dot(layer_in.astype(bf), r["wout_T"].astype(bf),
                            preferred_element_type=jnp.float32) + r["bout"])
    return jnp.stack(outs, axis=1), (h, c)


if __name__ == "__main__":
    B, T = 2, 8
    hidden_size, vocab_size, output_size, n_layers = 32, 20, 16, 2

    model = BaseDecoderPallas(hidden_size, vocab_size, output_size, n_layers,
                              dropout=0.2, share_weight=False, seed=0,
                              time_block=8)

    key = jax.random.PRNGKey(0)
    inputs = jax.random.randint(key, (B, T), 0, vocab_size, dtype=jnp.int32)

    outputs, (h_n, c_n) = model(inputs)
    jax.block_until_ready((outputs, h_n, c_n))

    ref_out, (ref_h, ref_c) = _reference_forward(model, inputs)
    np.testing.assert_allclose(np.asarray(outputs), np.asarray(ref_out),
                               rtol=2e-2, atol=2e-2)
    np.testing.assert_allclose(np.asarray(h_n), np.asarray(ref_h),
                               rtol=2e-2, atol=2e-2)
    np.testing.assert_allclose(np.asarray(c_n), np.asarray(ref_c),
                               rtol=2e-2, atol=2e-2)

    assert outputs.shape == (B, T, output_size)
    assert h_n.shape == (n_layers, B, hidden_size)
    assert c_n.shape == (n_layers, B, hidden_size)

    print("KERNEL_OK")
</pallas_src>

<mosaic_0001>
module attributes {stable_mosaic.version = 11 : i64} {
  func.func @_lstm_decoder_kernel(%arg0: i32, %arg1: memref<8x16x128xbf16, #tpu.memory_space<vmem>>, %arg2: memref<2x128x512xbf16, #tpu.memory_space<any>>, %arg3: memref<2x128x512xbf16, #tpu.memory_space<any>>, %arg4: memref<2x1x512xf32, #tpu.memory_space<vmem>>, %arg5: memref<128x128xbf16, #tpu.memory_space<vmem>>, %arg6: memref<1x128xf32, #tpu.memory_space<vmem>>, %arg7: memref<2x16x128xf32, #tpu.memory_space<vmem>>, %arg8: memref<2x16x128xf32, #tpu.memory_space<vmem>>, %arg9: memref<8x16x128xf32, #tpu.memory_space<vmem>>, %arg10: memref<2x16x128xf32, #tpu.memory_space<vmem>>, %arg11: memref<2x16x128xf32, #tpu.memory_space<vmem>>, %arg12: memref<2x128x512xbf16, #tpu.memory_space<vmem>>, %arg13: memref<2x128x512xbf16, #tpu.memory_space<vmem>>, %arg14: memref<8x16x512xf32, #tpu.memory_space<vmem>>, %arg15: memref<8x16x128xbf16, #tpu.memory_space<vmem>>, %arg16: memref<2x2x!tpu.dma_semaphore, #tpu.memory_space<semaphore_mem>>) attributes {dimension_semantics = [#tpu.dimension_semantics<arbitrary>], iteration_bounds = array<i64: 1>, scalar_prefetch = 0 : i64, scratch_operands = 5 : i64, tpu.core_type = #tpu.core_type<tc>, window_params = [{transform_indices = @transform_0, window_bounds = array<i64: 8, 16, 128>}, {}, {}, {pipeline_mode = #tpu.pipeline_mode<synchronous>, transform_indices = @transform_3, window_bounds = array<i64: 2, 1, 512>}, {pipeline_mode = #tpu.pipeline_mode<synchronous>, transform_indices = @transform_4, window_bounds = array<i64: 128, 128>}, {pipeline_mode = #tpu.pipeline_mode<synchronous>, transform_indices = @transform_5, window_bounds = array<i64: 1, 128>}, {pipeline_mode = #tpu.pipeline_mode<synchronous>, transform_indices = @transform_6, window_bounds = array<i64: 2, 16, 128>}, {pipeline_mode = #tpu.pipeline_mode<synchronous>, transform_indices = @transform_7, window_bounds = array<i64: 2, 16, 128>}, {transform_indices = @transform_8, window_bounds = array<i64: 8, 16, 128>}, {pipeline_mode = #tpu.pipeline_mode<synchronous>, transform_indices = @transform_9, window_bounds = array<i64: 2, 16, 128>}, {pipeline_mode = #tpu.pipeline_mode<synchronous>, transform_indices = @transform_10, window_bounds = array<i64: 2, 16, 128>}]} {
    %c0_i32 = arith.constant 0 : i32
    %0 = arith.cmpi eq, %arg0, %c0_i32 : i32
    %1 = arith.extui %0 : i1 to i32
    %c0_i32_0 = arith.constant 0 : i32
    %2 = arith.cmpi ne, %1, %c0_i32_0 : i32
    scf.if %2 {
      %c0_i32_301 = arith.constant 0 : i32
      %c0_i32_302 = arith.constant 0 : i32
      %c0_i32_303 = arith.constant 0 : i32
      %c0_i32_304 = arith.constant 0 : i32
      %c0_i32_305 = arith.constant 0 : i32
      %c0_i32_306 = arith.constant 0 : i32
      %762 = tpu.memref_slice %arg2[%c0_i32_301, %c0_i32_305, %c0_i32_306] : memref<2x128x512xbf16, #tpu.memory_space<any>> -> memref<1x128x512xbf16, #tpu.memory_space<any>>
      %763 = tpu.memref_squeeze %762 : memref<1x128x512xbf16, #tpu.memory_space<any>> -> memref<128x512xbf16, #tpu.memory_space<any>>
      %c0_i32_307 = arith.constant 0 : i32
      %c0_i32_308 = arith.constant 0 : i32
      %764 = tpu.memref_slice %arg12[%c0_i32_302, %c0_i32_307, %c0_i32_308] : memref<2x128x512xbf16, #tpu.memory_space<vmem>> -> memref<1x128x512xbf16, #tpu.memory_space<vmem>>
      %765 = tpu.memref_squeeze %764 : memref<1x128x512xbf16, #tpu.memory_space<vmem>> -> memref<128x512xbf16, #tpu.memory_space<vmem>>
      %766 = tpu.memref_slice %arg16[%c0_i32_303, %c0_i32_304] : memref<2x2x!tpu.dma_semaphore, #tpu.memory_space<semaphore_mem>> -> memref<1x1x!tpu.dma_semaphore, #tpu.memory_space<semaphore_mem>>
      %767 = tpu.memref_squeeze %766 : memref<1x1x!tpu.dma_semaphore, #tpu.memory_space<semaphore_mem>> -> memref<!tpu.dma_semaphore, #tpu.memory_space<semaphore_mem>>
      tpu.enqueue_dma source(%763 : memref<128x512xbf16, #tpu.memory_space<any>>) target(%765 : memref<128x512xbf16, #tpu.memory_space<vmem>>) target_semaphore(%767 : memref<!tpu.dma_semaphore, #tpu.memory_space<semaphore_mem>>)
      %c0_i32_309 = arith.constant 0 : i32
      %c0_i32_310 = arith.constant 0 : i32
      %c1_i32_311 = arith.constant 1 : i32
      %c0_i32_312 = arith.constant 0 : i32
      %c0_i32_313 = arith.constant 0 : i32
      %c0_i32_314 = arith.constant 0 : i32
      %768 = tpu.memref_slice %arg3[%c0_i32_309, %c0_i32_313, %c0_i32_314] : memref<2x128x512xbf16, #tpu.memory_space<any>> -> memref<1x128x512xbf16, #tpu.memory_space<any>>
      %769 = tpu.memref_squeeze %768 : memref<1x128x512xbf16, #tpu.memory_space<any>> -> memref<128x512xbf16, #tpu.memory_space<any>>
      %c0_i32_315 = arith.constant 0 : i32
      %c0_i32_316 = arith.constant 0 : i32
      %770 = tpu.memref_slice %arg13[%c0_i32_310, %c0_i32_315, %c0_i32_316] : memref<2x128x512xbf16, #tpu.memory_space<vmem>> -> memref<1x128x512xbf16, #tpu.memory_space<vmem>>
      %771 = tpu.memref_squeeze %770 : memref<1x128x512xbf16, #tpu.memory_space<vmem>> -> memref<128x512xbf16, #tpu.memory_space<vmem>>
      %772 = tpu.memref_slice %arg16[%c1_i32_311, %c0_i32_312] : memref<2x2x!tpu.dma_semaphore, #tpu.memory_space<semaphore_mem>> -> memref<1x1x!tpu.dma_semaphore, #tpu.memory_space<semaphore_mem>>
      %773 = tpu.memref_squeeze %772 : memref<1x1x!tpu.dma_semaphore, #tpu.memory_space<semaphore_mem>> -> memref<!tpu.dma_semaphore, #tpu.memory_space<semaphore_mem>>
      tpu.enqueue_dma source(%769 : memref<128x512xbf16, #tpu.memory_space<any>>) target(%771 : memref<128x512xbf16, #tpu.memory_space<vmem>>) target_semaphore(%773 : memref<!tpu.dma_semaphore, #tpu.memory_space<semaphore_mem>>)
      %c1_i32_317 = arith.constant 1 : i32
      %c1_i32_318 = arith.constant 1 : i32
      %c0_i32_319 = arith.constant 0 : i32
      %c1_i32_320 = arith.constant 1 : i32
      %c0_i32_321 = arith.constant 0 : i32
      %c0_i32_322 = arith.constant 0 : i32
      %774 = tpu.memref_slice %arg2[%c1_i32_317, %c0_i32_321, %c0_i32_322] : memref<2x128x512xbf16, #tpu.memory_space<any>> -> memref<1x128x512xbf16, #tpu.memory_space<any>>
      %775 = tpu.memref_squeeze %774 : memref<1x128x512xbf16, #tpu.memory_space<any>> -> memref<128x512xbf16, #tpu.memory_space<any>>
      %c0_i32_323 = arith.constant 0 : i32
      %c0_i32_324 = arith.constant 0 : i32
      %776 = tpu.memref_slice %arg12[%c1_i32_318, %c0_i32_323, %c0_i32_324] : memref<2x128x512xbf16, #tpu.memory_space<vmem>> -> memref<1x128x512xbf16, #tpu.memory_space<vmem>>
      %777 = tpu.memref_squeeze %776 : memref<1x128x512xbf16, #tpu.memory_space<vmem>> -> memref<128x512xbf16, #tpu.memory_space<vmem>>
      %778 = tpu.memref_slice %arg16[%c0_i32_319, %c1_i32_320] : memref<2x2x!tpu.dma_semaphore, #tpu.memory_space<semaphore_mem>> -> memref<1x1x!tpu.dma_semaphore, #tpu.memory_space<semaphore_mem>>
      %779 = tpu.memref_squeeze %778 : memref<1x1x!tpu.dma_semaphore, #tpu.memory_space<semaphore_mem>> -> memref<!tpu.dma_semaphore, #tpu.memory_space<semaphore_mem>>
      tpu.enqueue_dma source(%775 : memref<128x512xbf16, #tpu.memory_space<any>>) target(%777 : memref<128x512xbf16, #tpu.memory_space<vmem>>) target_semaphore(%779 : memref<!tpu.dma_semaphore, #tpu.memory_space<semaphore_mem>>)
      %c1_i32_325 = arith.constant 1 : i32
      %c1_i32_326 = arith.constant 1 : i32
      %c1_i32_327 = arith.constant 1 : i32
      %c1_i32_328 = arith.constant 1 : i32
      %c0_i32_329 = arith.constant 0 : i32
      %c0_i32_330 = arith.constant 0 : i32
      %780 = tpu.memref_slice %arg3[%c1_i32_325, %c0_i32_329, %c0_i32_330] : memref<2x128x512xbf16, #tpu.memory_space<any>> -> memref<1x128x512xbf16, #tpu.memory_space<any>>
      %781 = tpu.memref_squeeze %780 : memref<1x128x512xbf16, #tpu.memory_space<any>> -> memref<128x512xbf16, #tpu.memory_space<any>>
      %c0_i32_331 = arith.constant 0 : i32
      %c0_i32_332 = arith.constant 0 : i32
      %782 = tpu.memref_slice %arg13[%c1_i32_326, %c0_i32_331, %c0_i32_332] : memref<2x128x512xbf16, #tpu.memory_space<vmem>> -> memref<1x128x512xbf16, #tpu.memory_space<vmem>>
      %783 = tpu.memref_squeeze %782 : memref<1x128x512xbf16, #tpu.memory_space<vmem>> -> memref<128x512xbf16, #tpu.memory_space<vmem>>
      %784 = tpu.memref_slice %arg16[%c1_i32_327, %c1_i32_328] : memref<2x2x!tpu.dma_semaphore, #tpu.memory_space<semaphore_mem>> -> memref<1x1x!tpu.dma_semaphore, #tpu.memory_space<semaphore_mem>>
      %785 = tpu.memref_squeeze %784 : memref<1x1x!tpu.dma_semaphore, #tpu.memory_space<semaphore_mem>> -> memref<!tpu.dma_semaphore, #tpu.memory_space<semaphore_mem>>
      tpu.enqueue_dma source(%781 : memref<128x512xbf16, #tpu.memory_space<any>>) target(%783 : memref<128x512xbf16, #tpu.memory_space<vmem>>) target_semaphore(%785 : memref<!tpu.dma_semaphore, #tpu.memory_space<semaphore_mem>>)
      %c0_333 = arith.constant 0 : index
      %c0_334 = arith.constant 0 : index
      %c0_335 = arith.constant 0 : index
      %786 = vector.load %arg7[%c0_333, %c0_334, %c0_335] : memref<2x16x128xf32, #tpu.memory_space<vmem>>, vector<2x16x128xf32>
      %c0_336 = arith.constant 0 : index
      %c0_337 = arith.constant 0 : index
      %c0_338 = arith.constant 0 : index
      %787 = vector.load %arg10[%c0_336, %c0_337, %c0_338] : memref<2x16x128xf32, #tpu.memory_space<vmem>>, vector<2x16x128xf32>
      tpu.vector_store %arg10[%c0_336, %c0_337, %c0_338], %786 {strides = array<i32>} : memref<2x16x128xf32, #tpu.memory_space<vmem>>, vector<2x16x128xf32>,
      %c0_339 = arith.constant 0 : index
      %c0_340 = arith.constant 0 : index
      %c0_341 = arith.constant 0 : index
      %788 = vector.load %arg8[%c0_339, %c0_340, %c0_341] : memref<2x16x128xf32, #tpu.memory_space<vmem>>, vector<2x16x128xf32>
      %c0_342 = arith.constant 0 : index
      %c0_343 = arith.constant 0 : index
      %c0_344 = arith.constant 0 : index
      %789 = vector.load %arg11[%c0_342, %c0_343, %c0_344] : memref<2x16x128xf32, #tpu.memory_space<vmem>>, vector<2x16x128xf32>
      tpu.vector_store %arg11[%c0_342, %c0_343, %c0_344], %788 {strides = array<i32>} : memref<2x16x128xf32, #tpu.memory_space<vmem>>, vector<2x16x128xf32>,
    } else {
    }
    %c0 = arith.constant 0 : index
    %c0_1 = arith.constant 0 : index
    %3 = vector.load %arg5[%c0, %c0_1] : memref<128x128xbf16, #tpu.memory_space<vmem>>, vector<128x128xbf16>
    %c0_2 = arith.constant 0 : index
    %c0_3 = arith.constant 0 : index
    %4 = vector.load %arg6[%c0_2, %c0_3] : memref<1x128xf32, #tpu.memory_space<vmem>>, vector<1x128xf32>
    %5 = arith.extui %0 : i1 to i32
    %c0_i32_4 = arith.constant 0 : i32
    %6 = arith.cmpi ne, %5, %c0_i32_4 : i32
    scf.if %6 {
      %c0_i32_301 = arith.constant 0 : i32
      %c0_i32_302 = arith.constant 0 : i32
      %c0_i32_303 = arith.constant 0 : i32
      %c0_i32_304 = arith.constant 0 : i32
      %c0_i32_305 = arith.constant 0 : i32
      %c0_i32_306 = arith.constant 0 : i32
      %762 = tpu.memref_slice %arg2[%c0_i32_301, %c0_i32_305, %c0_i32_306] : memref<2x128x512xbf16, #tpu.memory_space<any>> -> memref<1x128x512xbf16, #tpu.memory_space<any>>
      %763 = tpu.memref_squeeze %762 : memref<1x128x512xbf16, #tpu.memory_space<any>> -> memref<128x512xbf16, #tpu.memory_space<any>>
      %c0_i32_307 = arith.constant 0 : i32
      %c0_i32_308 = arith.constant 0 : i32
      %764 = tpu.memref_slice %arg12[%c0_i32_302, %c0_i32_307, %c0_i32_308] : memref<2x128x512xbf16, #tpu.memory_space<vmem>> -> memref<1x128x512xbf16, #tpu.memory_space<vmem>>
      %765 = tpu.memref_squeeze %764 : memref<1x128x512xbf16, #tpu.memory_space<vmem>> -> memref<128x512xbf16, #tpu.memory_space<vmem>>
      %766 = tpu.memref_slice %arg16[%c0_i32_303, %c0_i32_304] : memref<2x2x!tpu.dma_semaphore, #tpu.memory_space<semaphore_mem>> -> memref<1x1x!tpu.dma_semaphore, #tpu.memory_space<semaphore_mem>>
      %767 = tpu.memref_squeeze %766 : memref<1x1x!tpu.dma_semaphore, #tpu.memory_space<semaphore_mem>> -> memref<!tpu.dma_semaphore, #tpu.memory_space<semaphore_mem>>
      tpu.wait_dma2 semaphore(%767 : memref<!tpu.dma_semaphore, #tpu.memory_space<semaphore_mem>>) src(%763 : memref<128x512xbf16, #tpu.memory_space<any>>) dst(%765 : memref<128x512xbf16, #tpu.memory_space<vmem>>)
      %c0_i32_309 = arith.constant 0 : i32
      %c0_i32_310 = arith.constant 0 : i32
      %c1_i32_311 = arith.constant 1 : i32
      %c0_i32_312 = arith.constant 0 : i32
      %c0_i32_313 = arith.constant 0 : i32
      %c0_i32_314 = arith.constant 0 : i32
      %768 = tpu.memref_slice %arg3[%c0_i32_309, %c0_i32_313, %c0_i32_314] : memref<2x128x512xbf16, #tpu.memory_space<any>> -> memref<1x128x512xbf16, #tpu.memory_space<any>>
      %769 = tpu.memref_squeeze %768 : memref<1x128x512xbf16, #tpu.memory_space<any>> -> memref<128x512xbf16, #tpu.memory_space<any>>
      %c0_i32_315 = arith.constant 0 : i32
      %c0_i32_316 = arith.constant 0 : i32
      %770 = tpu.memref_slice %arg13[%c0_i32_310, %c0_i32_315, %c0_i32_316] : memref<2x128x512xbf16, #tpu.memory_space<vmem>> -> memref<1x128x512xbf16, #tpu.memory_space<vmem>>
      %771 = tpu.memref_squeeze %770 : memref<1x128x512xbf16, #tpu.memory_space<vmem>> -> memref<128x512xbf16, #tpu.memory_space<vmem>>
      %772 = tpu.memref_slice %arg16[%c1_i32_311, %c0_i32_312] : memref<2x2x!tpu.dma_semaphore, #tpu.memory_space<semaphore_mem>> -> memref<1x1x!tpu.dma_semaphore, #tpu.memory_space<semaphore_mem>>
      %773 = tpu.memref_squeeze %772 : memref<1x1x!tpu.dma_semaphore, #tpu.memory_space<semaphore_mem>> -> memref<!tpu.dma_semaphore, #tpu.memory_space<semaphore_mem>>
      tpu.wait_dma2 semaphore(%773 : memref<!tpu.dma_semaphore, #tpu.memory_space<semaphore_mem>>) src(%769 : memref<128x512xbf16, #tpu.memory_space<any>>) dst(%771 : memref<128x512xbf16, #tpu.memory_space<vmem>>)
    } else {
    }
    %c0_5 = arith.constant 0 : index
    %c0_6 = arith.constant 0 : index
    %c0_7 = arith.constant 0 : index
    %7 = vector.load %arg12[%c0_5, %c0_6, %c0_7] : memref<2x128x512xbf16, #tpu.memory_space<vmem>>, vector<1x128x512xbf16>
    %8 = vector.shape_cast %7 : vector<1x128x512xbf16> to vector<128x512xbf16>
    %c0_8 = arith.constant 0 : index
    %c0_9 = arith.constant 0 : index
    %c0_10 = arith.constant 0 : index
    %9 = vector.load %arg13[%c0_8, %c0_9, %c0_10] : memref<2x128x512xbf16, #tpu.memory_space<vmem>>, vector<1x128x512xbf16>
    %10 = vector.shape_cast %9 : vector<1x128x512xbf16> to vector<128x512xbf16>
    %c0_11 = arith.constant 0 : index
    %c0_12 = arith.constant 0 : index
    %c0_13 = arith.constant 0 : index
    %11 = vector.load %arg4[%c0_11, %c0_12, %c0_13] : memref<2x1x512xf32, #tpu.memory_space<vmem>>, vector<1x1x512xf32>
    %12 = vector.shape_cast %11 : vector<1x1x512xf32> to vector<1x512xf32>
    %c0_14 = arith.constant 0 : index
    %c0_15 = arith.constant 0 : index
    %c0_16 = arith.constant 0 : index
    %13 = vector.load %arg1[%c0_14, %c0_15, %c0_16] : memref<8x16x128xbf16, #tpu.memory_space<vmem>>, vector<8x16x128xbf16>
    %14 = vector.shape_cast %13 : vector<8x16x128xbf16> to vector<128x128xbf16>
    %cst = arith.constant dense<0.000000e+00> : vector<128x512xf32>
    %15 = tpu.matmul %14, %8, %cst {dimension_numbers = #tpu.dot_dimension_numbers<[1], [0], [0], [1], [0, 0, 1, 1], [], []>} : vector<128x128xbf16>, vector<128x512xbf16>, vector<128x512xf32> -> vector<128x512xf32>
    %16 = vector.shape_cast %15 : vector<128x512xf32> to vector<8x16x512xf32>
    %c0_17 = arith.constant 0 : index
    %c0_18 = arith.constant 0 : index
    %c0_19 = arith.constant 0 : index
    %17 = vector.load %arg14[%c0_17, %c0_18, %c0_19] : memref<8x16x512xf32, #tpu.memory_space<vmem>>, vector<8x16x512xf32>
    tpu.vector_store %arg14[%c0_17, %c0_18, %c0_19], %16 {strides = array<i32>} : memref<8x16x512xf32, #tpu.memory_space<vmem>>, vector<8x16x512xf32>,
    %c0_20 = arith.constant 0 : index
    %c0_21 = arith.constant 0 : index
    %c0_22 = arith.constant 0 : index
    %18 = vector.load %arg10[%c0_20, %c0_21, %c0_22] : memref<2x16x128xf32, #tpu.memory_space<vmem>>, vector<1x16x128xf32>
    %19 = vector.shape_cast %18 : vector<1x16x128xf32> to vector<16x128xf32>
    %c0_23 = arith.constant 0 : index
    %c0_24 = arith.constant 0 : index
    %c0_25 = arith.constant 0 : index
    %20 = vector.load %arg11[%c0_23, %c0_24, %c0_25] : memref<2x16x128xf32, #tpu.memory_space<vmem>>, vector<1x16x128xf32>
    %21 = vector.shape_cast %20 : vector<1x16x128xf32> to vector<16x128xf32>
    %c0_i32_26 = arith.constant 0 : i32
    %22 = arith.index_cast %c0_i32_26 : i32 to index
    %c0_27 = arith.constant 0 : index
    %c0_28 = arith.constant 0 : index
    %23 = vector.load %arg14[%22, %c0_27, %c0_28] : memref<8x16x512xf32, #tpu.memory_space<vmem>>, vector<1x16x512xf32>
    %24 = vector.shape_cast %23 : vector<1x16x512xf32> to vector<16x512xf32>
    %25 = arith.truncf %19 : vector<16x128xf32> to vector<16x128xbf16>
    %cst_29 = arith.constant dense<0.000000e+00> : vector<16x512xf32>
    %26 = tpu.matmul %25, %10, %cst_29 {dimension_numbers = #tpu.dot_dimension_numbers<[1], [0], [0], [1], [0, 0, 1, 1], [], []>} : vector<16x128xbf16>, vector<128x512xbf16>, vector<16x512xf32> -> vector<16x512xf32>
    %27 = arith.addf %24, %26 : vector<16x512xf32>
    %28 = vector.broadcast %12 : vector<1x512xf32> to vector<16x512xf32>
    %29 = arith.addf %27, %28 : vector<16x512xf32>
    %30 = vector.extract_strided_slice %29 {offsets = [0, 0], sizes = [16, 128], strides = [1, 1]} : vector<16x512xf32> to vector<16x128xf32>
    %cst_30 = arith.constant 5.000000e-01 : f32
    %31 = vector.broadcast %cst_30 : f32 to vector<16x128xf32>
    %32 = arith.mulf %31, %30 : vector<16x128xf32>
    %33 = math.tanh %32 : vector<16x128xf32>
    %cst_31 = arith.constant 5.000000e-01 : f32
    %34 = vector.broadcast %cst_31 : f32 to vector<16x128xf32>
    %35 = arith.mulf %34, %33 : vector<16x128xf32>
    %cst_32 = arith.constant 5.000000e-01 : f32
    %36 = vector.broadcast %cst_32 : f32 to vector<16x128xf32>
    %37 = arith.addf %35, %36 : vector<16x128xf32>
    %38 = vector.extract_strided_slice %29 {offsets = [0, 128], sizes = [16, 128], strides = [1, 1]} : vector<16x512xf32> to vector<16x128xf32>
    %cst_33 = arith.constant 5.000000e-01 : f32
    %39 = vector.broadcast %cst_33 : f32 to vector<16x128xf32>
    %40 = arith.mulf %39, %38 : vector<16x128xf32>
    %41 = math.tanh %40 : vector<16x128xf32>
    %cst_34 = arith.constant 5.000000e-01 : f32
    %42 = vector.broadcast %cst_34 : f32 to vector<16x128xf32>
    %43 = arith.mulf %42, %41 : vector<16x128xf32>
    %cst_35 = arith.constant 5.000000e-01 : f32
    %44 = vector.broadcast %cst_35 : f32 to vector<16x128xf32>
    %45 = arith.addf %43, %44 : vector<16x128xf32>
    %46 = vector.extract_strided_slice %29 {offsets = [0, 256], sizes = [16, 128], strides = [1, 1]} : vector<16x512xf32> to vector<16x128xf32>
    %47 = math.tanh %46 : vector<16x128xf32>
    %48 = vector.extract_strided_slice %29 {offsets = [0, 384], sizes = [16, 128], strides = [1, 1]} : vector<16x512xf32> to vector<16x128xf32>
    %cst_36 = arith.constant 5.000000e-01 : f32
    %49 = vector.broadcast %cst_36 : f32 to vector<16x128xf32>
    %50 = arith.mulf %49, %48 : vector<16x128xf32>
    %51 = math.tanh %50 : vector<16x128xf32>
    %cst_37 = arith.constant 5.000000e-01 : f32
    %52 = vector.broadcast %cst_37 : f32 to vector<16x128xf32>
    %53 = arith.mulf %52, %51 : vector<16x128xf32>
    %cst_38 = arith.constant 5.000000e-01 : f32
    %54 = vector.broadcast %cst_38 : f32 to vector<16x128xf32>
    %55 = arith.addf %53, %54 : vector<16x128xf32>
    %56 = arith.mulf %45, %21 : vector<16x128xf32>
    %57 = arith.mulf %37, %47 : vector<16x128xf32>
    %58 = arith.addf %56, %57 : vector<16x128xf32>
    %59 = math.tanh %58 : vector<16x128xf32>
    %60 = arith.mulf %55, %59 : vector<16x128xf32>
    %61 = arith.truncf %60 : vector<16x128xf32> to vector<16x128xbf16>
    %62 = arith.index_cast %c0_i32_26 : i32 to index
    %c0_39 = arith.constant 0 : index
    %c0_40 = arith.constant 0 : index
    %63 = vector.load %arg15[%62, %c0_39, %c0_40] : memref<8x16x128xbf16, #tpu.memory_space<vmem>>, vector<1x16x128xbf16>
    %64 = vector.shape_cast %63 : vector<1x16x128xbf16> to vector<16x128xbf16>
    %65 = vector.shape_cast %61 : vector<16x128xbf16> to vector<1x16x128xbf16>
    tpu.vector_store %arg15[%62, %c0_39, %c0_40], %65 {strides = array<i32>} : memref<8x16x128xbf16, #tpu.memory_space<vmem>>, vector<1x16x128xbf16>,
    %c1_i32 = arith.constant 1 : i32
    %66 = arith.index_cast %c1_i32 : i32 to index
    %c0_41 = arith.constant 0 : index
    %c0_42 = arith.constant 0 : index
    %67 = vector.load %arg14[%66, %c0_41, %c0_42] : memref<8x16x512xf32, #tpu.memory_space<vmem>>, vector<1x16x512xf32>
    %68 = vector.shape_cast %67 : vector<1x16x512xf32> to vector<16x512xf32>
    %69 = arith.truncf %60 : vector<16x128xf32> to vector<16x128xbf16>
    %cst_43 = arith.constant dense<0.000000e+00> : vector<16x512xf32>
    %70 = tpu.matmul %69, %10, %cst_43 {dimension_numbers = #tpu.dot_dimension_numbers<[1], [0], [0], [1], [0, 0, 1, 1], [], []>} : vector<16x128xbf16>, vector<128x512xbf16>, vector<16x512xf32> -> vector<16x512xf32>
    %71 = arith.addf %68, %70 : vector<16x512xf32>
    %72 = vector.broadcast %12 : vector<1x512xf32> to vector<16x512xf32>
    %73 = arith.addf %71, %72 : vector<16x512xf32>
    %74 = vector.extract_strided_slice %73 {offsets = [0, 0], sizes = [16, 128], strides = [1, 1]} : vector<16x512xf32> to vector<16x128xf32>
    %cst_44 = arith.constant 5.000000e-01 : f32
    %75 = vector.broadcast %cst_44 : f32 to vector<16x128xf32>
    %76 = arith.mulf %75, %74 : vector<16x128xf32>
    %77 = math.tanh %76 : vector<16x128xf32>
    %cst_45 = arith.constant 5.000000e-01 : f32
    %78 = vector.broadcast %cst_45 : f32 to vector<16x128xf32>
    %79 = arith.mulf %78, %77 : vector<16x128xf32>
    %cst_46 = arith.constant 5.000000e-01 : f32
    %80 = vector.broadcast %cst_46 : f32 to vector<16x128xf32>
    %81 = arith.addf %79, %80 : vector<16x128xf32>
    %82 = vector.extract_strided_slice %73 {offsets = [0, 128], sizes = [16, 128], strides = [1, 1]} : vector<16x512xf32> to vector<16x128xf32>
    %cst_47 = arith.constant 5.000000e-01 : f32
    %83 = vector.broadcast %cst_47 : f32 to vector<16x128xf32>
    %84 = arith.mulf %83, %82 : vector<16x128xf32>
    %85 = math.tanh %84 : vector<16x128xf32>
    %cst_48 = arith.constant 5.000000e-01 : f32
    %86 = vector.broadcast %cst_48 : f32 to vector<16x128xf32>
    %87 = arith.mulf %86, %85 : vector<16x128xf32>
    %cst_49 = arith.constant 5.000000e-01 : f32
    %88 = vector.broadcast %cst_49 : f32 to vector<16x128xf32>
    %89 = arith.addf %87, %88 : vector<16x128xf32>
    %90 = vector.extract_strided_slice %73 {offsets = [0, 256], sizes = [16, 128], strides = [1, 1]} : vector<16x512xf32> to vector<16x128xf32>
    %91 = math.tanh %90 : vector<16x128xf32>
    %92 = vector.extract_strided_slice %73 {offsets = [0, 384], sizes = [16, 128], strides = [1, 1]} : vector<16x512xf32> to vector<16x128xf32>
    %cst_50 = arith.constant 5.000000e-01 : f32
    %93 = vector.broadcast %cst_50 : f32 to vector<16x128xf32>
    %94 = arith.mulf %93, %92 : vector<16x128xf32>
    %95 = math.tanh %94 : vector<16x128xf32>
    %cst_51 = arith.constant 5.000000e-01 : f32
    %96 = vector.broadcast %cst_51 : f32 to vector<16x128xf32>
    %97 = arith.mulf %96, %95 : vector<16x128xf32>
    %cst_52 = arith.constant 5.000000e-01 : f32
    %98 = vector.broadcast %cst_52 : f32 to vector<16x128xf32>
    %99 = arith.addf %97, %98 : vector<16x128xf32>
    %100 = arith.mulf %89, %58 : vector<16x128xf32>
    %101 = arith.mulf %81, %91 : vector<16x128xf32>
    %102 = arith.addf %100, %101 : vector<16x128xf32>
    %103 = math.tanh %102 : vector<16x128xf32>
    %104 = arith.mulf %99, %103 : vector<16x128xf32>
    %105 = arith.truncf %104 : vector<16x128xf32> to vector<16x128xbf16>
    %106 = arith.index_cast %c1_i32 : i32 to index
    %c0_53 = arith.constant 0 : index
    %c0_54 = arith.constant 0 : index
    %107 = vector.load %arg15[%106, %c0_53, %c0_54] : memref<8x16x128xbf16, #tpu.memory_space<vmem>>, vector<1x16x128xbf16>
    %108 = vector.shape_cast %107 : vector<1x16x128xbf16> to vector<16x128xbf16>
    %109 = vector.shape_cast %105 : vector<16x128xbf16> to vector<1x16x128xbf16>
    tpu.vector_store %arg15[%106, %c0_53, %c0_54], %109 {strides = array<i32>} : memref<8x16x128xbf16, #tpu.memory_space<vmem>>, vector<1x16x128xbf16>,
    %c2_i32 = arith.constant 2 : i32
    %110 = arith.index_cast %c2_i32 : i32 to index
    %c0_55 = arith.constant 0 : index
    %c0_56 = arith.constant 0 : index
    %111 = vector.load %arg14[%110, %c0_55, %c0_56] : memref<8x16x512xf32, #tpu.memory_space<vmem>>, vector<1x16x512xf32>
    %112 = vector.shape_cast %111 : vector<1x16x512xf32> to vector<16x512xf32>
    %113 = arith.truncf %104 : vector<16x128xf32> to vector<16x128xbf16>
    %cst_57 = arith.constant dense<0.000000e+00> : vector<16x512xf32>
    %114 = tpu.matmul %113, %10, %cst_57 {dimension_numbers = #tpu.dot_dimension_numbers<[1], [0], [0], [1], [0, 0, 1, 1], [], []>} : vector<16x128xbf16>, vector<128x512xbf16>, vector<16x512xf32> -> vector<16x512xf32>
    %115 = arith.addf %112, %114 : vector<16x512xf32>
    %116 = vector.broadcast %12 : vector<1x512xf32> to vector<16x512xf32>
    %117 = arith.addf %115, %116 : vector<16x512xf32>
    %118 = vector.extract_strided_slice %117 {offsets = [0, 0], sizes = [16, 128], strides = [1, 1]} : vector<16x512xf32> to vector<16x128xf32>
    %cst_58 = arith.constant 5.000000e-01 : f32
    %119 = vector.broadcast %cst_58 : f32 to vector<16x128xf32>
    %120 = arith.mulf %119, %118 : vector<16x128xf32>
    %121 = math.tanh %120 : vector<16x128xf32>
    %cst_59 = arith.constant 5.000000e-01 : f32
    %122 = vector.broadcast %cst_59 : f32 to vector<16x128xf32>
    %123 = arith.mulf %122, %121 : vector<16x128xf32>
    %cst_60 = arith.constant 5.000000e-01 : f32
    %124 = vector.broadcast %cst_60 : f32 to vector<16x128xf32>
    %125 = arith.addf %123, %124 : vector<16x128xf32>
    %126 = vector.extract_strided_slice %117 {offsets = [0, 128], sizes = [16, 128], strides = [1, 1]} : vector<16x512xf32> to vector<16x128xf32>
    %cst_61 = arith.constant 5.000000e-01 : f32
    %127 = vector.broadcast %cst_61 : f32 to vector<16x128xf32>
    %128 = arith.mulf %127, %126 : vector<16x128xf32>
    %129 = math.tanh %128 : vector<16x128xf32>
    %cst_62 = arith.constant 5.000000e-01 : f32
    %130 = vector.broadcast %cst_62 : f32 to vector<16x128xf32>
    %131 = arith.mulf %130, %129 : vector<16x128xf32>
    %cst_63 = arith.constant 5.000000e-01 : f32
    %132 = vector.broadcast %cst_63 : f32 to vector<16x128xf32>
    %133 = arith.addf %131, %132 : vector<16x128xf32>
    %134 = vector.extract_strided_slice %117 {offsets = [0, 256], sizes = [16, 128], strides = [1, 1]} : vector<16x512xf32> to vector<16x128xf32>
    %135 = math.tanh %134 : vector<16x128xf32>
    %136 = vector.extract_strided_slice %117 {offsets = [0, 384], sizes = [16, 128], strides = [1, 1]} : vector<16x512xf32> to vector<16x128xf32>
    %cst_64 = arith.constant 5.000000e-01 : f32
    %137 = vector.broadcast %cst_64 : f32 to vector<16x128xf32>
    %138 = arith.mulf %137, %136 : vector<16x128xf32>
    %139 = math.tanh %138 : vector<16x128xf32>
    %cst_65 = arith.constant 5.000000e-01 : f32
    %140 = vector.broadcast %cst_65 : f32 to vector<16x128xf32>
    %141 = arith.mulf %140, %139 : vector<16x128xf32>
    %cst_66 = arith.constant 5.000000e-01 : f32
    %142 = vector.broadcast %cst_66 : f32 to vector<16x128xf32>
    %143 = arith.addf %141, %142 : vector<16x128xf32>
    %144 = arith.mulf %133, %102 : vector<16x128xf32>
    %145 = arith.mulf %125, %135 : vector<16x128xf32>
    %146 = arith.addf %144, %145 : vector<16x128xf32>
    %147 = math.tanh %146 : vector<16x128xf32>
    %148 = arith.mulf %143, %147 : vector<16x128xf32>
    %149 = arith.truncf %148 : vector<16x128xf32> to vector<16x128xbf16>
    %150 = arith.index_cast %c2_i32 : i32 to index
    %c0_67 = arith.constant 0 : index
    %c0_68 = arith.constant 0 : index
    %151 = vector.load %arg15[%150, %c0_67, %c0_68] : memref<8x16x128xbf16, #tpu.memory_space<vmem>>, vector<1x16x128xbf16>
    %152 = vector.shape_cast %151 : vector<1x16x128xbf16> to vector<16x128xbf16>
    %153 = vector.shape_cast %149 : vector<16x128xbf16> to vector<1x16x128xbf16>
    tpu.vector_store %arg15[%150, %c0_67, %c0_68], %153 {strides = array<i32>} : memref<8x16x128xbf16, #tpu.memory_space<vmem>>, vector<1x16x128xbf16>,
    %c3_i32 = arith.constant 3 : i32
    %154 = arith.index_cast %c3_i32 : i32 to index
    %c0_69 = arith.constant 0 : index
    %c0_70 = arith.constant 0 : index
    %155 = vector.load %arg14[%154, %c0_69, %c0_70] : memref<8x16x512xf32, #tpu.memory_space<vmem>>, vector<1x16x512xf32>
    %156 = vector.shape_cast %155 : vector<1x16x512xf32> to vector<16x512xf32>
    %157 = arith.truncf %148 : vector<16x128xf32> to vector<16x128xbf16>
    %cst_71 = arith.constant dense<0.000000e+00> : vector<16x512xf32>
    %158 = tpu.matmul %157, %10, %cst_71 {dimension_numbers = #tpu.dot_dimension_numbers<[1], [0], [0], [1], [0, 0, 1, 1], [], []>} : vector<16x128xbf16>, vector<128x512xbf16>, vector<16x512xf32> -> vector<16x512xf32>
    %159 = arith.addf %156, %158 : vector<16x512xf32>
    %160 = vector.broadcast %12 : vector<1x512xf32> to vector<16x512xf32>
    %161 = arith.addf %159, %160 : vector<16x512xf32>
    %162 = vector.extract_strided_slice %161 {offsets = [0, 0], sizes = [16, 128], strides = [1, 1]} : vector<16x512xf32> to vector<16x128xf32>
    %cst_72 = arith.constant 5.000000e-01 : f32
    %163 = vector.broadcast %cst_72 : f32 to vector<16x128xf32>
    %164 = arith.mulf %163, %162 : vector<16x128xf32>
    %165 = math.tanh %164 : vector<16x128xf32>
    %cst_73 = arith.constant 5.000000e-01 : f32
    %166 = vector.broadcast %cst_73 : f32 to vector<16x128xf32>
    %167 = arith.mulf %166, %165 : vector<16x128xf32>
    %cst_74 = arith.constant 5.000000e-01 : f32
    %168 = vector.broadcast %cst_74 : f32 to vector<16x128xf32>
    %169 = arith.addf %167, %168 : vector<16x128xf32>
    %170 = vector.extract_strided_slice %161 {offsets = [0, 128], sizes = [16, 128], strides = [1, 1]} : vector<16x512xf32> to vector<16x128xf32>
    %cst_75 = arith.constant 5.000000e-01 : f32
    %171 = vector.broadcast %cst_75 : f32 to vector<16x128xf32>
    %172 = arith.mulf %171, %170 : vector<16x128xf32>
    %173 = math.tanh %172 : vector<16x128xf32>
    %cst_76 = arith.constant 5.000000e-01 : f32
    %174 = vector.broadcast %cst_76 : f32 to vector<16x128xf32>
    %175 = arith.mulf %174, %173 : vector<16x128xf32>
    %cst_77 = arith.constant 5.000000e-01 : f32
    %176 = vector.broadcast %cst_77 : f32 to vector<16x128xf32>
    %177 = arith.addf %175, %176 : vector<16x128xf32>
    %178 = vector.extract_strided_slice %161 {offsets = [0, 256], sizes = [16, 128], strides = [1, 1]} : vector<16x512xf32> to vector<16x128xf32>
    %179 = math.tanh %178 : vector<16x128xf32>
    %180 = vector.extract_strided_slice %161 {offsets = [0, 384], sizes = [16, 128], strides = [1, 1]} : vector<16x512xf32> to vector<16x128xf32>
    %cst_78 = arith.constant 5.000000e-01 : f32
    %181 = vector.broadcast %cst_78 : f32 to vector<16x128xf32>
    %182 = arith.mulf %181, %180 : vector<16x128xf32>
    %183 = math.tanh %182 : vector<16x128xf32>
    %cst_79 = arith.constant 5.000000e-01 : f32
    %184 = vector.broadcast %cst_79 : f32 to vector<16x128xf32>
    %185 = arith.mulf %184, %183 : vector<16x128xf32>
    %cst_80 = arith.constant 5.000000e-01 : f32
    %186 = vector.broadcast %cst_80 : f32 to vector<16x128xf32>
    %187 = arith.addf %185, %186 : vector<16x128xf32>
    %188 = arith.mulf %177, %146 : vector<16x128xf32>
    %189 = arith.mulf %169, %179 : vector<16x128xf32>
    %190 = arith.addf %188, %189 : vector<16x128xf32>
    %191 = math.tanh %190 : vector<16x128xf32>
    %192 = arith.mulf %187, %191 : vector<16x128xf32>
    %193 = arith.truncf %192 : vector<16x128xf32> to vector<16x128xbf16>
    %194 = arith.index_cast %c3_i32 : i32 to index
    %c0_81 = arith.constant 0 : index
    %c0_82 = arith.constant 0 : index
    %195 = vector.load %arg15[%194, %c0_81, %c0_82] : memref<8x16x128xbf16, #tpu.memory_space<vmem>>, vector<1x16x128xbf16>
    %196 = vector.shape_cast %195 : vector<1x16x128xbf16> to vector<16x128xbf16>
    %197 = vector.shape_cast %193 : vector<16x128xbf16> to vector<1x16x128xbf16>
    tpu.vector_store %arg15[%194, %c0_81, %c0_82], %197 {strides = array<i32>} : memref<8x16x128xbf16, #tpu.memory_space<vmem>>, vector<1x16x128xbf16>,
    %c4_i32 = arith.constant 4 : i32
    %198 = arith.index_cast %c4_i32 : i32 to index
    %c0_83 = arith.constant 0 : index
    %c0_84 = arith.constant 0 : index
    %199 = vector.load %arg14[%198, %c0_83, %c0_84] : memref<8x16x512xf32, #tpu.memory_space<vmem>>, vector<1x16x512xf32>
    %200 = vector.shape_cast %199 : vector<1x16x512xf32> to vector<16x512xf32>
    %201 = arith.truncf %192 : vector<16x128xf32> to vector<16x128xbf16>
    %cst_85 = arith.constant dense<0.000000e+00> : vector<16x512xf32>
    %202 = tpu.matmul %201, %10, %cst_85 {dimension_numbers = #tpu.dot_dimension_numbers<[1], [0], [0], [1], [0, 0, 1, 1], [], []>} : vector<16x128xbf16>, vector<128x512xbf16>, vector<16x512xf32> -> vector<16x512xf32>
    %203 = arith.addf %200, %202 : vector<16x512xf32>
    %204 = vector.broadcast %12 : vector<1x512xf32> to vector<16x512xf32>
    %205 = arith.addf %203, %204 : vector<16x512xf32>
    %206 = vector.extract_strided_slice %205 {offsets = [0, 0], sizes = [16, 128], strides = [1, 1]} : vector<16x512xf32> to vector<16x128xf32>
    %cst_86 = arith.constant 5.000000e-01 : f32
    %207 = vector.broadcast %cst_86 : f32 to vector<16x128xf32>
    %208 = arith.mulf %207, %206 : vector<16x128xf32>
    %209 = math.tanh %208 : vector<16x128xf32>
    %cst_87 = arith.constant 5.000000e-01 : f32
    %210 = vector.broadcast %cst_87 : f32 to vector<16x128xf32>
    %211 = arith.mulf %210, %209 : vector<16x128xf32>
    %cst_88 = arith.constant 5.000000e-01 : f32
    %212 = vector.broadcast %cst_88 : f32 to vector<16x128xf32>
    %213 = arith.addf %211, %212 : vector<16x128xf32>
    %214 = vector.extract_strided_slice %205 {offsets = [0, 128], sizes = [16, 128], strides = [1, 1]} : vector<16x512xf32> to vector<16x128xf32>
    %cst_89 = arith.constant 5.000000e-01 : f32
    %215 = vector.broadcast %cst_89 : f32 to vector<16x128xf32>
    %216 = arith.mulf %215, %214 : vector<16x128xf32>
    %217 = math.tanh %216 : vector<16x128xf32>
    %cst_90 = arith.constant 5.000000e-01 : f32
    %218 = vector.broadcast %cst_90 : f32 to vector<16x128xf32>
    %219 = arith.mulf %218, %217 : vector<16x128xf32>
    %cst_91 = arith.constant 5.000000e-01 : f32
    %220 = vector.broadcast %cst_91 : f32 to vector<16x128xf32>
    %221 = arith.addf %219, %220 : vector<16x128xf32>
    %222 = vector.extract_strided_slice %205 {offsets = [0, 256], sizes = [16, 128], strides = [1, 1]} : vector<16x512xf32> to vector<16x128xf32>
    %223 = math.tanh %222 : vector<16x128xf32>
    %224 = vector.extract_strided_slice %205 {offsets = [0, 384], sizes = [16, 128], strides = [1, 1]} : vector<16x512xf32> to vector<16x128xf32>
    %cst_92 = arith.constant 5.000000e-01 : f32
    %225 = vector.broadcast %cst_92 : f32 to vector<16x128xf32>
    %226 = arith.mulf %225, %224 : vector<16x128xf32>
    %227 = math.tanh %226 : vector<16x128xf32>
    %cst_93 = arith.constant 5.000000e-01 : f32
    %228 = vector.broadcast %cst_93 : f32 to vector<16x128xf32>
    %229 = arith.mulf %228, %227 : vector<16x128xf32>
    %cst_94 = arith.constant 5.000000e-01 : f32
    %230 = vector.broadcast %cst_94 : f32 to vector<16x128xf32>
    %231 = arith.addf %229, %230 : vector<16x128xf32>
    %232 = arith.mulf %221, %190 : vector<16x128xf32>
    %233 = arith.mulf %213, %223 : vector<16x128xf32>
    %234 = arith.addf %232, %233 : vector<16x128xf32>
    %235 = math.tanh %234 : vector<16x128xf32>
    %236 = arith.mulf %231, %235 : vector<16x128xf32>
    %237 = arith.truncf %236 : vector<16x128xf32> to vector<16x128xbf16>
    %238 = arith.index_cast %c4_i32 : i32 to index
    %c0_95 = arith.constant 0 : index
    %c0_96 = arith.constant 0 : index
    %239 = vector.load %arg15[%238, %c0_95, %c0_96] : memref<8x16x128xbf16, #tpu.memory_space<vmem>>, vector<1x16x128xbf16>
    %240 = vector.shape_cast %239 : vector<1x16x128xbf16> to vector<16x128xbf16>
    %241 = vector.shape_cast %237 : vector<16x128xbf16> to vector<1x16x128xbf16>
    tpu.vector_store %arg15[%238, %c0_95, %c0_96], %241 {strides = array<i32>} : memref<8x16x128xbf16, #tpu.memory_space<vmem>>, vector<1x16x128xbf16>,
    %c5_i32 = arith.constant 5 : i32
    %242 = arith.index_cast %c5_i32 : i32 to index
    %c0_97 = arith.constant 0 : index
    %c0_98 = arith.constant 0 : index
    %243 = vector.load %arg14[%242, %c0_97, %c0_98] : memref<8x16x512xf32, #tpu.memory_space<vmem>>, vector<1x16x512xf32>
    %244 = vector.shape_cast %243 : vector<1x16x512xf32> to vector<16x512xf32>
    %245 = arith.truncf %236 : vector<16x128xf32> to vector<16x128xbf16>
    %cst_99 = arith.constant dense<0.000000e+00> : vector<16x512xf32>
    %246 = tpu.matmul %245, %10, %cst_99 {dimension_numbers = #tpu.dot_dimension_numbers<[1], [0], [0], [1], [0, 0, 1, 1], [], []>} : vector<16x128xbf16>, vector<128x512xbf16>, vector<16x512xf32> -> vector<16x512xf32>
    %247 = arith.addf %244, %246 : vector<16x512xf32>
    %248 = vector.broadcast %12 : vector<1x512xf32> to vector<16x512xf32>
    %249 = arith.addf %247, %248 : vector<16x512xf32>
    %250 = vector.extract_strided_slice %249 {offsets = [0, 0], sizes = [16, 128], strides = [1, 1]} : vector<16x512xf32> to vector<16x128xf32>
    %cst_100 = arith.constant 5.000000e-01 : f32
    %251 = vector.broadcast %cst_100 : f32 to vector<16x128xf32>
    %252 = arith.mulf %251, %250 : vector<16x128xf32>
    %253 = math.tanh %252 : vector<16x128xf32>
    %cst_101 = arith.constant 5.000000e-01 : f32
    %254 = vector.broadcast %cst_101 : f32 to vector<16x128xf32>
    %255 = arith.mulf %254, %253 : vector<16x128xf32>
    %cst_102 = arith.constant 5.000000e-01 : f32
    %256 = vector.broadcast %cst_102 : f32 to vector<16x128xf32>
    %257 = arith.addf %255, %256 : vector<16x128xf32>
    %258 = vector.extract_strided_slice %249 {offsets = [0, 128], sizes = [16, 128], strides = [1, 1]} : vector<16x512xf32> to vector<16x128xf32>
    %cst_103 = arith.constant 5.000000e-01 : f32
    %259 = vector.broadcast %cst_103 : f32 to vector<16x128xf32>
    %260 = arith.mulf %259, %258 : vector<16x128xf32>
    %261 = math.tanh %260 : vector<16x128xf32>
    %cst_104 = arith.constant 5.000000e-01 : f32
    %262 = vector.broadcast %cst_104 : f32 to vector<16x128xf32>
    %263 = arith.mulf %262, %261 : vector<16x128xf32>
    %cst_105 = arith.constant 5.000000e-01 : f32
    %264 = vector.broadcast %cst_105 : f32 to vector<16x128xf32>
    %265 = arith.addf %263, %264 : vector<16x128xf32>
    %266 = vector.extract_strided_slice %249 {offsets = [0, 256], sizes = [16, 128], strides = [1, 1]} : vector<16x512xf32> to vector<16x128xf32>
    %267 = math.tanh %266 : vector<16x128xf32>
    %268 = vector.extract_strided_slice %249 {offsets = [0, 384], sizes = [16, 128], strides = [1, 1]} : vector<16x512xf32> to vector<16x128xf32>
    %cst_106 = arith.constant 5.000000e-01 : f32
    %269 = vector.broadcast %cst_106 : f32 to vector<16x128xf32>
    %270 = arith.mulf %269, %268 : vector<16x128xf32>
    %271 = math.tanh %270 : vector<16x128xf32>
    %cst_107 = arith.constant 5.000000e-01 : f32
    %272 = vector.broadcast %cst_107 : f32 to vector<16x128xf32>
    %273 = arith.mulf %272, %271 : vector<16x128xf32>
    %cst_108 = arith.constant 5.000000e-01 : f32
    %274 = vector.broadcast %cst_108 : f32 to vector<16x128xf32>
    %275 = arith.addf %273, %274 : vector<16x128xf32>
    %276 = arith.mulf %265, %234 : vector<16x128xf32>
    %277 = arith.mulf %257, %267 : vector<16x128xf32>
    %278 = arith.addf %276, %277 : vector<16x128xf32>
    %279 = math.tanh %278 : vector<16x128xf32>
    %280 = arith.mulf %275, %279 : vector<16x128xf32>
    %281 = arith.truncf %280 : vector<16x128xf32> to vector<16x128xbf16>
    %282 = arith.index_cast %c5_i32 : i32 to index
    %c0_109 = arith.constant 0 : index
    %c0_110 = arith.constant 0 : index
    %283 = vector.load %arg15[%282, %c0_109, %c0_110] : memref<8x16x128xbf16, #tpu.memory_space<vmem>>, vector<1x16x128xbf16>
    %284 = vector.shape_cast %283 : vector<1x16x128xbf16> to vector<16x128xbf16>
    %285 = vector.shape_cast %281 : vector<16x128xbf16> to vector<1x16x128xbf16>
    tpu.vector_store %arg15[%282, %c0_109, %c0_110], %285 {strides = array<i32>} : memref<8x16x128xbf16, #tpu.memory_space<vmem>>, vector<1x16x128xbf16>,
    %c6_i32 = arith.constant 6 : i32
    %286 = arith.index_cast %c6_i32 : i32 to index
    %c0_111 = arith.constant 0 : index
    %c0_112 = arith.constant 0 : index
    %287 = vector.load %arg14[%286, %c0_111, %c0_112] : memref<8x16x512xf32, #tpu.memory_space<vmem>>, vector<1x16x512xf32>
    %288 = vector.shape_cast %287 : vector<1x16x512xf32> to vector<16x512xf32>
    %289 = arith.truncf %280 : vector<16x128xf32> to vector<16x128xbf16>
    %cst_113 = arith.constant dense<0.000000e+00> : vector<16x512xf32>
    %290 = tpu.matmul %289, %10, %cst_113 {dimension_numbers = #tpu.dot_dimension_numbers<[1], [0], [0], [1], [0, 0, 1, 1], [], []>} : vector<16x128xbf16>, vector<128x512xbf16>, vector<16x512xf32> -> vector<16x512xf32>
    %291 = arith.addf %288, %290 : vector<16x512xf32>
    %292 = vector.broadcast %12 : vector<1x512xf32> to vector<16x512xf32>
    %293 = arith.addf %291, %292 : vector<16x512xf32>
    %294 = vector.extract_strided_slice %293 {offsets = [0, 0], sizes = [16, 128], strides = [1, 1]} : vector<16x512xf32> to vector<16x128xf32>
    %cst_114 = arith.constant 5.000000e-01 : f32
    %295 = vector.broadcast %cst_114 : f32 to vector<16x128xf32>
    %296 = arith.mulf %295, %294 : vector<16x128xf32>
    %297 = math.tanh %296 : vector<16x128xf32>
    %cst_115 = arith.constant 5.000000e-01 : f32
    %298 = vector.broadcast %cst_115 : f32 to vector<16x128xf32>
    %299 = arith.mulf %298, %297 : vector<16x128xf32>
    %cst_116 = arith.constant 5.000000e-01 : f32
    %300 = vector.broadcast %cst_116 : f32 to vector<16x128xf32>
    %301 = arith.addf %299, %300 : vector<16x128xf32>
    %302 = vector.extract_strided_slice %293 {offsets = [0, 128], sizes = [16, 128], strides = [1, 1]} : vector<16x512xf32> to vector<16x128xf32>
    %cst_117 = arith.constant 5.000000e-01 : f32
    %303 = vector.broadcast %cst_117 : f32 to vector<16x128xf32>
    %304 = arith.mulf %303, %302 : vector<16x128xf32>
    %305 = math.tanh %304 : vector<16x128xf32>
    %cst_118 = arith.constant 5.000000e-01 : f32
    %306 = vector.broadcast %cst_118 : f32 to vector<16x128xf32>
    %307 = arith.mulf %306, %305 : vector<16x128xf32>
    %cst_119 = arith.constant 5.000000e-01 : f32
    %308 = vector.broadcast %cst_119 : f32 to vector<16x128xf32>
    %309 = arith.addf %307, %308 : vector<16x128xf32>
    %310 = vector.extract_strided_slice %293 {offsets = [0, 256], sizes = [16, 128], strides = [1, 1]} : vector<16x512xf32> to vector<16x128xf32>
    %311 = math.tanh %310 : vector<16x128xf32>
    %312 = vector.extract_strided_slice %293 {offsets = [0, 384], sizes = [16, 128], strides = [1, 1]} : vector<16x512xf32> to vector<16x128xf32>
    %cst_120 = arith.constant 5.000000e-01 : f32
    %313 = vector.broadcast %cst_120 : f32 to vector<16x128xf32>
    %314 = arith.mulf %313, %312 : vector<16x128xf32>
    %315 = math.tanh %314 : vector<16x128xf32>
    %cst_121 = arith.constant 5.000000e-01 : f32
    %316 = vector.broadcast %cst_121 : f32 to vector<16x128xf32>
    %317 = arith.mulf %316, %315 : vector<16x128xf32>
    %cst_122 = arith.constant 5.000000e-01 : f32
    %318 = vector.broadcast %cst_122 : f32 to vector<16x128xf32>
    %319 = arith.addf %317, %318 : vector<16x128xf32>
    %320 = arith.mulf %309, %278 : vector<16x128xf32>
    %321 = arith.mulf %301, %311 : vector<16x128xf32>
    %322 = arith.addf %320, %321 : vector<16x128xf32>
    %323 = math.tanh %322 : vector<16x128xf32>
    %324 = arith.mulf %319, %323 : vector<16x128xf32>
    %325 = arith.truncf %324 : vector<16x128xf32> to vector<16x128xbf16>
    %326 = arith.index_cast %c6_i32 : i32 to index
    %c0_123 = arith.constant 0 : index
    %c0_124 = arith.constant 0 : index
    %327 = vector.load %arg15[%326, %c0_123, %c0_124] : memref<8x16x128xbf16, #tpu.memory_space<vmem>>, vector<1x16x128xbf16>
    %328 = vector.shape_cast %327 : vector<1x16x128xbf16> to vector<16x128xbf16>
    %329 = vector.shape_cast %325 : vector<16x128xbf16> to vector<1x16x128xbf16>
    tpu.vector_store %arg15[%326, %c0_123, %c0_124], %329 {strides = array<i32>} : memref<8x16x128xbf16, #tpu.memory_space<vmem>>, vector<1x16x128xbf16>,
    %c7_i32 = arith.constant 7 : i32
    %330 = arith.index_cast %c7_i32 : i32 to index
    %c0_125 = arith.constant 0 : index
    %c0_126 = arith.constant 0 : index
    %331 = vector.load %arg14[%330, %c0_125, %c0_126] : memref<8x16x512xf32, #tpu.memory_space<vmem>>, vector<1x16x512xf32>
    %332 = vector.shape_cast %331 : vector<1x16x512xf32> to vector<16x512xf32>
    %333 = arith.truncf %324 : vector<16x128xf32> to vector<16x128xbf16>
    %cst_127 = arith.constant dense<0.000000e+00> : vector<16x512xf32>
    %334 = tpu.matmul %333, %10, %cst_127 {dimension_numbers = #tpu.dot_dimension_numbers<[1], [0], [0], [1], [0, 0, 1, 1], [], []>} : vector<16x128xbf16>, vector<128x512xbf16>, vector<16x512xf32> -> vector<16x512xf32>
    %335 = arith.addf %332, %334 : vector<16x512xf32>
    %336 = vector.broadcast %12 : vector<1x512xf32> to vector<16x512xf32>
    %337 = arith.addf %335, %336 : vector<16x512xf32>
    %338 = vector.extract_strided_slice %337 {offsets = [0, 0], sizes = [16, 128], strides = [1, 1]} : vector<16x512xf32> to vector<16x128xf32>
    %cst_128 = arith.constant 5.000000e-01 : f32
    %339 = vector.broadcast %cst_128 : f32 to vector<16x128xf32>
    %340 = arith.mulf %339, %338 : vector<16x128xf32>
    %341 = math.tanh %340 : vector<16x128xf32>
    %cst_129 = arith.constant 5.000000e-01 : f32
    %342 = vector.broadcast %cst_129 : f32 to vector<16x128xf32>
    %343 = arith.mulf %342, %341 : vector<16x128xf32>
    %cst_130 = arith.constant 5.000000e-01 : f32
    %344 = vector.broadcast %cst_130 : f32 to vector<16x128xf32>
    %345 = arith.addf %343, %344 : vector<16x128xf32>
    %346 = vector.extract_strided_slice %337 {offsets = [0, 128], sizes = [16, 128], strides = [1, 1]} : vector<16x512xf32> to vector<16x128xf32>
    %cst_131 = arith.constant 5.000000e-01 : f32
    %347 = vector.broadcast %cst_131 : f32 to vector<16x128xf32>
    %348 = arith.mulf %347, %346 : vector<16x128xf32>
    %349 = math.tanh %348 : vector<16x128xf32>
    %cst_132 = arith.constant 5.000000e-01 : f32
    %350 = vector.broadcast %cst_132 : f32 to vector<16x128xf32>
    %351 = arith.mulf %350, %349 : vector<16x128xf32>
    %cst_133 = arith.constant 5.000000e-01 : f32
    %352 = vector.broadcast %cst_133 : f32 to vector<16x128xf32>
    %353 = arith.addf %351, %352 : vector<16x128xf32>
    %354 = vector.extract_strided_slice %337 {offsets = [0, 256], sizes = [16, 128], strides = [1, 1]} : vector<16x512xf32> to vector<16x128xf32>
    %355 = math.tanh %354 : vector<16x128xf32>
    %356 = vector.extract_strided_slice %337 {offsets = [0, 384], sizes = [16, 128], strides = [1, 1]} : vector<16x512xf32> to vector<16x128xf32>
    %cst_134 = arith.constant 5.000000e-01 : f32
    %357 = vector.broadcast %cst_134 : f32 to vector<16x128xf32>
    %358 = arith.mulf %357, %356 : vector<16x128xf32>
    %359 = math.tanh %358 : vector<16x128xf32>
    %cst_135 = arith.constant 5.000000e-01 : f32
    %360 = vector.broadcast %cst_135 : f32 to vector<16x128xf32>
    %361 = arith.mulf %360, %359 : vector<16x128xf32>
    %cst_136 = arith.constant 5.000000e-01 : f32
    %362 = vector.broadcast %cst_136 : f32 to vector<16x128xf32>
    %363 = arith.addf %361, %362 : vector<16x128xf32>
    %364 = arith.mulf %353, %322 : vector<16x128xf32>
    %365 = arith.mulf %345, %355 : vector<16x128xf32>
    %366 = arith.addf %364, %365 : vector<16x128xf32>
    %367 = math.tanh %366 : vector<16x128xf32>
    %368 = arith.mulf %363, %367 : vector<16x128xf32>
    %369 = arith.truncf %368 : vector<16x128xf32> to vector<16x128xbf16>
    %370 = arith.index_cast %c7_i32 : i32 to index
    %c0_137 = arith.constant 0 : index
    %c0_138 = arith.constant 0 : index
    %371 = vector.load %arg15[%370, %c0_137, %c0_138] : memref<8x16x128xbf16, #tpu.memory_space<vmem>>, vector<1x16x128xbf16>
    %372 = vector.shape_cast %371 : vector<1x16x128xbf16> to vector<16x128xbf16>
    %373 = vector.shape_cast %369 : vector<16x128xbf16> to vector<1x16x128xbf16>
    tpu.vector_store %arg15[%370, %c0_137, %c0_138], %373 {strides = array<i32>} : memref<8x16x128xbf16, #tpu.memory_space<vmem>>, vector<1x16x128xbf16>,
    %c8_i32 = arith.constant 8 : i32
    %c0_139 = arith.constant 0 : index
    %c0_140 = arith.constant 0 : index
    %c0_141 = arith.constant 0 : index
    %374 = vector.load %arg10[%c0_139, %c0_140, %c0_141] : memref<2x16x128xf32, #tpu.memory_space<vmem>>, vector<1x16x128xf32>
    %375 = vector.shape_cast %374 : vector<1x16x128xf32> to vector<16x128xf32>
    %376 = vector.shape_cast %368 : vector<16x128xf32> to vector<1x16x128xf32>
    tpu.vector_store %arg10[%c0_139, %c0_140, %c0_141], %376 {strides = array<i32>} : memref<2x16x128xf32, #tpu.memory_space<vmem>>, vector<1x16x128xf32>,
    %c0_142 = arith.constant 0 : index
    %c0_143 = arith.constant 0 : index
    %c0_144 = arith.constant 0 : index
    %377 = vector.load %arg11[%c0_142, %c0_143, %c0_144] : memref<2x16x128xf32, #tpu.memory_space<vmem>>, vector<1x16x128xf32>
    %378 = vector.shape_cast %377 : vector<1x16x128xf32> to vector<16x128xf32>
    %379 = vector.shape_cast %366 : vector<16x128xf32> to vector<1x16x128xf32>
    tpu.vector_store %arg11[%c0_142, %c0_143, %c0_144], %379 {strides = array<i32>} : memref<2x16x128xf32, #tpu.memory_space<vmem>>, vector<1x16x128xf32>,
    %380 = arith.extui %0 : i1 to i32
    %c0_i32_145 = arith.constant 0 : i32
    %381 = arith.cmpi ne, %380, %c0_i32_145 : i32
    scf.if %381 {
      %c1_i32_301 = arith.constant 1 : i32
      %c1_i32_302 = arith.constant 1 : i32
      %c0_i32_303 = arith.constant 0 : i32
      %c1_i32_304 = arith.constant 1 : i32
      %c0_i32_305 = arith.constant 0 : i32
      %c0_i32_306 = arith.constant 0 : i32
      %762 = tpu.memref_slice %arg2[%c1_i32_301, %c0_i32_305, %c0_i32_306] : memref<2x128x512xbf16, #tpu.memory_space<any>> -> memref<1x128x512xbf16, #tpu.memory_space<any>>
      %763 = tpu.memref_squeeze %762 : memref<1x128x512xbf16, #tpu.memory_space<any>> -> memref<128x512xbf16, #tpu.memory_space<any>>
      %c0_i32_307 = arith.constant 0 : i32
      %c0_i32_308 = arith.constant 0 : i32
      %764 = tpu.memref_slice %arg12[%c1_i32_302, %c0_i32_307, %c0_i32_308] : memref<2x128x512xbf16, #tpu.memory_space<vmem>> -> memref<1x128x512xbf16, #tpu.memory_space<vmem>>
      %765 = tpu.memref_squeeze %764 : memref<1x128x512xbf16, #tpu.memory_space<vmem>> -> memref<128x512xbf16, #tpu.memory_space<vmem>>
      %766 = tpu.memref_slice %arg16[%c0_i32_303, %c1_i32_304] : memref<2x2x!tpu.dma_semaphore, #tpu.memory_space<semaphore_mem>> -> memref<1x1x!tpu.dma_semaphore, #tpu.memory_space<semaphore_mem>>
      %767 = tpu.memref_squeeze %766 : memref<1x1x!tpu.dma_semaphore, #tpu.memory_space<semaphore_mem>> -> memref<!tpu.dma_semaphore, #tpu.memory_space<semaphore_mem>>
      tpu.wait_dma2 semaphore(%767 : memref<!tpu.dma_semaphore, #tpu.memory_space<semaphore_mem>>) src(%763 : memref<128x512xbf16, #tpu.memory_space<any>>) dst(%765 : memref<128x512xbf16, #tpu.memory_space<vmem>>)
      %c1_i32_309 = arith.constant 1 : i32
      %c1_i32_310 = arith.constant 1 : i32
      %c1_i32_311 = arith.constant 1 : i32
      %c1_i32_312 = arith.constant 1 : i32
      %c0_i32_313 = arith.constant 0 : i32
      %c0_i32_314 = arith.constant 0 : i32
      %768 = tpu.memref_slice %arg3[%c1_i32_309, %c0_i32_313, %c0_i32_314] : memref<2x128x512xbf16, #tpu.memory_space<any>> -> memref<1x128x512xbf16, #tpu.memory_space<any>>
      %769 = tpu.memref_squeeze %768 : memref<1x128x512xbf16, #tpu.memory_space<any>> -> memref<128x512xbf16, #tpu.memory_space<any>>
      %c0_i32_315 = arith.constant 0 : i32
      %c0_i32_316 = arith.constant 0 : i32
      %770 = tpu.memref_slice %arg13[%c1_i32_310, %c0_i32_315, %c0_i32_316] : memref<2x128x512xbf16, #tpu.memory_space<vmem>> -> memref<1x128x512xbf16, #tpu.memory_space<vmem>>
      %771 = tpu.memref_squeeze %770 : memref<1x128x512xbf16, #tpu.memory_space<vmem>> -> memref<128x512xbf16, #tpu.memory_space<vmem>>
      %772 = tpu.memref_slice %arg16[%c1_i32_311, %c1_i32_312] : memref<2x2x!tpu.dma_semaphore, #tpu.memory_space<semaphore_mem>> -> memref<1x1x!tpu.dma_semaphore, #tpu.memory_space<semaphore_mem>>
      %773 = tpu.memref_squeeze %772 : memref<1x1x!tpu.dma_semaphore, #tpu.memory_space<semaphore_mem>> -> memref<!tpu.dma_semaphore, #tpu.memory_space<semaphore_mem>>
      tpu.wait_dma2 semaphore(%773 : memref<!tpu.dma_semaphore, #tpu.memory_space<semaphore_mem>>) src(%769 : memref<128x512xbf16, #tpu.memory_space<any>>) dst(%771 : memref<128x512xbf16, #tpu.memory_space<vmem>>)
    } else {
    }
    %c1 = arith.constant 1 : index
    %c0_146 = arith.constant 0 : index
    %c0_147 = arith.constant 0 : index
    %382 = vector.load %arg12[%c1, %c0_146, %c0_147] : memref<2x128x512xbf16, #tpu.memory_space<vmem>>, vector<1x128x512xbf16>
    %383 = vector.shape_cast %382 : vector<1x128x512xbf16> to vector<128x512xbf16>
    %c1_148 = arith.constant 1 : index
    %c0_149 = arith.constant 0 : index
    %c0_150 = arith.constant 0 : index
    %384 = vector.load %arg13[%c1_148, %c0_149, %c0_150] : memref<2x128x512xbf16, #tpu.memory_space<vmem>>, vector<1x128x512xbf16>
    %385 = vector.shape_cast %384 : vector<1x128x512xbf16> to vector<128x512xbf16>
    %c1_151 = arith.constant 1 : index
    %c0_152 = arith.constant 0 : index
    %c0_153 = arith.constant 0 : index
    %386 = vector.load %arg4[%c1_151, %c0_152, %c0_153] : memref<2x1x512xf32, #tpu.memory_space<vmem>>, vector<1x1x512xf32>
    %387 = vector.shape_cast %386 : vector<1x1x512xf32> to vector<1x512xf32>
    %c0_154 = arith.constant 0 : index
    %c0_155 = arith.constant 0 : index
    %c0_156 = arith.constant 0 : index
    %388 = vector.load %arg15[%c0_154, %c0_155, %c0_156] : memref<8x16x128xbf16, #tpu.memory_space<vmem>>, vector<8x16x128xbf16>
    %389 = vector.shape_cast %388 : vector<8x16x128xbf16> to vector<128x128xbf16>
    %cst_157 = arith.constant dense<0.000000e+00> : vector<128x512xf32>
    %390 = tpu.matmul %389, %383, %cst_157 {dimension_numbers = #tpu.dot_dimension_numbers<[1], [0], [0], [1], [0, 0, 1, 1], [], []>} : vector<128x128xbf16>, vector<128x512xbf16>, vector<128x512xf32> -> vector<128x512xf32>
    %391 = vector.shape_cast %390 : vector<128x512xf32> to vector<8x16x512xf32>
    %c0_158 = arith.constant 0 : index
    %c0_159 = arith.constant 0 : index
    %c0_160 = arith.constant 0 : index
    %392 = vector.load %arg14[%c0_158, %c0_159, %c0_160] : memref<8x16x512xf32, #tpu.memory_space<vmem>>, vector<8x16x512xf32>
    tpu.vector_store %arg14[%c0_158, %c0_159, %c0_160], %391 {strides = array<i32>} : memref<8x16x512xf32, #tpu.memory_space<vmem>>, vector<8x16x512xf32>,
    %c1_161 = arith.constant 1 : index
    %c0_162 = arith.constant 0 : index
    %c0_163 = arith.constant 0 : index
    %393 = vector.load %arg10[%c1_161, %c0_162, %c0_163] : memref<2x16x128xf32, #tpu.memory_space<vmem>>, vector<1x16x128xf32>
    %394 = vector.shape_cast %393 : vector<1x16x128xf32> to vector<16x128xf32>
    %c1_164 = arith.constant 1 : index
    %c0_165 = arith.constant 0 : index
    %c0_166 = arith.constant 0 : index
    %395 = vector.load %arg11[%c1_164, %c0_165, %c0_166] : memref<2x16x128xf32, #tpu.memory_space<vmem>>, vector<1x16x128xf32>
    %396 = vector.shape_cast %395 : vector<1x16x128xf32> to vector<16x128xf32>
    %c0_i32_167 = arith.constant 0 : i32
    %397 = arith.index_cast %c0_i32_167 : i32 to index
    %c0_168 = arith.constant 0 : index
    %c0_169 = arith.constant 0 : index
    %398 = vector.load %arg14[%397, %c0_168, %c0_169] : memref<8x16x512xf32, #tpu.memory_space<vmem>>, vector<1x16x512xf32>
    %399 = vector.shape_cast %398 : vector<1x16x512xf32> to vector<16x512xf32>
    %400 = arith.truncf %394 : vector<16x128xf32> to vector<16x128xbf16>
    %cst_170 = arith.constant dense<0.000000e+00> : vector<16x512xf32>
    %401 = tpu.matmul %400, %385, %cst_170 {dimension_numbers = #tpu.dot_dimension_numbers<[1], [0], [0], [1], [0, 0, 1, 1], [], []>} : vector<16x128xbf16>, vector<128x512xbf16>, vector<16x512xf32> -> vector<16x512xf32>
    %402 = arith.addf %399, %401 : vector<16x512xf32>
    %403 = vector.broadcast %387 : vector<1x512xf32> to vector<16x512xf32>
    %404 = arith.addf %402, %403 : vector<16x512xf32>
    %405 = vector.extract_strided_slice %404 {offsets = [0, 0], sizes = [16, 128], strides = [1, 1]} : vector<16x512xf32> to vector<16x128xf32>
    %cst_171 = arith.constant 5.000000e-01 : f32
    %406 = vector.broadcast %cst_171 : f32 to vector<16x128xf32>
    %407 = arith.mulf %406, %405 : vector<16x128xf32>
    %408 = math.tanh %407 : vector<16x128xf32>
    %cst_172 = arith.constant 5.000000e-01 : f32
    %409 = vector.broadcast %cst_172 : f32 to vector<16x128xf32>
    %410 = arith.mulf %409, %408 : vector<16x128xf32>
    %cst_173 = arith.constant 5.000000e-01 : f32
    %411 = vector.broadcast %cst_173 : f32 to vector<16x128xf32>
    %412 = arith.addf %410, %411 : vector<16x128xf32>
    %413 = vector.extract_strided_slice %404 {offsets = [0, 128], sizes = [16, 128], strides = [1, 1]} : vector<16x512xf32> to vector<16x128xf32>
    %cst_174 = arith.constant 5.000000e-01 : f32
    %414 = vector.broadcast %cst_174 : f32 to vector<16x128xf32>
    %415 = arith.mulf %414, %413 : vector<16x128xf32>
    %416 = math.tanh %415 : vector<16x128xf32>
    %cst_175 = arith.constant 5.000000e-01 : f32
    %417 = vector.broadcast %cst_175 : f32 to vector<16x128xf32>
    %418 = arith.mulf %417, %416 : vector<16x128xf32>
    %cst_176 = arith.constant 5.000000e-01 : f32
    %419 = vector.broadcast %cst_176 : f32 to vector<16x128xf32>
    %420 = arith.addf %418, %419 : vector<16x128xf32>
    %421 = vector.extract_strided_slice %404 {offsets = [0, 256], sizes = [16, 128], strides = [1, 1]} : vector<16x512xf32> to vector<16x128xf32>
    %422 = math.tanh %421 : vector<16x128xf32>
    %423 = vector.extract_strided_slice %404 {offsets = [0, 384], sizes = [16, 128], strides = [1, 1]} : vector<16x512xf32> to vector<16x128xf32>
    %cst_177 = arith.constant 5.000000e-01 : f32
    %424 = vector.broadcast %cst_177 : f32 to vector<16x128xf32>
    %425 = arith.mulf %424, %423 : vector<16x128xf32>
    %426 = math.tanh %425 : vector<16x128xf32>
    %cst_178 = arith.constant 5.000000e-01 : f32
    %427 = vector.broadcast %cst_178 : f32 to vector<16x128xf32>
    %428 = arith.mulf %427, %426 : vector<16x128xf32>
    %cst_179 = arith.constant 5.000000e-01 : f32
    %429 = vector.broadcast %cst_179 : f32 to vector<16x128xf32>
    %430 = arith.addf %428, %429 : vector<16x128xf32>
    %431 = arith.mulf %420, %396 : vector<16x128xf32>
    %432 = arith.mulf %412, %422 : vector<16x128xf32>
    %433 = arith.addf %431, %432 : vector<16x128xf32>
    %434 = math.tanh %433 : vector<16x128xf32>
    %435 = arith.mulf %430, %434 : vector<16x128xf32>
    %436 = arith.truncf %435 : vector<16x128xf32> to vector<16x128xbf16>
    %437 = arith.index_cast %c0_i32_167 : i32 to index
    %c0_180 = arith.constant 0 : index
    %c0_181 = arith.constant 0 : index
    %438 = vector.load %arg15[%437, %c0_180, %c0_181] : memref<8x16x128xbf16, #tpu.memory_space<vmem>>, vector<1x16x128xbf16>
    %439 = vector.shape_cast %438 : vector<1x16x128xbf16> to vector<16x128xbf16>
    %440 = vector.shape_cast %436 : vector<16x128xbf16> to vector<1x16x128xbf16>
    tpu.vector_store %arg15[%437, %c0_180, %c0_181], %440 {strides = array<i32>} : memref<8x16x128xbf16, #tpu.memory_space<vmem>>, vector<1x16x128xbf16>,
    %c1_i32_182 = arith.constant 1 : i32
    %441 = arith.index_cast %c1_i32_182 : i32 to index
    %c0_183 = arith.constant 0 : index
    %c0_184 = arith.constant 0 : index
    %442 = vector.load %arg14[%441, %c0_183, %c0_184] : memref<8x16x512xf32, #tpu.memory_space<vmem>>, vector<1x16x512xf32>
    %443 = vector.shape_cast %442 : vector<1x16x512xf32> to vector<16x512xf32>
    %444 = arith.truncf %435 : vector<16x128xf32> to vector<16x128xbf16>
    %cst_185 = arith.constant dense<0.000000e+00> : vector<16x512xf32>
    %445 = tpu.matmul %444, %385, %cst_185 {dimension_numbers = #tpu.dot_dimension_numbers<[1], [0], [0], [1], [0, 0, 1, 1], [], []>} : vector<16x128xbf16>, vector<128x512xbf16>, vector<16x512xf32> -> vector<16x512xf32>
    %446 = arith.addf %443, %445 : vector<16x512xf32>
    %447 = vector.broadcast %387 : vector<1x512xf32> to vector<16x512xf32>
    %448 = arith.addf %446, %447 : vector<16x512xf32>
    %449 = vector.extract_strided_slice %448 {offsets = [0, 0], sizes = [16, 128], strides = [1, 1]} : vector<16x512xf32> to vector<16x128xf32>
    %cst_186 = arith.constant 5.000000e-01 : f32
    %450 = vector.broadcast %cst_186 : f32 to vector<16x128xf32>
    %451 = arith.mulf %450, %449 : vector<16x128xf32>
    %452 = math.tanh %451 : vector<16x128xf32>
    %cst_187 = arith.constant 5.000000e-01 : f32
    %453 = vector.broadcast %cst_187 : f32 to vector<16x128xf32>
    %454 = arith.mulf %453, %452 : vector<16x128xf32>
    %cst_188 = arith.constant 5.000000e-01 : f32
    %455 = vector.broadcast %cst_188 : f32 to vector<16x128xf32>
    %456 = arith.addf %454, %455 : vector<16x128xf32>
    %457 = vector.extract_strided_slice %448 {offsets = [0, 128], sizes = [16, 128], strides = [1, 1]} : vector<16x512xf32> to vector<16x128xf32>
    %cst_189 = arith.constant 5.000000e-01 : f32
    %458 = vector.broadcast %cst_189 : f32 to vector<16x128xf32>
    %459 = arith.mulf %458, %457 : vector<16x128xf32>
    %460 = math.tanh %459 : vector<16x128xf32>
    %cst_190 = arith.constant 5.000000e-01 : f32
    %461 = vector.broadcast %cst_190 : f32 to vector<16x128xf32>
    %462 = arith.mulf %461, %460 : vector<16x128xf32>
    %cst_191 = arith.constant 5.000000e-01 : f32
    %463 = vector.broadcast %cst_191 : f32 to vector<16x128xf32>
    %464 = arith.addf %462, %463 : vector<16x128xf32>
    %465 = vector.extract_strided_slice %448 {offsets = [0, 256], sizes = [16, 128], strides = [1, 1]} : vector<16x512xf32> to vector<16x128xf32>
    %466 = math.tanh %465 : vector<16x128xf32>
    %467 = vector.extract_strided_slice %448 {offsets = [0, 384], sizes = [16, 128], strides = [1, 1]} : vector<16x512xf32> to vector<16x128xf32>
    %cst_192 = arith.constant 5.000000e-01 : f32
    %468 = vector.broadcast %cst_192 : f32 to vector<16x128xf32>
    %469 = arith.mulf %468, %467 : vector<16x128xf32>
    %470 = math.tanh %469 : vector<16x128xf32>
    %cst_193 = arith.constant 5.000000e-01 : f32
    %471 = vector.broadcast %cst_193 : f32 to vector<16x128xf32>
    %472 = arith.mulf %471, %470 : vector<16x128xf32>
    %cst_194 = arith.constant 5.000000e-01 : f32
    %473 = vector.broadcast %cst_194 : f32 to vector<16x128xf32>
    %474 = arith.addf %472, %473 : vector<16x128xf32>
    %475 = arith.mulf %464, %433 : vector<16x128xf32>
    %476 = arith.mulf %456, %466 : vector<16x128xf32>
    %477 = arith.addf %475, %476 : vector<16x128xf32>
    %478 = math.tanh %477 : vector<16x128xf32>
    %479 = arith.mulf %474, %478 : vector<16x128xf32>
    %480 = arith.truncf %479 : vector<16x128xf32> to vector<16x128xbf16>
    %481 = arith.index_cast %c1_i32_182 : i32 to index
    %c0_195 = arith.constant 0 : index
    %c0_196 = arith.constant 0 : index
    %482 = vector.load %arg15[%481, %c0_195, %c0_196] : memref<8x16x128xbf16, #tpu.memory_space<vmem>>, vector<1x16x128xbf16>
    %483 = vector.shape_cast %482 : vector<1x16x128xbf16> to vector<16x128xbf16>
    %484 = vector.shape_cast %480 : vector<16x128xbf16> to vector<1x16x128xbf16>
    tpu.vector_store %arg15[%481, %c0_195, %c0_196], %484 {strides = array<i32>} : memref<8x16x128xbf16, #tpu.memory_space<vmem>>, vector<1x16x128xbf16>,
    %c2_i32_197 = arith.constant 2 : i32
    %485 = arith.index_cast %c2_i32_197 : i32 to index
    %c0_198 = arith.constant 0 : index
    %c0_199 = arith.constant 0 : index
    %486 = vector.load %arg14[%485, %c0_198, %c0_199] : memref<8x16x512xf32, #tpu.memory_space<vmem>>, vector<1x16x512xf32>
    %487 = vector.shape_cast %486 : vector<1x16x512xf32> to vector<16x512xf32>
    %488 = arith.truncf %479 : vector<16x128xf32> to vector<16x128xbf16>
    %cst_200 = arith.constant dense<0.000000e+00> : vector<16x512xf32>
    %489 = tpu.matmul %488, %385, %cst_200 {dimension_numbers = #tpu.dot_dimension_numbers<[1], [0], [0], [1], [0, 0, 1, 1], [], []>} : vector<16x128xbf16>, vector<128x512xbf16>, vector<16x512xf32> -> vector<16x512xf32>
    %490 = arith.addf %487, %489 : vector<16x512xf32>
    %491 = vector.broadcast %387 : vector<1x512xf32> to vector<16x512xf32>
    %492 = arith.addf %490, %491 : vector<16x512xf32>
    %493 = vector.extract_strided_slice %492 {offsets = [0, 0], sizes = [16, 128], strides = [1, 1]} : vector<16x512xf32> to vector<16x128xf32>
    %cst_201 = arith.constant 5.000000e-01 : f32
    %494 = vector.broadcast %cst_201 : f32 to vector<16x128xf32>
    %495 = arith.mulf %494, %493 : vector<16x128xf32>
    %496 = math.tanh %495 : vector<16x128xf32>
    %cst_202 = arith.constant 5.000000e-01 : f32
    %497 = vector.broadcast %cst_202 : f32 to vector<16x128xf32>
    %498 = arith.mulf %497, %496 : vector<16x128xf32>
    %cst_203 = arith.constant 5.000000e-01 : f32
    %499 = vector.broadcast %cst_203 : f32 to vector<16x128xf32>
    %500 = arith.addf %498, %499 : vector<16x128xf32>
    %501 = vector.extract_strided_slice %492 {offsets = [0, 128], sizes = [16, 128], strides = [1, 1]} : vector<16x512xf32> to vector<16x128xf32>
    %cst_204 = arith.constant 5.000000e-01 : f32
    %502 = vector.broadcast %cst_204 : f32 to vector<16x128xf32>
    %503 = arith.mulf %502, %501 : vector<16x128xf32>
    %504 = math.tanh %503 : vector<16x128xf32>
    %cst_205 = arith.constant 5.000000e-01 : f32
    %505 = vector.broadcast %cst_205 : f32 to vector<16x128xf32>
    %506 = arith.mulf %505, %504 : vector<16x128xf32>
    %cst_206 = arith.constant 5.000000e-01 : f32
    %507 = vector.broadcast %cst_206 : f32 to vector<16x128xf32>
    %508 = arith.addf %506, %507 : vector<16x128xf32>
    %509 = vector.extract_strided_slice %492 {offsets = [0, 256], sizes = [16, 128], strides = [1, 1]} : vector<16x512xf32> to vector<16x128xf32>
    %510 = math.tanh %509 : vector<16x128xf32>
    %511 = vector.extract_strided_slice %492 {offsets = [0, 384], sizes = [16, 128], strides = [1, 1]} : vector<16x512xf32> to vector<16x128xf32>
    %cst_207 = arith.constant 5.000000e-01 : f32
    %512 = vector.broadcast %cst_207 : f32 to vector<16x128xf32>
    %513 = arith.mulf %512, %511 : vector<16x128xf32>
    %514 = math.tanh %513 : vector<16x128xf32>
    %cst_208 = arith.constant 5.000000e-01 : f32
    %515 = vector.broadcast %cst_208 : f32 to vector<16x128xf32>
    %516 = arith.mulf %515, %514 : vector<16x128xf32>
    %cst_209 = arith.constant 5.000000e-01 : f32
    %517 = vector.broadcast %cst_209 : f32 to vector<16x128xf32>
    %518 = arith.addf %516, %517 : vector<16x128xf32>
    %519 = arith.mulf %508, %477 : vector<16x128xf32>
    %520 = arith.mulf %500, %510 : vector<16x128xf32>
    %521 = arith.addf %519, %520 : vector<16x128xf32>
    %522 = math.tanh %521 : vector<16x128xf32>
    %523 = arith.mulf %518, %522 : vector<16x128xf32>
    %524 = arith.truncf %523 : vector<16x128xf32> to vector<16x128xbf16>
    %525 = arith.index_cast %c2_i32_197 : i32 to index
    %c0_210 = arith.constant 0 : index
    %c0_211 = arith.constant 0 : index
    %526 = vector.load %arg15[%525, %c0_210, %c0_211] : memref<8x16x128xbf16, #tpu.memory_space<vmem>>, vector<1x16x128xbf16>
    %527 = vector.shape_cast %526 : vector<1x16x128xbf16> to vector<16x128xbf16>
    %528 = vector.shape_cast %524 : vector<16x128xbf16> to vector<1x16x128xbf16>
    tpu.vector_store %arg15[%525, %c0_210, %c0_211], %528 {strides = array<i32>} : memref<8x16x128xbf16, #tpu.memory_space<vmem>>, vector<1x16x128xbf16>,
    %c3_i32_212 = arith.constant 3 : i32
    %529 = arith.index_cast %c3_i32_212 : i32 to index
    %c0_213 = arith.constant 0 : index
    %c0_214 = arith.constant 0 : index
    %530 = vector.load %arg14[%529, %c0_213, %c0_214] : memref<8x16x512xf32, #tpu.memory_space<vmem>>, vector<1x16x512xf32>
    %531 = vector.shape_cast %530 : vector<1x16x512xf32> to vector<16x512xf32>
    %532 = arith.truncf %523 : vector<16x128xf32> to vector<16x128xbf16>
    %cst_215 = arith.constant dense<0.000000e+00> : vector<16x512xf32>
    %533 = tpu.matmul %532, %385, %cst_215 {dimension_numbers = #tpu.dot_dimension_numbers<[1], [0], [0], [1], [0, 0, 1, 1], [], []>} : vector<16x128xbf16>, vector<128x512xbf16>, vector<16x512xf32> -> vector<16x512xf32>
    %534 = arith.addf %531, %533 : vector<16x512xf32>
    %535 = vector.broadcast %387 : vector<1x512xf32> to vector<16x512xf32>
    %536 = arith.addf %534, %535 : vector<16x512xf32>
    %537 = vector.extract_strided_slice %536 {offsets = [0, 0], sizes = [16, 128], strides = [1, 1]} : vector<16x512xf32> to vector<16x128xf32>
    %cst_216 = arith.constant 5.000000e-01 : f32
    %538 = vector.broadcast %cst_216 : f32 to vector<16x128xf32>
    %539 = arith.mulf %538, %537 : vector<16x128xf32>
    %540 = math.tanh %539 : vector<16x128xf32>
    %cst_217 = arith.constant 5.000000e-01 : f32
    %541 = vector.broadcast %cst_217 : f32 to vector<16x128xf32>
    %542 = arith.mulf %541, %540 : vector<16x128xf32>
    %cst_218 = arith.constant 5.000000e-01 : f32
    %543 = vector.broadcast %cst_218 : f32 to vector<16x128xf32>
    %544 = arith.addf %542, %543 : vector<16x128xf32>
    %545 = vector.extract_strided_slice %536 {offsets = [0, 128], sizes = [16, 128], strides = [1, 1]} : vector<16x512xf32> to vector<16x128xf32>
    %cst_219 = arith.constant 5.000000e-01 : f32
    %546 = vector.broadcast %cst_219 : f32 to vector<16x128xf32>
    %547 = arith.mulf %546, %545 : vector<16x128xf32>
    %548 = math.tanh %547 : vector<16x128xf32>
    %cst_220 = arith.constant 5.000000e-01 : f32
    %549 = vector.broadcast %cst_220 : f32 to vector<16x128xf32>
    %550 = arith.mulf %549, %548 : vector<16x128xf32>
    %cst_221 = arith.constant 5.000000e-01 : f32
    %551 = vector.broadcast %cst_221 : f32 to vector<16x128xf32>
    %552 = arith.addf %550, %551 : vector<16x128xf32>
    %553 = vector.extract_strided_slice %536 {offsets = [0, 256], sizes = [16, 128], strides = [1, 1]} : vector<16x512xf32> to vector<16x128xf32>
    %554 = math.tanh %553 : vector<16x128xf32>
    %555 = vector.extract_strided_slice %536 {offsets = [0, 384], sizes = [16, 128], strides = [1, 1]} : vector<16x512xf32> to vector<16x128xf32>
    %cst_222 = arith.constant 5.000000e-01 : f32
    %556 = vector.broadcast %cst_222 : f32 to vector<16x128xf32>
    %557 = arith.mulf %556, %555 : vector<16x128xf32>
    %558 = math.tanh %557 : vector<16x128xf32>
    %cst_223 = arith.constant 5.000000e-01 : f32
    %559 = vector.broadcast %cst_223 : f32 to vector<16x128xf32>
    %560 = arith.mulf %559, %558 : vector<16x128xf32>
    %cst_224 = arith.constant 5.000000e-01 : f32
    %561 = vector.broadcast %cst_224 : f32 to vector<16x128xf32>
    %562 = arith.addf %560, %561 : vector<16x128xf32>
    %563 = arith.mulf %552, %521 : vector<16x128xf32>
    %564 = arith.mulf %544, %554 : vector<16x128xf32>
    %565 = arith.addf %563, %564 : vector<16x128xf32>
    %566 = math.tanh %565 : vector<16x128xf32>
    %567 = arith.mulf %562, %566 : vector<16x128xf32>
    %568 = arith.truncf %567 : vector<16x128xf32> to vector<16x128xbf16>
    %569 = arith.index_cast %c3_i32_212 : i32 to index
    %c0_225 = arith.constant 0 : index
    %c0_226 = arith.constant 0 : index
    %570 = vector.load %arg15[%569, %c0_225, %c0_226] : memref<8x16x128xbf16, #tpu.memory_space<vmem>>, vector<1x16x128xbf16>
    %571 = vector.shape_cast %570 : vector<1x16x128xbf16> to vector<16x128xbf16>
    %572 = vector.shape_cast %568 : vector<16x128xbf16> to vector<1x16x128xbf16>
    tpu.vector_store %arg15[%569, %c0_225, %c0_226], %572 {strides = array<i32>} : memref<8x16x128xbf16, #tpu.memory_space<vmem>>, vector<1x16x128xbf16>,
    %c4_i32_227 = arith.constant 4 : i32
    %573 = arith.index_cast %c4_i32_227 : i32 to index
    %c0_228 = arith.constant 0 : index
    %c0_229 = arith.constant 0 : index
    %574 = vector.load %arg14[%573, %c0_228, %c0_229] : memref<8x16x512xf32, #tpu.memory_space<vmem>>, vector<1x16x512xf32>
    %575 = vector.shape_cast %574 : vector<1x16x512xf32> to vector<16x512xf32>
    %576 = arith.truncf %567 : vector<16x128xf32> to vector<16x128xbf16>
    %cst_230 = arith.constant dense<0.000000e+00> : vector<16x512xf32>
    %577 = tpu.matmul %576, %385, %cst_230 {dimension_numbers = #tpu.dot_dimension_numbers<[1], [0], [0], [1], [0, 0, 1, 1], [], []>} : vector<16x128xbf16>, vector<128x512xbf16>, vector<16x512xf32> -> vector<16x512xf32>
    %578 = arith.addf %575, %577 : vector<16x512xf32>
    %579 = vector.broadcast %387 : vector<1x512xf32> to vector<16x512xf32>
    %580 = arith.addf %578, %579 : vector<16x512xf32>
    %581 = vector.extract_strided_slice %580 {offsets = [0, 0], sizes = [16, 128], strides = [1, 1]} : vector<16x512xf32> to vector<16x128xf32>
    %cst_231 = arith.constant 5.000000e-01 : f32
    %582 = vector.broadcast %cst_231 : f32 to vector<16x128xf32>
    %583 = arith.mulf %582, %581 : vector<16x128xf32>
    %584 = math.tanh %583 : vector<16x128xf32>
    %cst_232 = arith.constant 5.000000e-01 : f32
    %585 = vector.broadcast %cst_232 : f32 to vector<16x128xf32>
    %586 = arith.mulf %585, %584 : vector<16x128xf32>
    %cst_233 = arith.constant 5.000000e-01 : f32
    %587 = vector.broadcast %cst_233 : f32 to vector<16x128xf32>
    %588 = arith.addf %586, %587 : vector<16x128xf32>
    %589 = vector.extract_strided_slice %580 {offsets = [0, 128], sizes = [16, 128], strides = [1, 1]} : vector<16x512xf32> to vector<16x128xf32>
    %cst_234 = arith.constant 5.000000e-01 : f32
    %590 = vector.broadcast %cst_234 : f32 to vector<16x128xf32>
    %591 = arith.mulf %590, %589 : vector<16x128xf32>
    %592 = math.tanh %591 : vector<16x128xf32>
    %cst_235 = arith.constant 5.000000e-01 : f32
    %593 = vector.broadcast %cst_235 : f32 to vector<16x128xf32>
    %594 = arith.mulf %593, %592 : vector<16x128xf32>
    %cst_236 = arith.constant 5.000000e-01 : f32
    %595 = vector.broadcast %cst_236 : f32 to vector<16x128xf32>
    %596 = arith.addf %594, %595 : vector<16x128xf32>
    %597 = vector.extract_strided_slice %580 {offsets = [0, 256], sizes = [16, 128], strides = [1, 1]} : vector<16x512xf32> to vector<16x128xf32>
    %598 = math.tanh %597 : vector<16x128xf32>
    %599 = vector.extract_strided_slice %580 {offsets = [0, 384], sizes = [16, 128], strides = [1, 1]} : vector<16x512xf32> to vector<16x128xf32>
    %cst_237 = arith.constant 5.000000e-01 : f32
    %600 = vector.broadcast %cst_237 : f32 to vector<16x128xf32>
    %601 = arith.mulf %600, %599 : vector<16x128xf32>
    %602 = math.tanh %601 : vector<16x128xf32>
    %cst_238 = arith.constant 5.000000e-01 : f32
    %603 = vector.broadcast %cst_238 : f32 to vector<16x128xf32>
    %604 = arith.mulf %603, %602 : vector<16x128xf32>
    %cst_239 = arith.constant 5.000000e-01 : f32
    %605 = vector.broadcast %cst_239 : f32 to vector<16x128xf32>
    %606 = arith.addf %604, %605 : vector<16x128xf32>
    %607 = arith.mulf %596, %565 : vector<16x128xf32>
    %608 = arith.mulf %588, %598 : vector<16x128xf32>
    %609 = arith.addf %607, %608 : vector<16x128xf32>
    %610 = math.tanh %609 : vector<16x128xf32>
    %611 = arith.mulf %606, %610 : vector<16x128xf32>
    %612 = arith.truncf %611 : vector<16x128xf32> to vector<16x128xbf16>
    %613 = arith.index_cast %c4_i32_227 : i32 to index
    %c0_240 = arith.constant 0 : index
    %c0_241 = arith.constant 0 : index
    %614 = vector.load %arg15[%613, %c0_240, %c0_241] : memref<8x16x128xbf16, #tpu.memory_space<vmem>>, vector<1x16x128xbf16>
    %615 = vector.shape_cast %614 : vector<1x16x128xbf16> to vector<16x128xbf16>
    %616 = vector.shape_cast %612 : vector<16x128xbf16> to vector<1x16x128xbf16>
    tpu.vector_store %arg15[%613, %c0_240, %c0_241], %616 {strides = array<i32>} : memref<8x16x128xbf16, #tpu.memory_space<vmem>>, vector<1x16x128xbf16>,
    %c5_i32_242 = arith.constant 5 : i32
    %617 = arith.index_cast %c5_i32_242 : i32 to index
    %c0_243 = arith.constant 0 : index
    %c0_244 = arith.constant 0 : index
    %618 = vector.load %arg14[%617, %c0_243, %c0_244] : memref<8x16x512xf32, #tpu.memory_space<vmem>>, vector<1x16x512xf32>
    %619 = vector.shape_cast %618 : vector<1x16x512xf32> to vector<16x512xf32>
    %620 = arith.truncf %611 : vector<16x128xf32> to vector<16x128xbf16>
    %cst_245 = arith.constant dense<0.000000e+00> : vector<16x512xf32>
    %621 = tpu.matmul %620, %385, %cst_245 {dimension_numbers = #tpu.dot_dimension_numbers<[1], [0], [0], [1], [0, 0, 1, 1], [], []>} : vector<16x128xbf16>, vector<128x512xbf16>, vector<16x512xf32> -> vector<16x512xf32>
    %622 = arith.addf %619, %621 : vector<16x512xf32>
    %623 = vector.broadcast %387 : vector<1x512xf32> to vector<16x512xf32>
    %624 = arith.addf %622, %623 : vector<16x512xf32>
    %625 = vector.extract_strided_slice %624 {offsets = [0, 0], sizes = [16, 128], strides = [1, 1]} : vector<16x512xf32> to vector<16x128xf32>
    %cst_246 = arith.constant 5.000000e-01 : f32
    %626 = vector.broadcast %cst_246 : f32 to vector<16x128xf32>
    %627 = arith.mulf %626, %625 : vector<16x128xf32>
    %628 = math.tanh %627 : vector<16x128xf32>
    %cst_247 = arith.constant 5.000000e-01 : f32
    %629 = vector.broadcast %cst_247 : f32 to vector<16x128xf32>
    %630 = arith.mulf %629, %628 : vector<16x128xf32>
    %cst_248 = arith.constant 5.000000e-01 : f32
    %631 = vector.broadcast %cst_248 : f32 to vector<16x128xf32>
    %632 = arith.addf %630, %631 : vector<16x128xf32>
    %633 = vector.extract_strided_slice %624 {offsets = [0, 128], sizes = [16, 128], strides = [1, 1]} : vector<16x512xf32> to vector<16x128xf32>
    %cst_249 = arith.constant 5.000000e-01 : f32
    %634 = vector.broadcast %cst_249 : f32 to vector<16x128xf32>
    %635 = arith.mulf %634, %633 : vector<16x128xf32>
    %636 = math.tanh %635 : vector<16x128xf32>
    %cst_250 = arith.constant 5.000000e-01 : f32
    %637 = vector.broadcast %cst_250 : f32 to vector<16x128xf32>
    %638 = arith.mulf %637, %636 : vector<16x128xf32>
    %cst_251 = arith.constant 5.000000e-01 : f32
    %639 = vector.broadcast %cst_251 : f32 to vector<16x128xf32>
    %640 = arith.addf %638, %639 : vector<16x128xf32>
    %641 = vector.extract_strided_slice %624 {offsets = [0, 256], sizes = [16, 128], strides = [1, 1]} : vector<16x512xf32> to vector<16x128xf32>
    %642 = math.tanh %641 : vector<16x128xf32>
    %643 = vector.extract_strided_slice %624 {offsets = [0, 384], sizes = [16, 128], strides = [1, 1]} : vector<16x512xf32> to vector<16x128xf32>
    %cst_252 = arith.constant 5.000000e-01 : f32
    %644 = vector.broadcast %cst_252 : f32 to vector<16x128xf32>
    %645 = arith.mulf %644, %643 : vector<16x128xf32>
    %646 = math.tanh %645 : vector<16x128xf32>
    %cst_253 = arith.constant 5.000000e-01 : f32
    %647 = vector.broadcast %cst_253 : f32 to vector<16x128xf32>
    %648 = arith.mulf %647, %646 : vector<16x128xf32>
    %cst_254 = arith.constant 5.000000e-01 : f32
    %649 = vector.broadcast %cst_254 : f32 to vector<16x128xf32>
    %650 = arith.addf %648, %649 : vector<16x128xf32>
    %651 = arith.mulf %640, %609 : vector<16x128xf32>
    %652 = arith.mulf %632, %642 : vector<16x128xf32>
    %653 = arith.addf %651, %652 : vector<16x128xf32>
    %654 = math.tanh %653 : vector<16x128xf32>
    %655 = arith.mulf %650, %654 : vector<16x128xf32>
    %656 = arith.truncf %655 : vector<16x128xf32> to vector<16x128xbf16>
    %657 = arith.index_cast %c5_i32_242 : i32 to index
    %c0_255 = arith.constant 0 : index
    %c0_256 = arith.constant 0 : index
    %658 = vector.load %arg15[%657, %c0_255, %c0_256] : memref<8x16x128xbf16, #tpu.memory_space<vmem>>, vector<1x16x128xbf16>
    %659 = vector.shape_cast %658 : vector<1x16x128xbf16> to vector<16x128xbf16>
    %660 = vector.shape_cast %656 : vector<16x128xbf16> to vector<1x16x128xbf16>
    tpu.vector_store %arg15[%657, %c0_255, %c0_256], %660 {strides = array<i32>} : memref<8x16x128xbf16, #tpu.memory_space<vmem>>, vector<1x16x128xbf16>,
    %c6_i32_257 = arith.constant 6 : i32
    %661 = arith.index_cast %c6_i32_257 : i32 to index
    %c0_258 = arith.constant 0 : index
    %c0_259 = arith.constant 0 : index
    %662 = vector.load %arg14[%661, %c0_258, %c0_259] : memref<8x16x512xf32, #tpu.memory_space<vmem>>, vector<1x16x512xf32>
    %663 = vector.shape_cast %662 : vector<1x16x512xf32> to vector<16x512xf32>
    %664 = arith.truncf %655 : vector<16x128xf32> to vector<16x128xbf16>
    %cst_260 = arith.constant dense<0.000000e+00> : vector<16x512xf32>
    %665 = tpu.matmul %664, %385, %cst_260 {dimension_numbers = #tpu.dot_dimension_numbers<[1], [0], [0], [1], [0, 0, 1, 1], [], []>} : vector<16x128xbf16>, vector<128x512xbf16>, vector<16x512xf32> -> vector<16x512xf32>
    %666 = arith.addf %663, %665 : vector<16x512xf32>
    %667 = vector.broadcast %387 : vector<1x512xf32> to vector<16x512xf32>
    %668 = arith.addf %666, %667 : vector<16x512xf32>
    %669 = vector.extract_strided_slice %668 {offsets = [0, 0], sizes = [16, 128], strides = [1, 1]} : vector<16x512xf32> to vector<16x128xf32>
    %cst_261 = arith.constant 5.000000e-01 : f32
    %670 = vector.broadcast %cst_261 : f32 to vector<16x128xf32>
    %671 = arith.mulf %670, %669 : vector<16x128xf32>
    %672 = math.tanh %671 : vector<16x128xf32>
    %cst_262 = arith.constant 5.000000e-01 : f32
    %673 = vector.broadcast %cst_262 : f32 to vector<16x128xf32>
    %674 = arith.mulf %673, %672 : vector<16x128xf32>
    %cst_263 = arith.constant 5.000000e-01 : f32
    %675 = vector.broadcast %cst_263 : f32 to vector<16x128xf32>
    %676 = arith.addf %674, %675 : vector<16x128xf32>
    %677 = vector.extract_strided_slice %668 {offsets = [0, 128], sizes = [16, 128], strides = [1, 1]} : vector<16x512xf32> to vector<16x128xf32>
    %cst_264 = arith.constant 5.000000e-01 : f32
    %678 = vector.broadcast %cst_264 : f32 to vector<16x128xf32>
    %679 = arith.mulf %678, %677 : vector<16x128xf32>
    %680 = math.tanh %679 : vector<16x128xf32>
    %cst_265 = arith.constant 5.000000e-01 : f32
    %681 = vector.broadcast %cst_265 : f32 to vector<16x128xf32>
    %682 = arith.mulf %681, %680 : vector<16x128xf32>
    %cst_266 = arith.constant 5.000000e-01 : f32
    %683 = vector.broadcast %cst_266 : f32 to vector<16x128xf32>
    %684 = arith.addf %682, %683 : vector<16x128xf32>
    %685 = vector.extract_strided_slice %668 {offsets = [0, 256], sizes = [16, 128], strides = [1, 1]} : vector<16x512xf32> to vector<16x128xf32>
    %686 = math.tanh %685 : vector<16x128xf32>
    %687 = vector.extract_strided_slice %668 {offsets = [0, 384], sizes = [16, 128], strides = [1, 1]} : vector<16x512xf32> to vector<16x128xf32>
    %cst_267 = arith.constant 5.000000e-01 : f32
    %688 = vector.broadcast %cst_267 : f32 to vector<16x128xf32>
    %689 = arith.mulf %688, %687 : vector<16x128xf32>
    %690 = math.tanh %689 : vector<16x128xf32>
    %cst_268 = arith.constant 5.000000e-01 : f32
    %691 = vector.broadcast %cst_268 : f32 to vector<16x128xf32>
    %692 = arith.mulf %691, %690 : vector<16x128xf32>
    %cst_269 = arith.constant 5.000000e-01 : f32
    %693 = vector.broadcast %cst_269 : f32 to vector<16x128xf32>
    %694 = arith.addf %692, %693 : vector<16x128xf32>
    %695 = arith.mulf %684, %653 : vector<16x128xf32>
    %696 = arith.mulf %676, %686 : vector<16x128xf32>
    %697 = arith.addf %695, %696 : vector<16x128xf32>
    %698 = math.tanh %697 : vector<16x128xf32>
    %699 = arith.mulf %694, %698 : vector<16x128xf32>
    %700 = arith.truncf %699 : vector<16x128xf32> to vector<16x128xbf16>
    %701 = arith.index_cast %c6_i32_257 : i32 to index
    %c0_270 = arith.constant 0 : index
    %c0_271 = arith.constant 0 : index
    %702 = vector.load %arg15[%701, %c0_270, %c0_271] : memref<8x16x128xbf16, #tpu.memory_space<vmem>>, vector<1x16x128xbf16>
    %703 = vector.shape_cast %702 : vector<1x16x128xbf16> to vector<16x128xbf16>
    %704 = vector.shape_cast %700 : vector<16x128xbf16> to vector<1x16x128xbf16>
    tpu.vector_store %arg15[%701, %c0_270, %c0_271], %704 {strides = array<i32>} : memref<8x16x128xbf16, #tpu.memory_space<vmem>>, vector<1x16x128xbf16>,
    %c7_i32_272 = arith.constant 7 : i32
    %705 = arith.index_cast %c7_i32_272 : i32 to index
    %c0_273 = arith.constant 0 : index
    %c0_274 = arith.constant 0 : index
    %706 = vector.load %arg14[%705, %c0_273, %c0_274] : memref<8x16x512xf32, #tpu.memory_space<vmem>>, vector<1x16x512xf32>
    %707 = vector.shape_cast %706 : vector<1x16x512xf32> to vector<16x512xf32>
    %708 = arith.truncf %699 : vector<16x128xf32> to vector<16x128xbf16>
    %cst_275 = arith.constant dense<0.000000e+00> : vector<16x512xf32>
    %709 = tpu.matmul %708, %385, %cst_275 {dimension_numbers = #tpu.dot_dimension_numbers<[1], [0], [0], [1], [0, 0, 1, 1], [], []>} : vector<16x128xbf16>, vector<128x512xbf16>, vector<16x512xf32> -> vector<16x512xf32>
    %710 = arith.addf %707, %709 : vector<16x512xf32>
    %711 = vector.broadcast %387 : vector<1x512xf32> to vector<16x512xf32>
    %712 = arith.addf %710, %711 : vector<16x512xf32>
    %713 = vector.extract_strided_slice %712 {offsets = [0, 0], sizes = [16, 128], strides = [1, 1]} : vector<16x512xf32> to vector<16x128xf32>
    %cst_276 = arith.constant 5.000000e-01 : f32
    %714 = vector.broadcast %cst_276 : f32 to vector<16x128xf32>
    %715 = arith.mulf %714, %713 : vector<16x128xf32>
    %716 = math.tanh %715 : vector<16x128xf32>
    %cst_277 = arith.constant 5.000000e-01 : f32
    %717 = vector.broadcast %cst_277 : f32 to vector<16x128xf32>
    %718 = arith.mulf %717, %716 : vector<16x128xf32>
    %cst_278 = arith.constant 5.000000e-01 : f32
    %719 = vector.broadcast %cst_278 : f32 to vector<16x128xf32>
    %720 = arith.addf %718, %719 : vector<16x128xf32>
    %721 = vector.extract_strided_slice %712 {offsets = [0, 128], sizes = [16, 128], strides = [1, 1]} : vector<16x512xf32> to vector<16x128xf32>
    %cst_279 = arith.constant 5.000000e-01 : f32
    %722 = vector.broadcast %cst_279 : f32 to vector<16x128xf32>
    %723 = arith.mulf %722, %721 : vector<16x128xf32>
    %724 = math.tanh %723 : vector<16x128xf32>
    %cst_280 = arith.constant 5.000000e-01 : f32
    %725 = vector.broadcast %cst_280 : f32 to vector<16x128xf32>
    %726 = arith.mulf %725, %724 : vector<16x128xf32>
    %cst_281 = arith.constant 5.000000e-01 : f32
    %727 = vector.broadcast %cst_281 : f32 to vector<16x128xf32>
    %728 = arith.addf %726, %727 : vector<16x128xf32>
    %729 = vector.extract_strided_slice %712 {offsets = [0, 256], sizes = [16, 128], strides = [1, 1]} : vector<16x512xf32> to vector<16x128xf32>
    %730 = math.tanh %729 : vector<16x128xf32>
    %731 = vector.extract_strided_slice %712 {offsets = [0, 384], sizes = [16, 128], strides = [1, 1]} : vector<16x512xf32> to vector<16x128xf32>
    %cst_282 = arith.constant 5.000000e-01 : f32
    %732 = vector.broadcast %cst_282 : f32 to vector<16x128xf32>
    %733 = arith.mulf %732, %731 : vector<16x128xf32>
    %734 = math.tanh %733 : vector<16x128xf32>
    %cst_283 = arith.constant 5.000000e-01 : f32
    %735 = vector.broadcast %cst_283 : f32 to vector<16x128xf32>
    %736 = arith.mulf %735, %734 : vector<16x128xf32>
    %cst_284 = arith.constant 5.000000e-01 : f32
    %737 = vector.broadcast %cst_284 : f32 to vector<16x128xf32>
    %738 = arith.addf %736, %737 : vector<16x128xf32>
    %739 = arith.mulf %728, %697 : vector<16x128xf32>
    %740 = arith.mulf %720, %730 : vector<16x128xf32>
    %741 = arith.addf %739, %740 : vector<16x128xf32>
    %742 = math.tanh %741 : vector<16x128xf32>
    %743 = arith.mulf %738, %742 : vector<16x128xf32>
    %744 = arith.truncf %743 : vector<16x128xf32> to vector<16x128xbf16>
    %745 = arith.index_cast %c7_i32_272 : i32 to index
    %c0_285 = arith.constant 0 : index
    %c0_286 = arith.constant 0 : index
    %746 = vector.load %arg15[%745, %c0_285, %c0_286] : memref<8x16x128xbf16, #tpu.memory_space<vmem>>, vector<1x16x128xbf16>
    %747 = vector.shape_cast %746 : vector<1x16x128xbf16> to vector<16x128xbf16>
    %748 = vector.shape_cast %744 : vector<16x128xbf16> to vector<1x16x128xbf16>
    tpu.vector_store %arg15[%745, %c0_285, %c0_286], %748 {strides = array<i32>} : memref<8x16x128xbf16, #tpu.memory_space<vmem>>, vector<1x16x128xbf16>,
    %c8_i32_287 = arith.constant 8 : i32
    %c1_288 = arith.constant 1 : index
    %c0_289 = arith.constant 0 : index
    %c0_290 = arith.constant 0 : index
    %749 = vector.load %arg10[%c1_288, %c0_289, %c0_290] : memref<2x16x128xf32, #tpu.memory_space<vmem>>, vector<1x16x128xf32>
    %750 = vector.shape_cast %749 : vector<1x16x128xf32> to vector<16x128xf32>
    %751 = vector.shape_cast %743 : vector<16x128xf32> to vector<1x16x128xf32>
    tpu.vector_store %arg10[%c1_288, %c0_289, %c0_290], %751 {strides = array<i32>} : memref<2x16x128xf32, #tpu.memory_space<vmem>>, vector<1x16x128xf32>,
    %c1_291 = arith.constant 1 : index
    %c0_292 = arith.constant 0 : index
    %c0_293 = arith.constant 0 : index
    %752 = vector.load %arg11[%c1_291, %c0_292, %c0_293] : memref<2x16x128xf32, #tpu.memory_space<vmem>>, vector<1x16x128xf32>
    %753 = vector.shape_cast %752 : vector<1x16x128xf32> to vector<16x128xf32>
    %754 = vector.shape_cast %741 : vector<16x128xf32> to vector<1x16x128xf32>
    tpu.vector_store %arg11[%c1_291, %c0_292, %c0_293], %754 {strides = array<i32>} : memref<2x16x128xf32, #tpu.memory_space<vmem>>, vector<1x16x128xf32>,
    %c0_294 = arith.constant 0 : index
    %c0_295 = arith.constant 0 : index
    %c0_296 = arith.constant 0 : index
    %755 = vector.load %arg15[%c0_294, %c0_295, %c0_296] : memref<8x16x128xbf16, #tpu.memory_space<vmem>>, vector<8x16x128xbf16>
    %756 = vector.shape_cast %755 : vector<8x16x128xbf16> to vector<128x128xbf16>
    %cst_297 = arith.constant dense<0.000000e+00> : vector<128x128xf32>
    %757 = tpu.matmul %756, %3, %cst_297 {dimension_numbers = #tpu.dot_dimension_numbers<[1], [0], [0], [1], [0, 0, 1, 1], [], []>} : vector<128x128xbf16>, vector<128x128xbf16>, vector<128x128xf32> -> vector<128x128xf32>
    %758 = vector.broadcast %4 : vector<1x128xf32> to vector<128x128xf32>
    %759 = arith.addf %757, %758 : vector<128x128xf32>
    %760 = vector.shape_cast %759 : vector<128x128xf32> to vector<8x16x128xf32>
    %c0_298 = arith.constant 0 : index
    %c0_299 = arith.constant 0 : index
    %c0_300 = arith.constant 0 : index
    %761 = vector.load %arg9[%c0_298, %c0_299, %c0_300] : memref<8x16x128xf32, #tpu.memory_space<vmem>>, vector<8x16x128xf32>
    tpu.vector_store %arg9[%c0_298, %c0_299, %c0_300], %760 {strides = array<i32>} : memref<8x16x128xf32, #tpu.memory_space<vmem>>, vector<8x16x128xf32>,
    return
  }
  func.func @transform_0(%arg0: i32) -> (i32, i32, i32) {
    %c0_i32 = arith.constant 0 : i32
    %c0_i32_0 = arith.constant 0 : i32
    %c0_i32_1 = arith.constant 0 : i32
    return %arg0, %c0_i32, %c0_i32_0 : i32, i32, i32
  }
  func.func @transform_3(%arg0: i32) -> (i32, i32, i32) {
    %c0_i32 = arith.constant 0 : i32
    %c0_i32_0 = arith.constant 0 : i32
    %c0_i32_1 = arith.constant 0 : i32
    %c0_i32_2 = arith.constant 0 : i32
    return %c0_i32, %c0_i32_0, %c0_i32_1 : i32, i32, i32
  }
  func.func @transform_4(%arg0: i32) -> (i32, i32) {
    %c0_i32 = arith.constant 0 : i32
    %c0_i32_0 = arith.constant 0 : i32
    %c0_i32_1 = arith.constant 0 : i32
    return %c0_i32, %c0_i32_0 : i32, i32
  }
  func.func @transform_5(%arg0: i32) -> (i32, i32) {
    %c0_i32 = arith.constant 0 : i32
    %c0_i32_0 = arith.constant 0 : i32
    %c0_i32_1 = arith.constant 0 : i32
    return %c0_i32, %c0_i32_0 : i32, i32
  }
  func.func @transform_6(%arg0: i32) -> (i32, i32, i32) {
    %c0_i32 = arith.constant 0 : i32
    %c0_i32_0 = arith.constant 0 : i32
    %c0_i32_1 = arith.constant 0 : i32
    %c0_i32_2 = arith.constant 0 : i32
    return %c0_i32, %c0_i32_0, %c0_i32_1 : i32, i32, i32
  }
  func.func @transform_7(%arg0: i32) -> (i32, i32, i32) {
    %c0_i32 = arith.constant 0 : i32
    %c0_i32_0 = arith.constant 0 : i32
    %c0_i32_1 = arith.constant 0 : i32
    %c0_i32_2 = arith.constant 0 : i32
    return %c0_i32, %c0_i32_0, %c0_i32_1 : i32, i32, i32
  }
  func.func @transform_8(%arg0: i32) -> (i32, i32, i32) {
    %c0_i32 = arith.constant 0 : i32
    %c0_i32_0 = arith.constant 0 : i32
    %c0_i32_1 = arith.constant 0 : i32
    return %arg0, %c0_i32, %c0_i32_0 : i32, i32, i32
  }
  func.func @transform_9(%arg0: i32) -> (i32, i32, i32) {
    %c0_i32 = arith.constant 0 : i32
    %c0_i32_0 = arith.constant 0 : i32
    %c0_i32_1 = arith.constant 0 : i32
    %c0_i32_2 = arith.constant 0 : i32
    return %c0_i32, %c0_i32_0, %c0_i32_1 : i32, i32, i32
  }
  func.func @transform_10(%arg0: i32) -> (i32, i32, i32) {
    %c0_i32 = arith.constant 0 : i32
    %c0_i32_0 = arith.constant 0 : i32
    %c0_i32_1 = arith.constant 0 : i32
    %c0_i32_2 = arith.constant 0 : i32
    return %c0_i32, %c0_i32_0, %c0_i32_1 : i32, i32, i32
  }
}

</mosaic_0001>

<llo_original>
// kernel: tpu_custom_call.1
$region0: #{tpu_custom_call.1}
  #allocation0 [shape = 'u32[]', space=smem, size = 0x4, offset = 0x4, fixed_abs, tag = 'smem constant byte address 0x4 - core index']
  #allocation1 [shape = 'u32[144,128]{1,0:T(1,128)}', space=vmem, size = 0x12000, scoped, tag = 'internal scratch']
  #allocation2 [shape = 'bf16[2,128,512]{2,1,0:T(16,128)(2,1)}', space=vmem, size = 0x40000, scoped, tag = 'scratch operand']
  #allocation3 [shape = 'bf16[2,128,512]{2,1,0:T(16,128)(2,1)}', space=vmem, size = 0x40000, scoped, tag = 'scratch operand']
  #allocation4 [shape = 'f32[8,16,512]{2,1,0:T(8,128)}', space=vmem, size = 0x40000, scoped, tag = 'scratch operand']
  #allocation5 [shape = 'bf16[8,16,128]{2,1,0:T(16,128)(2,1)}', space=vmem, size = 0x8000, scoped, tag = 'scratch operand']
  #allocation6 [shape = 's32[4]{0}', space=sflag, size = 0x10, scoped, tag = 'scratch operand']
  #allocation19 [shape = 's32[]', space=sflag, size = 0x4, offset = 0, fixed_abs, tag = 'sflag constant byte address 0x0 - dummy sync flag']
  #allocation21 [shape = 's32[]', space=sflag, size = 0x4, offset = 0, fixed_abs, tag = 'sflag constant byte address 0x0 - dummy sync flag']
  #allocation23 [shape = 's32[]', space=sflag, size = 0x4, offset = 0, fixed_abs, tag = 'sflag constant byte address 0x0 - dummy sync flag']
  #allocation25 [shape = 's32[]', space=sflag, size = 0x4, offset = 0, fixed_abs, tag = 'sflag constant byte address 0x0 - dummy sync flag']
  %s0 = inlined_call_operand.hbm [shape: bf16[8,16,128], index: 0, kind: input, shape index: {}]
  %s1 = inlined_call_operand.hbm [shape: bf16[2,128,512], index: 1, kind: input, shape index: {}]
  %s2 = inlined_call_operand.hbm [shape: bf16[2,128,512], index: 2, kind: input, shape index: {}]
  %s3 = inlined_call_operand.vmem [shape: f32[2,1,512], index: 3, kind: input, shape index: {}]
  %s4 = inlined_call_operand.hbm [shape: bf16[128,128], index: 4, kind: input, shape index: {}]
  %s5 = inlined_call_operand.vmem [shape: f32[1,128], index: 5, kind: input, shape index: {}]
  %s6 = inlined_call_operand.hbm [shape: f32[2,16,128], index: 6, kind: input, shape index: {}]
  %s7 = inlined_call_operand.hbm [shape: f32[2,16,128], index: 7, kind: input, shape index: {}]
  %s8 = inlined_call_operand.hbm [shape: f32[8,16,128], index: 8, kind: output, shape index: {0}]
  %s9 = inlined_call_operand.hbm [shape: f32[2,16,128], index: 9, kind: output, shape index: {1}]
  %s10 = inlined_call_operand.hbm [shape: f32[2,16,128], index: 10, kind: output, shape index: {2}]
  %11 = xla_tuple %s8, %s9, %s10
  %s12 = sld [smem:[#allocation0]]
  $region78: #{tpu_custom_call.1} parent=0
    _
  %s14 = ssub.s32 1, %s12
  %s15 = scalar_select 0, %s14, %s12
  $region1: #{tpu_custom_call.1} parent=0
    #allocation7 [shape = 'u8[32768]{0}', space=vmem, size = 0x8000, scoped, tag = 'input window, operand 0, single buffered']
    #allocation8 [shape = 's32[1]{0}', space=sflag, size = 0x4, scoped, tag = 'scoped memory for tpu_custom_call.1']
    #allocation9 [shape = 's32[1]{0}', space=sflag, size = 0x4, scoped, tag = 'scoped memory for tpu_custom_call.1']
    #allocation10 [shape = 'u8[32768]{0}', space=vmem, size = 0x8000, scoped, tag = 'input window, operand 4, single buffered']
    #allocation11 [shape = 's32[1]{0}', space=sflag, size = 0x4, scoped, tag = 'scoped memory for tpu_custom_call.1']
    #allocation12 [shape = 'u8[16384]{0}', space=vmem, size = 0x4000, scoped, tag = 'input window, operand 6, single buffered']
    #allocation13 [shape = 'u8[16384]{0}', space=vmem, size = 0x4000, scoped, tag = 'input window, operand 7, single buffered']
    #allocation14 [shape = 's32[1]{0}', space=sflag, size = 0x4, scoped, tag = 'scoped memory for tpu_custom_call.1']
    #allocation15 [shape = 'u8[65536]{0}', space=vmem, size = 0x10000, scoped, tag = 'output window, operand 0, single buffered']
    #allocation16 [shape = 'u8[16384]{0}', space=vmem, size = 0x4000, scoped, tag = 'output window, operand 1, single buffered']
    #allocation17 [shape = 's32[1]{0}', space=sflag, size = 0x4, scoped, tag = 'scoped memory for tpu_custom_call.1']
    #allocation18 [shape = 'u8[16384]{0}', space=vmem, size = 0x4000, scoped, tag = 'output window, operand 2, single buffered']
    %16 = vsyncpa [#allocation8], 0
    %17 = vsyncpa [#allocation11], 0
    %18 = vsyncpa [#allocation14], 0
    %19 = vsyncpa [#allocation9], 0
    %20 = vsyncpa [#allocation17], 0
    // Predicated region
    $region2: #{tpu_custom_call.1} parent=1 // pred_check
      _
    $region3: #{tpu_custom_call.1} parent=1 // pred_check_branch
      %22 = sbr.rel (0) target = $region5
    $region4: #{tpu_custom_call.1} parent=1 // pred_region
      %s24 = ssub.s32 1024, 1024
      %25 = vsyncadd [#allocation8], %s24
      %s26 = sshll.u32 [#allocation7], 4
      %s27 = int_to_ptr.vmem [resolvable:$true] %s26
      %32 = dma.hbm_to_vmem [thread:$0]  %s0, 1024, %s27, [#allocation8], 64, 64, 4
    $region5: #{tpu_custom_call.1} parent=1 // pred_fallthru
      _
    // Predicated region
    $region6: #{tpu_custom_call.1} parent=1 // pred_check
      _
    $region7: #{tpu_custom_call.1} parent=1 // pred_check_branch
      %34 = sbr.rel (0) target = $region9
    $region8: #{tpu_custom_call.1} parent=1 // pred_region
      _
    $region9: #{tpu_custom_call.1} parent=1 // pred_fallthru
      _
    // Predicated region
    $region10: #{tpu_custom_call.1} parent=1 // pred_check
      _
    $region11: #{tpu_custom_call.1} parent=1 // pred_check_branch
      %36 = sbr.rel (0) target = $region13
    $region12: #{tpu_custom_call.1} parent=1 // pred_region
      %s38 = ssub.s32 1024, 1024
      %39 = vsyncadd [#allocation11], %s38
      %s40 = sshll.u32 [#allocation10], 4
      %s41 = int_to_ptr.vmem [resolvable:$true] %s40
      %46 = dma.hbm_to_vmem [thread:$0]  %s4, 1024, %s41, [#allocation11], 64, 64, 4
    $region13: #{tpu_custom_call.1} parent=1 // pred_fallthru
      _
    // Predicated region
    $region14: #{tpu_custom_call.1} parent=1 // pred_check
      _
    $region15: #{tpu_custom_call.1} parent=1 // pred_check_branch
      %48 = sbr.rel (0) target = $region17
    $region16: #{tpu_custom_call.1} parent=1 // pred_region
      _
    $region17: #{tpu_custom_call.1} parent=1 // pred_fallthru
      _
    // Predicated region
    $region18: #{tpu_custom_call.1} parent=1 // pred_check
      _
    $region19: #{tpu_custom_call.1} parent=1 // pred_check_branch
      %50 = sbr.rel (0) target = $region21
    $region20: #{tpu_custom_call.1} parent=1 // pred_region
      %s52 = ssub.s32 512, 512
      %53 = vsyncadd [#allocation11], %s52
      %s54 = sshll.u32 [#allocation12], 4
      %s55 = int_to_ptr.vmem [resolvable:$true] %s54
      %60 = dma.hbm_to_vmem [thread:$0]  %s6, 512, %s55, [#allocation11], 128, 128, 8
    $region21: #{tpu_custom_call.1} parent=1 // pred_fallthru
      _
    // Predicated region
    $region22: #{tpu_custom_call.1} parent=1 // pred_check
      _
    $region23: #{tpu_custom_call.1} parent=1 // pred_check_branch
      %62 = sbr.rel (0) target = $region25
    $region24: #{tpu_custom_call.1} parent=1 // pred_region
      %s64 = ssub.s32 512, 512
      %65 = vsyncadd [#allocation14], %s64
      %s66 = sshll.u32 [#allocation13], 4
      %s67 = int_to_ptr.vmem [resolvable:$true] %s66
      %72 = dma.hbm_to_vmem [thread:$0]  %s7, 512, %s67, [#allocation14], 128, 128, 8
    $region25: #{tpu_custom_call.1} parent=1 // pred_fallthru
      _
    // Predicated region
    $region26: #{tpu_custom_call.1} parent=1 // pred_check
      _
    $region27: #{tpu_custom_call.1} parent=1 // pred_check_branch
      %74 = sbr.rel (0) target = $region29
    $region28: #{tpu_custom_call.1} parent=1 // pred_region
      %75 = dma.done [#allocation8], 1024
    $region29: #{tpu_custom_call.1} parent=1 // pred_fallthru
      _
    // Predicated region
    $region30: #{tpu_custom_call.1} parent=1 // pred_check
      _
    $region31: #{tpu_custom_call.1} parent=1 // pred_check_branch
      %77 = sbr.rel (0) target = $region33
    $region32: #{tpu_custom_call.1} parent=1 // pred_region
      %78 = dma.done [#allocation11], 1024
    $region33: #{tpu_custom_call.1} parent=1 // pred_fallthru
      _
    // Predicated region
    $region34: #{tpu_custom_call.1} parent=1 // pred_check
      _
    $region35: #{tpu_custom_call.1} parent=1 // pred_check_branch
      %80 = sbr.rel (0) target = $region37
    $region36: #{tpu_custom_call.1} parent=1 // pred_region
      %81 = dma.done [#allocation11], 512
    $region37: #{tpu_custom_call.1} parent=1 // pred_fallthru
      _
    // Predicated region
    $region38: #{tpu_custom_call.1} parent=1 // pred_check
      _
    $region39: #{tpu_custom_call.1} parent=1 // pred_check_branch
      %83 = sbr.rel (0) target = $region41
    $region40: #{tpu_custom_call.1} parent=1 // pred_region
      %84 = dma.done [#allocation14], 512
    $region41: #{tpu_custom_call.1} parent=1 // pred_fallthru
      _
    %p86 = scmp.eq.s32.totalorder 0, 0
    // Predicated region
    $region42: #{tpu_custom_call.1} parent=1 // pred_check
      %p87 = pneg %p86
    $region43: #{tpu_custom_call.1} parent=1 // pred_check_branch
      %89 = sbr.rel (%p87) target = $region45
    $region44: #{tpu_custom_call.1} parent=1 // pred_region
      #allocation20 [shape = 'u32[9]{0}', space=smem, size = 0x24, scoped, tag = 'DMA stride descriptor']
      #allocation22 [shape = 'u32[9]{0}', space=smem, size = 0x24, scoped, tag = 'DMA stride descriptor']
      #allocation24 [shape = 'u32[9]{0}', space=smem, size = 0x24, scoped, tag = 'DMA stride descriptor']
      #allocation26 [shape = 'u32[9]{0}', space=smem, size = 0x24, scoped, tag = 'DMA stride descriptor']
      %s91 = sshll.u32 1, 14
      %s92 = sxor.u32 4294967295, %s91
      %s94 = sld [smem:[#allocation0]]
      %s95 = sadd.s32 2, %s94
      %s97 = sshll.u32 7, 26
      %s98 = sxor.u32 4294967295, %s97
      %s99 = sand.u32 0, %s98
      %s100 = sshll.u32 %s95, 26
      %s101 = sor.u32 %s99, %s100
      %s102 = sshll.u32 [#allocation2], 4
      %s103 = int_to_ptr.vmem [resolvable:$true] %s102
      %106 = sst [smem:[#allocation20]] 512
      %s107 = scalar_lea.smem [#allocation20], 1
      %108 = sst [smem:[%s107]] 512
      %s109 = scalar_lea.smem [#allocation20], 2
      %110 = sst [smem:[%s109]] 4
      %s111 = scalar_lea.smem [#allocation20], 3
      %112 = sst [smem:[%s111]] 64
      %s113 = scalar_lea.smem [#allocation20], 4
      %114 = sst [smem:[%s113]] 128
      %s115 = scalar_lea.smem [#allocation20], 5
      %116 = sst [smem:[%s115]] 2
      %s117 = scalar_lea.smem [#allocation20], 6
      %118 = sst [smem:[%s117]] 256
      %s119 = scalar_lea.smem [#allocation20], 7
      %120 = sst [smem:[%s119]] 64
      %s121 = scalar_lea.smem [#allocation20], 8
      %122 = sst [smem:[%s121]] 4
      %124 = dma.general %s1, 4096, %s103, [#allocation6], [#allocation19], [#allocation20], %s101, 0
      %s125 = scalar_lea.sflag [#allocation6], 2
      %s127 = sshll.u32 1, 14
      %s128 = sxor.u32 4294967295, %s127
      %s130 = sadd.s32 2, %s94
      %s132 = sshll.u32 7, 26
      %s133 = sxor.u32 4294967295, %s132
      %s134 = sand.u32 0, %s133
      %s135 = sshll.u32 %s130, 26
      %s136 = sor.u32 %s134, %s135
      %s137 = sshll.u32 [#allocation3], 4
      %s138 = int_to_ptr.vmem [resolvable:$true] %s137
      %141 = sst [smem:[#allocation22]] 512
      %s142 = scalar_lea.smem [#allocation22], 1
      %143 = sst [smem:[%s142]] 512
      %s144 = scalar_lea.smem [#allocation22], 2
      %145 = sst [smem:[%s144]] 4
      %s146 = scalar_lea.smem [#allocation22], 3
      %147 = sst [smem:[%s146]] 64
      %s148 = scalar_lea.smem [#allocation22], 4
      %149 = sst [smem:[%s148]] 128
      %s150 = scalar_lea.smem [#allocation22], 5
      %151 = sst [smem:[%s150]] 2
      %s152 = scalar_lea.smem [#allocation22], 6
      %153 = sst [smem:[%s152]] 256
      %s154 = scalar_lea.smem [#allocation22], 7
      %155 = sst [smem:[%s154]] 64
      %s156 = scalar_lea.smem [#allocation22], 8
      %157 = sst [smem:[%s156]] 4
      %159 = dma.general %s2, 4096, %s138, %s125, [#allocation21], [#allocation22], %s136, 0
      %s160 = scalar_lea.hbm %s1, 4096
      %s161 = scalar_lea.vmem [#allocation2], 256
      %s162 = scalar_lea.sflag [#allocation6], 1
      %s164 = sshll.u32 1, 14
      %s165 = sxor.u32 4294967295, %s164
      %s167 = sadd.s32 2, %s94
      %s169 = sshll.u32 7, 26
      %s170 = sxor.u32 4294967295, %s169
      %s171 = sand.u32 0, %s170
      %s172 = sshll.u32 %s167, 26
      %s173 = sor.u32 %s171, %s172
      %s174 = sshll.u32 %s161, 4
      %s175 = int_to_ptr.vmem [resolvable:$true] %s174
      %178 = sst [smem:[#allocation24]] 512
      %s179 = scalar_lea.smem [#allocation24], 1
      %180 = sst [smem:[%s179]] 512
      %s181 = scalar_lea.smem [#allocation24], 2
      %182 = sst [smem:[%s181]] 4
      %s183 = scalar_lea.smem [#allocation24], 3
      %184 = sst [smem:[%s183]] 64
      %s185 = scalar_lea.smem [#allocation24], 4
      %186 = sst [smem:[%s185]] 128
      %s187 = scalar_lea.smem [#allocation24], 5
      %188 = sst [smem:[%s187]] 2
      %s189 = scalar_lea.smem [#allocation24], 6
      %190 = sst [smem:[%s189]] 256
      %s191 = scalar_lea.smem [#allocation24], 7
      %192 = sst [smem:[%s191]] 64
      %s193 = scalar_lea.smem [#allocation24], 8
      %194 = sst [smem:[%s193]] 4
      %196 = dma.general %s160, 4096, %s175, %s162, [#allocation23], [#allocation24], %s173, 0
      %s197 = scalar_lea.hbm %s2, 4096
      %s198 = scalar_lea.vmem [#allocation3], 256
      %s199 = scalar_lea.sflag [#allocation6], 3
      %s201 = sshll.u32 1, 14
      %s202 = sxor.u32 4294967295, %s201
      %s204 = sadd.s32 2, %s94
      %s206 = sshll.u32 7, 26
      %s207 = sxor.u32 4294967295, %s206
      %s208 = sand.u32 0, %s207
      %s209 = sshll.u32 %s204, 26
      %s210 = sor.u32 %s208, %s209
      %s211 = sshll.u32 %s198, 4
      %s212 = int_to_ptr.vmem [resolvable:$true] %s211
      %215 = sst [smem:[#allocation26]] 512
      %s216 = scalar_lea.smem [#allocation26], 1
      %217 = sst [smem:[%s216]] 512
      %s218 = scalar_lea.smem [#allocation26], 2
      %219 = sst [smem:[%s218]] 4
      %s220 = scalar_lea.smem [#allocation26], 3
      %221 = sst [smem:[%s220]] 64
      %s222 = scalar_lea.smem [#allocation26], 4
      %223 = sst [smem:[%s222]] 128
      %s224 = scalar_lea.smem [#allocation26], 5
      %225 = sst [smem:[%s224]] 2
      %s226 = scalar_lea.smem [#allocation26], 6
      %227 = sst [smem:[%s226]] 256
      %s228 = scalar_lea.smem [#allocation26], 7
      %229 = sst [smem:[%s228]] 64
      %s230 = scalar_lea.smem [#allocation26], 8
      %231 = sst [smem:[%s230]] 4
      %233 = dma.general %s197, 4096, %s212, %s199, [#allocation25], [#allocation26], %s210, 0
      %v234 = vld [vmem:[#allocation12] sm:$0xff]
      %v235 = vld [vmem:[#allocation12 + $0x8] sm:$0xff]
      %v236 = vld [vmem:[#allocation12 + $0x10] sm:$0xff]
      %v237 = vld [vmem:[#allocation12 + $0x18] sm:$0xff]
      %238 = vst [vmem:[#allocation16] sm:$0xff] %v234
      %239 = vst [vmem:[#allocation16 + $0x8] sm:$0xff] %v235
      %240 = vst [vmem:[#allocation16 + $0x10] sm:$0xff] %v236
      %241 = vst [vmem:[#allocation16 + $0x18] sm:$0xff] %v237
      %v242 = vld [vmem:[#allocation13] sm:$0xff]
      %v243 = vld [vmem:[#allocation13 + $0x8] sm:$0xff]
      %v244 = vld [vmem:[#allocation13 + $0x10] sm:$0xff]
      %v245 = vld [vmem:[#allocation13 + $0x18] sm:$0xff]
      %246 = vst [vmem:[#allocation18] sm:$0xff] %v242
      %247 = vst [vmem:[#allocation18 + $0x8] sm:$0xff] %v243
      %248 = vst [vmem:[#allocation18 + $0x10] sm:$0xff] %v244
      %249 = vst [vmem:[#allocation18 + $0x18] sm:$0xff] %v245
    $region45: #{tpu_custom_call.1} parent=1 // pred_fallthru
      _
    %v250 = vld [vmem:[#allocation10] sm:$0xf]
    %v251 = vld [vmem:[#allocation10 + $0x4] sm:$0xf]
    %v252 = vld [vmem:[#allocation10 + $0x8] sm:$0xf]
    %v253 = vld [vmem:[#allocation10 + $0xc] sm:$0xf]
    %v254 = vld [vmem:[#allocation10 + $0x10] sm:$0xf]
    %v255 = vld [vmem:[#allocation10 + $0x14] sm:$0xf]
    %v256 = vld [vmem:[#allocation10 + $0x18] sm:$0xf]
    %v257 = vld [vmem:[#allocation10 + $0x1c] sm:$0xf]
    %v258 = vld [vmem:[#allocation10 + $0x20] sm:$0xf]
    %v259 = vld [vmem:[#allocation10 + $0x24] sm:$0xf]
    %v260 = vld [vmem:[#allocation10 + $0x28] sm:$0xf]
    %v261 = vld [vmem:[#allocation10 + $0x2c] sm:$0xf]
    %v262 = vld [vmem:[#allocation10 + $0x30] sm:$0xf]
    %v263 = vld [vmem:[#allocation10 + $0x34] sm:$0xf]
    %v264 = vld [vmem:[#allocation10 + $0x38] sm:$0xf]
    %v265 = vld [vmem:[#allocation10 + $0x3c] sm:$0xf]
    %v266 = vld [vmem:[%s5] sm:$0x1]
    // Predicated region
    $region46: #{tpu_custom_call.1} parent=1 // pred_check
      %p267 = pneg %p86
    $region47: #{tpu_custom_call.1} parent=1 // pred_check_branch
      %269 = sbr.rel (%p267) target = $region49
    $region48: #{tpu_custom_call.1} parent=1 // pred_region
      %s270 = smul.u32 4, 16
      %s271 = smul.u32 %s270, 4
      %s272 = sshll.u32 %s271, 4
      %273 = dma.done [#allocation6], %s272
      %s274 = scalar_lea.sflag [#allocation6], 2
      %s275 = sshll.u32 %s271, 4
      %276 = dma.done %s274, %s275
    $region49: #{tpu_custom_call.1} parent=1 // pred_fallthru
      _
    %v277 = vld [vmem:[#allocation2] sm:$0xff]
    %v278 = vld [vmem:[#allocation2 + $0x8] sm:$0xff]
    %v279 = vld [vmem:[#allocation2 + $0x10] sm:$0xff]
    %v280 = vld [vmem:[#allocation2 + $0x18] sm:$0xff]
    %v281 = vld [vmem:[#allocation2 + $0x20] sm:$0xff]
    %v282 = vld [vmem:[#allocation2 + $0x28] sm:$0xff]
    %v283 = vld [vmem:[#allocation2 + $0x30] sm:$0xff]
    %v284 = vld [vmem:[#allocation2 + $0x38] sm:$0xff]
    %v285 = vld [vmem:[#allocation2 + $0x40] sm:$0xff]
    %v286 = vld [vmem:[#allocation2 + $0x48] sm:$0xff]
    %v287 = vld [vmem:[#allocation2 + $0x50] sm:$0xff]
    %v288 = vld [vmem:[#allocation2 + $0x58] sm:$0xff]
    %v289 = vld [vmem:[#allocation2 + $0x60] sm:$0xff]
    %v290 = vld [vmem:[#allocation2 + $0x68] sm:$0xff]
    %v291 = vld [vmem:[#allocation2 + $0x70] sm:$0xff]
    %v292 = vld [vmem:[#allocation2 + $0x78] sm:$0xff]
    %v293 = vld [vmem:[#allocation2 + $0x80] sm:$0xff]
    %v294 = vld [vmem:[#allocation2 + $0x88] sm:$0xff]
    %v295 = vld [vmem:[#allocation2 + $0x90] sm:$0xff]
    %v296 = vld [vmem:[#allocation2 + $0x98] sm:$0xff]
    %v297 = vld [vmem:[#allocation2 + $0xa0] sm:$0xff]
    %v298 = vld [vmem:[#allocation2 + $0xa8] sm:$0xff]
    %v299 = vld [vmem:[#allocation2 + $0xb0] sm:$0xff]
    %v300 = vld [vmem:[#allocation2 + $0xb8] sm:$0xff]
    %v301 = vld [vmem:[#allocation2 + $0xc0] sm:$0xff]
    %v302 = vld [vmem:[#allocation2 + $0xc8] sm:$0xff]
    %v303 = vld [vmem:[#allocation2 + $0xd0] sm:$0xff]
    %v304 = vld [vmem:[#allocation2 + $0xd8] sm:$0xff]
    %v305 = vld [vmem:[#allocation2 + $0xe0] sm:$0xff]
    %v306 = vld [vmem:[#allocation2 + $0xe8] sm:$0xff]
    %v307 = vld [vmem:[#allocation2 + $0xf0] sm:$0xff]
    %v308 = vld [vmem:[#allocation2 + $0xf8] sm:$0xff]
    %v309 = vld [vmem:[#allocation3] sm:$0xff]
    %v310 = vld [vmem:[#allocation3 + $0x8] sm:$0xff]
    %v311 = vld [vmem:[#allocation3 + $0x10] sm:$0xff]
    %v312 = vld [vmem:[#allocation3 + $0x18] sm:$0xff]
    %v313 = vld [vmem:[#allocation3 + $0x20] sm:$0xff]
    %v314 = vld [vmem:[#allocation3 + $0x28] sm:$0xff]
    %v315 = vld [vmem:[#allocation3 + $0x30] sm:$0xff]
    %v316 = vld [vmem:[#allocation3 + $0x38] sm:$0xff]
    %v317 = vld [vmem:[#allocation3 + $0x40] sm:$0xff]
    %v318 = vld [vmem:[#allocation3 + $0x48] sm:$0xff]
    %v319 = vld [vmem:[#allocation3 + $0x50] sm:$0xff]
    %v320 = vld [vmem:[#allocation3 + $0x58] sm:$0xff]
    %v321 = vld [vmem:[#allocation3 + $0x60] sm:$0xff]
    %v322 = vld [vmem:[#allocation3 + $0x68] sm:$0xff]
    %v323 = vld [vmem:[#allocation3 + $0x70] sm:$0xff]
    %v324 = vld [vmem:[#allocation3 + $0x78] sm:$0xff]
    %v325 = vld [vmem:[#allocation3 + $0x80] sm:$0xff]
    %v326 = vld [vmem:[#allocation3 + $0x88] sm:$0xff]
    %v327 = vld [vmem:[#allocation3 + $0x90] sm:$0xff]
    %v328 = vld [vmem:[#allocation3 + $0x98] sm:$0xff]
    %v329 = vld [vmem:[#allocation3 + $0xa0] sm:$0xff]
    %v330 = vld [vmem:[#allocation3 + $0xa8] sm:$0xff]
    %v331 = vld [vmem:[#allocation3 + $0xb0] sm:$0xff]
    %v332 = vld [vmem:[#allocation3 + $0xb8] sm:$0xff]
    %v333 = vld [vmem:[#allocation3 + $0xc0] sm:$0xff]
    %v334 = vld [vmem:[#allocation3 + $0xc8] sm:$0xff]
    %v335 = vld [vmem:[#allocation3 + $0xd0] sm:$0xff]
    %v336 = vld [vmem:[#allocation3 + $0xd8] sm:$0xff]
    %v337 = vld [vmem:[#allocation3 + $0xe0] sm:$0xff]
    %v338 = vld [vmem:[#allocation3 + $0xe8] sm:$0xff]
    %v339 = vld [vmem:[#allocation3 + $0xf0] sm:$0xff]
    %v340 = vld [vmem:[#allocation3 + $0xf8] sm:$0xff]
    %v341 = vld [vmem:[%s3] sm:$0xf]
    %v342 = vld [vmem:[#allocation7] sm:$0xf]
    %v343 = vld [vmem:[#allocation7 + $0x4] sm:$0xf]
    %v344 = vld [vmem:[#allocation7 + $0x8] sm:$0xf]
    %v345 = vld [vmem:[#allocation7 + $0xc] sm:$0xf]
    %v346 = vld [vmem:[#allocation7 + $0x10] sm:$0xf]
    %v347 = vld [vmem:[#allocation7 + $0x14] sm:$0xf]
    %v348 = vld [vmem:[#allocation7 + $0x18] sm:$0xf]
    %v349 = vld [vmem:[#allocation7 + $0x1c] sm:$0xf]
    %v350 = vld [vmem:[#allocation7 + $0x20] sm:$0xf]
    %v351 = vld [vmem:[#allocation7 + $0x24] sm:$0xf]
    %v352 = vld [vmem:[#allocation7 + $0x28] sm:$0xf]
    %v353 = vld [vmem:[#allocation7 + $0x2c] sm:$0xf]
    %v354 = vld [vmem:[#allocation7 + $0x30] sm:$0xf]
    %v355 = vld [vmem:[#allocation7 + $0x34] sm:$0xf]
    %v356 = vld [vmem:[#allocation7 + $0x38] sm:$0xf]
    %v357 = vld [vmem:[#allocation7 + $0x3c] sm:$0xf]
    %v374 = vunpack.c.l.b16 %v342
    %v375 = vunpack.c.l.b16 %v343
    %v376 = vunpack.c.l.b16 %v344
    %v377 = vunpack.c.l.b16 %v345
    %v378 = vunpack.c.l.b16 %v346
    %v379 = vunpack.c.l.b16 %v347
    %v380 = vunpack.c.l.b16 %v348
    %v381 = vunpack.c.l.b16 %v349
    %v382 = vunpack.c.l.b16 %v350
    %v383 = vunpack.c.l.b16 %v351
    %v384 = vunpack.c.l.b16 %v352
    %v385 = vunpack.c.l.b16 %v353
    %v386 = vunpack.c.l.b16 %v354
    %v387 = vunpack.c.l.b16 %v355
    %v388 = vunpack.c.l.b16 %v356
    %v389 = vunpack.c.l.b16 %v357
    %v390 = vpack.c.b16 %v375, %v374
    %v391 = vpack.c.b16 %v377, %v376
    %v392 = vpack.c.b16 %v379, %v378
    %v393 = vpack.c.b16 %v381, %v380
    %v394 = vpack.c.b16 %v383, %v382
    %v395 = vpack.c.b16 %v385, %v384
    %v396 = vpack.c.b16 %v387, %v386
    %v397 = vpack.c.b16 %v389, %v388
    %406 = vmatprep.subr.bf16.mxu0 %v278
    %407 = vmatpush1.bf16.msra.mxu0 %v277
    %408 = vmatprep.subr.bf16.mxu0 %v282
    %409 = vmatpush1.bf16.msra.mxu0 %v281
    %410 = vmatprep.subr.bf16.mxu0 %v286
    %411 = vmatpush1.bf16.msra.mxu0 %v285
    %412 = vmatprep.subr.bf16.mxu0 %v290
    %413 = vmatpush1.bf16.msra.mxu0 %v289
    %414 = vmatprep.subr.bf16.mxu0 %v294
    %415 = vmatpush1.bf16.msra.mxu0 %v293
    %416 = vmatprep.subr.bf16.mxu0 %v298
    %417 = vmatpush1.bf16.msra.mxu0 %v297
    %418 = vmatprep.subr.bf16.mxu0 %v302
    %419 = vmatpush1.bf16.msra.mxu0 %v301
    %420 = vmatprep.subr.bf16.mxu0 %v306
    %421 = vmatpush1.bf16.msra.mxu0 %v305
    %422 = vmatprep.subr.bf16.mxu0 0
    %423 = vmatpush1.bf16.msra.mxu0 0
    %424 = vmatprep.subr.bf16.mxu0 0
    %425 = vmatpush1.bf16.msra.mxu0 0
    %426 = vmatprep.subr.bf16.mxu0 0
    %427 = vmatpush1.bf16.msra.mxu0 0
    %428 = vmatprep.subr.bf16.mxu0 0
    %429 = vmatpush1.bf16.msra.mxu0 0
    %430 = vmatprep.subr.bf16.mxu0 0
    %431 = vmatpush1.bf16.msra.mxu0 0
    %432 = vmatprep.subr.bf16.mxu0 0
    %433 = vmatpush1.bf16.msra.mxu0 0
    %434 = vmatprep.subr.bf16.mxu0 0
    %435 = vmatpush1.bf16.msra.mxu0 0
    %436 = vmatprep.subr.bf16.mxu0 0
    %437 = vmatpush1.bf16.msra.mxu0 0
    %438 = vmatprep.mubr.bf16.mxu0 0
    %439 = vmatmul.mubr.bf16.gmra.mrb[0].mxu0 %v390
    %v440 = vpop.f32.mrb[0].mxu0
    %v441 = vadd.f32 0.0, %v440
    %v442 = vpop.f32.mrb[0].mxu0
    %v443 = vadd.f32 0.0, %v442
    %v444 = vpop.f32.mrb[0].mxu0
    %v445 = vadd.f32 0.0, %v444
    %v446 = vpop.f32.mrb[0].mxu0
    %v447 = vadd.f32 0.0, %v446
    %448 = vmatprep.mubr.bf16.mxu0 0
    %449 = vmatmul.mubr.bf16.gmra.mrb[0].mxu0 %v391
    %v450 = vpop.f32.mrb[0].mxu0
    %v451 = vadd.f32 0.0, %v450
    %v452 = vpop.f32.mrb[0].mxu0
    %v453 = vadd.f32 0.0, %v452
    %v454 = vpop.f32.mrb[0].mxu0
    %v455 = vadd.f32 0.0, %v454
    %v456 = vpop.f32.mrb[0].mxu0
    %v457 = vadd.f32 0.0, %v456
    %458 = vmatprep.mubr.bf16.mxu0 0
    %459 = vmatmul.mubr.bf16.gmra.mrb[0].mxu0 %v392
    %v460 = vpop.f32.mrb[0].mxu0
    %v461 = vadd.f32 0.0, %v460
    %v462 = vpop.f32.mrb[0].mxu0
    %v463 = vadd.f32 0.0, %v462
    %v464 = vpop.f32.mrb[0].mxu0
    %v465 = vadd.f32 0.0, %v464
    %v466 = vpop.f32.mrb[0].mxu0
    %v467 = vadd.f32 0.0, %v466
    %468 = vmatprep.mubr.bf16.mxu0 0
    %469 = vmatmul.mubr.bf16.gmra.mrb[0].mxu0 %v393
    %v470 = vpop.f32.mrb[0].mxu0
    %v471 = vadd.f32 0.0, %v470
    %v472 = vpop.f32.mrb[0].mxu0
    %v473 = vadd.f32 0.0, %v472
    %v474 = vpop.f32.mrb[0].mxu0
    %v475 = vadd.f32 0.0, %v474
    %v476 = vpop.f32.mrb[0].mxu0
    %v477 = vadd.f32 0.0, %v476
    %478 = vmatprep.mubr.bf16.mxu0 0
    %479 = vmatmul.mubr.bf16.gmra.mrb[0].mxu0 %v394
    %v480 = vpop.f32.mrb[0].mxu0
    %v481 = vadd.f32 0.0, %v480
    %v482 = vpop.f32.mrb[0].mxu0
    %v483 = vadd.f32 0.0, %v482
    %v484 = vpop.f32.mrb[0].mxu0
    %v485 = vadd.f32 0.0, %v484
    %v486 = vpop.f32.mrb[0].mxu0
    %v487 = vadd.f32 0.0, %v486
    %488 = vmatprep.mubr.bf16.mxu0 0
    %489 = vmatmul.mubr.bf16.gmra.mrb[0].mxu0 %v395
    %v490 = vpop.f32.mrb[0].mxu0
    %v491 = vadd.f32 0.0, %v490
    %v492 = vpop.f32.mrb[0].mxu0
    %v493 = vadd.f32 0.0, %v492
    %v494 = vpop.f32.mrb[0].mxu0
    %v495 = vadd.f32 0.0, %v494
    %v496 = vpop.f32.mrb[0].mxu0
    %v497 = vadd.f32 0.0, %v496
    %498 = vmatprep.mubr.bf16.mxu0 0
    %499 = vmatmul.mubr.bf16.gmra.mrb[0].mxu0 %v396
    %v500 = vpop.f32.mrb[0].mxu0
    %v501 = vadd.f32 0.0, %v500
    %v502 = vpop.f32.mrb[0].mxu0
    %v503 = vadd.f32 0.0, %v502
    %v504 = vpop.f32.mrb[0].mxu0
    %v505 = vadd.f32 0.0, %v504
    %v506 = vpop.f32.mrb[0].mxu0
    %v507 = vadd.f32 0.0, %v506
    %508 = vmatprep.mubr.bf16.mxu0 0
    %509 = vmatmul.mubr.bf16.gmra.mrb[0].mxu0 %v397
    %v510 = vpop.f32.mrb[0].mxu0
    %v511 = vadd.f32 0.0, %v510
    %v512 = vpop.f32.mrb[0].mxu0
    %v513 = vadd.f32 0.0, %v512
    %v514 = vpop.f32.mrb[0].mxu0
    %v515 = vadd.f32 0.0, %v514
    %v516 = vpop.f32.mrb[0].mxu0
    %v517 = vadd.f32 0.0, %v516
    %518 = vdwg.mxu0
    %519 = vmatprep.subr.bf16.mxu0 %v280
    %520 = vmatpush1.bf16.msra.mxu0 %v279
    %521 = vmatprep.subr.bf16.mxu0 %v284
    %522 = vmatpush1.bf16.msra.mxu0 %v283
    %523 = vmatprep.subr.bf16.mxu0 %v288
    %524 = vmatpush1.bf16.msra.mxu0 %v287
    %525 = vmatprep.subr.bf16.mxu0 %v292
    %526 = vmatpush1.bf16.msra.mxu0 %v291
    %527 = vmatprep.subr.bf16.mxu0 %v296
    %528 = vmatpush1.bf16.msra.mxu0 %v295
    %529 = vmatprep.subr.bf16.mxu0 %v300
    %530 = vmatpush1.bf16.msra.mxu0 %v299
    %531 = vmatprep.subr.bf16.mxu0 %v304
    %532 = vmatpush1.bf16.msra.mxu0 %v303
    %533 = vmatprep.subr.bf16.mxu0 %v308
    %534 = vmatpush1.bf16.msra.mxu0 %v307
    %535 = vmatprep.subr.bf16.mxu0 0
    %536 = vmatpush1.bf16.msra.mxu0 0
    %537 = vmatprep.subr.bf16.mxu0 0
    %538 = vmatpush1.bf16.msra.mxu0 0
    %539 = vmatprep.subr.bf16.mxu0 0
    %540 = vmatpush1.bf16.msra.mxu0 0
    %541 = vmatprep.subr.bf16.mxu0 0
    %542 = vmatpush1.bf16.msra.mxu0 0
    %543 = vmatprep.subr.bf16.mxu0 0
    %544 = vmatpush1.bf16.msra.mxu0 0
    %545 = vmatprep.subr.bf16.mxu0 0
    %546 = vmatpush1.bf16.msra.mxu0 0
    %547 = vmatprep.subr.bf16.mxu0 0
    %548 = vmatpush1.bf16.msra.mxu0 0
    %549 = vmatprep.subr.bf16.mxu0 0
    %550 = vmatpush1.bf16.msra.mxu0 0
    %551 = vmatprep.mubr.bf16.mxu0 0
    %552 = vmatmul.mubr.bf16.gmra.mrb[0].mxu0 %v390
    %v553 = vpop.f32.mrb[0].mxu0
    %v554 = vadd.f32 0.0, %v553
    %v555 = vpop.f32.mrb[0].mxu0
    %v556 = vadd.f32 0.0, %v555
    %v557 = vpop.f32.mrb[0].mxu0
    %v558 = vadd.f32 0.0, %v557
    %v559 = vpop.f32.mrb[0].mxu0
    %v560 = vadd.f32 0.0, %v559
    %561 = vmatprep.mubr.bf16.mxu0 0
    %562 = vmatmul.mubr.bf16.gmra.mrb[0].mxu0 %v391
    %v563 = vpop.f32.mrb[0].mxu0
    %v564 = vadd.f32 0.0, %v563
    %v565 = vpop.f32.mrb[0].mxu0
    %v566 = vadd.f32 0.0, %v565
    %v567 = vpop.f32.mrb[0].mxu0
    %v568 = vadd.f32 0.0, %v567
    %v569 = vpop.f32.mrb[0].mxu0
    %v570 = vadd.f32 0.0, %v569
    %571 = vmatprep.mubr.bf16.mxu0 0
    %572 = vmatmul.mubr.bf16.gmra.mrb[0].mxu0 %v392
    %v573 = vpop.f32.mrb[0].mxu0
    %v574 = vadd.f32 0.0, %v573
    %v575 = vpop.f32.mrb[0].mxu0
    %v576 = vadd.f32 0.0, %v575
    %v577 = vpop.f32.mrb[0].mxu0
    %v578 = vadd.f32 0.0, %v577
    %v579 = vpop.f32.mrb[0].mxu0
    %v580 = vadd.f32 0.0, %v579
    %581 = vmatprep.mubr.bf16.mxu0 0
    %582 = vmatmul.mubr.bf16.gmra.mrb[0].mxu0 %v393
    %v583 = vpop.f32.mrb[0].mxu0
    %v584 = vadd.f32 0.0, %v583
    %v585 = vpop.f32.mrb[0].mxu0
    %v586 = vadd.f32 0.0, %v585
    %v587 = vpop.f32.mrb[0].mxu0
    %v588 = vadd.f32 0.0, %v587
    %v589 = vpop.f32.mrb[0].mxu0
    %v590 = vadd.f32 0.0, %v589
    %591 = vmatprep.mubr.bf16.mxu0 0
    %592 = vmatmul.mubr.bf16.gmra.mrb[0].mxu0 %v394
    %v593 = vpop.f32.mrb[0].mxu0
    %v594 = vadd.f32 0.0, %v593
    %v595 = vpop.f32.mrb[0].mxu0
    %v596 = vadd.f32 0.0, %v595
    %v597 = vpop.f32.mrb[0].mxu0
    %v598 = vadd.f32 0.0, %v597
    %v599 = vpop.f32.mrb[0].mxu0
    %v600 = vadd.f32 0.0, %v599
    %601 = vmatprep.mubr.bf16.mxu0 0
    %602 = vmatmul.mubr.bf16.gmra.mrb[0].mxu0 %v395
    %v603 = vpop.f32.mrb[0].mxu0
    %v604 = vadd.f32 0.0, %v603
    %v605 = vpop.f32.mrb[0].mxu0
    %v606 = vadd.f32 0.0, %v605
    %v607 = vpop.f32.mrb[0].mxu0
    %v608 = vadd.f32 0.0, %v607
    %v609 = vpop.f32.mrb[0].mxu0
    %v610 = vadd.f32 0.0, %v609
    %611 = vmatprep.mubr.bf16.mxu0 0
    %612 = vmatmul.mubr.bf16.gmra.mrb[0].mxu0 %v396
    %v613 = vpop.f32.mrb[0].mxu0
    %v614 = vadd.f32 0.0, %v613
    %v615 = vpop.f32.mrb[0].mxu0
    %v616 = vadd.f32 0.0, %v615
    %v617 = vpop.f32.mrb[0].mxu0
    %v618 = vadd.f32 0.0, %v617
    %v619 = vpop.f32.mrb[0].mxu0
    %v620 = vadd.f32 0.0, %v619
    %621 = vmatprep.mubr.bf16.mxu0 0
    %622 = vmatmul.mubr.bf16.gmra.mrb[0].mxu0 %v397
    %v623 = vpop.f32.mrb[0].mxu0
    %v624 = vadd.f32 0.0, %v623
    %v625 = vpop.f32.mrb[0].mxu0
    %v626 = vadd.f32 0.0, %v625
    %v627 = vpop.f32.mrb[0].mxu0
    %v628 = vadd.f32 0.0, %v627
    %v629 = vpop.f32.mrb[0].mxu0
    %v630 = vadd.f32 0.0, %v629
    %631 = vdwg.mxu0
    %632 = vst [vmem:[#allocation4] sm:$0xff] %v441
    %633 = vst [vmem:[#allocation4 + $0x8] sm:$0xff] %v443
    %634 = vst [vmem:[#allocation4 + $0x10] sm:$0xff] %v554
    %635 = vst [vmem:[#allocation4 + $0x18] sm:$0xff] %v556
    %636 = vst [vmem:[#allocation4 + $0x20] sm:$0xff] %v445
    %637 = vst [vmem:[#allocation4 + $0x28] sm:$0xff] %v447
    %638 = vst [vmem:[#allocation4 + $0x30] sm:$0xff] %v558
    %639 = vst [vmem:[#allocation4 + $0x38] sm:$0xff] %v560
    %640 = vst [vmem:[#allocation4 + $0x40] sm:$0xff] %v451
    %641 = vst [vmem:[#allocation4 + $0x48] sm:$0xff] %v453
    %642 = vst [vmem:[#allocation4 + $0x50] sm:$0xff] %v564
    %643 = vst [vmem:[#allocation4 + $0x58] sm:$0xff] %v566
    %644 = vst [vmem:[#allocation4 + $0x60] sm:$0xff] %v455
    %645 = vst [vmem:[#allocation4 + $0x68] sm:$0xff] %v457
    %646 = vst [vmem:[#allocation4 + $0x70] sm:$0xff] %v568
    %647 = vst [vmem:[#allocation4 + $0x78] sm:$0xff] %v570
    %648 = vst [vmem:[#allocation4 + $0x80] sm:$0xff] %v461
    %649 = vst [vmem:[#allocation4 + $0x88] sm:$0xff] %v463
    %650 = vst [vmem:[#allocation4 + $0x90] sm:$0xff] %v574
    %651 = vst [vmem:[#allocation4 + $0x98] sm:$0xff] %v576
    %652 = vst [vmem:[#allocation4 + $0xa0] sm:$0xff] %v465
    %653 = vst [vmem:[#allocation4 + $0xa8] sm:$0xff] %v467
    %654 = vst [vmem:[#allocation4 + $0xb0] sm:$0xff] %v578
    %655 = vst [vmem:[#allocation4 + $0xb8] sm:$0xff] %v580
    %656 = vst [vmem:[#allocation4 + $0xc0] sm:$0xff] %v471
    %657 = vst [vmem:[#allocation4 + $0xc8] sm:$0xff] %v473
    %658 = vst [vmem:[#allocation4 + $0xd0] sm:$0xff] %v584
    %659 = vst [vmem:[#allocation4 + $0xd8] sm:$0xff] %v586
    %660 = vst [vmem:[#allocation4 + $0xe0] sm:$0xff] %v475
    %661 = vst [vmem:[#allocation4 + $0xe8] sm:$0xff] %v477
    %662 = vst [vmem:[#allocation4 + $0xf0] sm:$0xff] %v588
    %663 = vst [vmem:[#allocation4 + $0xf8] sm:$0xff] %v590
    %664 = vst [vmem:[#allocation4 + $0x100] sm:$0xff] %v481
    %665 = vst [vmem:[#allocation4 + $0x108] sm:$0xff] %v483
    %666 = vst [vmem:[#allocation4 + $0x110] sm:$0xff] %v594
    %667 = vst [vmem:[#allocation4 + $0x118] sm:$0xff] %v596
    %668 = vst [vmem:[#allocation4 + $0x120] sm:$0xff] %v485
    %669 = vst [vmem:[#allocation4 + $0x128] sm:$0xff] %v487
    %670 = vst [vmem:[#allocation4 + $0x130] sm:$0xff] %v598
    %671 = vst [vmem:[#allocation4 + $0x138] sm:$0xff] %v600
    %672 = vst [vmem:[#allocation4 + $0x140] sm:$0xff] %v491
    %673 = vst [vmem:[#allocation4 + $0x148] sm:$0xff] %v493
    %674 = vst [vmem:[#allocation4 + $0x150] sm:$0xff] %v604
    %675 = vst [vmem:[#allocation4 + $0x158] sm:$0xff] %v606
    %676 = vst [vmem:[#allocation4 + $0x160] sm:$0xff] %v495
    %677 = vst [vmem:[#allocation4 + $0x168] sm:$0xff] %v497
    %678 = vst [vmem:[#allocation4 + $0x170] sm:$0xff] %v608
    %679 = vst [vmem:[#allocation4 + $0x178] sm:$0xff] %v610
    %680 = vst [vmem:[#allocation4 + $0x180] sm:$0xff] %v501
    %681 = vst [vmem:[#allocation4 + $0x188] sm:$0xff] %v503
    %682 = vst [vmem:[#allocation4 + $0x190] sm:$0xff] %v614
    %683 = vst [vmem:[#allocation4 + $0x198] sm:$0xff] %v616
    %684 = vst [vmem:[#allocation4 + $0x1a0] sm:$0xff] %v505
    %685 = vst [vmem:[#allocation4 + $0x1a8] sm:$0xff] %v507
    %686 = vst [vmem:[#allocation4 + $0x1b0] sm:$0xff] %v618
    %687 = vst [vmem:[#allocation4 + $0x1b8] sm:$0xff] %v620
    %688 = vst [vmem:[#allocation4 + $0x1c0] sm:$0xff] %v511
    %689 = vst [vmem:[#allocation4 + $0x1c8] sm:$0xff] %v513
    %690 = vst [vmem:[#allocation4 + $0x1d0] sm:$0xff] %v624
    %691 = vst [vmem:[#allocation4 + $0x1d8] sm:$0xff] %v626
    %692 = vst [vmem:[#allocation4 + $0x1e0] sm:$0xff] %v515
    %693 = vst [vmem:[#allocation4 + $0x1e8] sm:$0xff] %v517
    %694 = vst [vmem:[#allocation4 + $0x1f0] sm:$0xff] %v628
    %695 = vst [vmem:[#allocation4 + $0x1f8] sm:$0xff] %v630
    %v696 = vld [vmem:[#allocation16] sm:$0xff]
    %v697 = vld [vmem:[#allocation16 + $0x8] sm:$0xff]
    %v698 = vld [vmem:[#allocation18] sm:$0xff]
    %v699 = vld [vmem:[#allocation18 + $0x8] sm:$0xff]
    %v700 = vld [vmem:[#allocation4] sm:$0xff]
    %v701 = vld [vmem:[#allocation4 + $0x8] sm:$0xff]
    %v702 = vld [vmem:[#allocation4 + $0x10] sm:$0xff]
    %v703 = vld [vmem:[#allocation4 + $0x18] sm:$0xff]
    %v704 = vld [vmem:[#allocation4 + $0x20] sm:$0xff]
    %v705 = vld [vmem:[#allocation4 + $0x28] sm:$0xff]
    %v706 = vld [vmem:[#allocation4 + $0x30] sm:$0xff]
    %v707 = vld [vmem:[#allocation4 + $0x38] sm:$0xff]
    %v708 = vpack.c.bf16 %v697, %v696
    %709 = vmatprep.subr.bf16.mxu0 %v310
    %710 = vmatpush1.bf16.msra.mxu0 %v309
    %711 = vmatprep.subr.bf16.mxu0 %v314
    %712 = vmatpush1.bf16.msra.mxu0 %v313
    %713 = vmatprep.subr.bf16.mxu0 %v318
    %714 = vmatpush1.bf16.msra.mxu0 %v317
    %715 = vmatprep.subr.bf16.mxu0 %v322
    %716 = vmatpush1.bf16.msra.mxu0 %v321
    %717 = vmatprep.subr.bf16.mxu0 %v326
    %718 = vmatpush1.bf16.msra.mxu0 %v325
    %719 = vmatprep.subr.bf16.mxu0 %v330
    %720 = vmatpush1.bf16.msra.mxu0 %v329
    %721 = vmatprep.subr.bf16.mxu0 %v334
    %722 = vmatpush1.bf16.msra.mxu0 %v333
    %723 = vmatprep.subr.bf16.mxu0 %v338
    %724 = vmatpush1.bf16.msra.mxu0 %v337
    %725 = vmatprep.subr.bf16.mxu0 0
    %726 = vmatpush1.bf16.msra.mxu0 0
    %727 = vmatprep.subr.bf16.mxu0 0
    %728 = vmatpush1.bf16.msra.mxu0 0
    %729 = vmatprep.subr.bf16.mxu0 0
    %730 = vmatpush1.bf16.msra.mxu0 0
    %731 = vmatprep.subr.bf16.mxu0 0
    %732 = vmatpush1.bf16.msra.mxu0 0
    %733 = vmatprep.subr.bf16.mxu0 0
    %734 = vmatpush1.bf16.msra.mxu0 0
    %735 = vmatprep.subr.bf16.mxu0 0
    %736 = vmatpush1.bf16.msra.mxu0 0
    %737 = vmatprep.subr.bf16.mxu0 0
    %738 = vmatpush1.bf16.msra.mxu0 0
    %739 = vmatprep.subr.bf16.mxu0 0
    %740 = vmatpush1.bf16.msra.mxu0 0
    %741 = vmatprep.mubr.bf16.mxu0 0
    %742 = vmatmul.mubr.bf16.gmra.mrb[0].mxu0 %v708
    %v743 = vpop.f32.mrb[0].mxu0
    %v744 = vadd.f32 0.0, %v743
    %v745 = vpop.f32.mrb[0].mxu0
    %v746 = vadd.f32 0.0, %v745
    %v747 = vpop.f32.mrb[0].mxu0
    %v748 = vadd.f32 0.0, %v747
    %v749 = vpop.f32.mrb[0].mxu0
    %v750 = vadd.f32 0.0, %v749
    %751 = vdwg.mxu0
    %752 = vmatprep.subr.bf16.mxu0 %v312
    %753 = vmatpush1.bf16.msra.mxu0 %v311
    %754 = vmatprep.subr.bf16.mxu0 %v316
    %755 = vmatpush1.bf16.msra.mxu0 %v315
    %756 = vmatprep.subr.bf16.mxu0 %v320
    %757 = vmatpush1.bf16.msra.mxu0 %v319
    %758 = vmatprep.subr.bf16.mxu0 %v324
    %759 = vmatpush1.bf16.msra.mxu0 %v323
    %760 = vmatprep.subr.bf16.mxu0 %v328
    %761 = vmatpush1.bf16.msra.mxu0 %v327
    %762 = vmatprep.subr.bf16.mxu0 %v332
    %763 = vmatpush1.bf16.msra.mxu0 %v331
    %764 = vmatprep.subr.bf16.mxu0 %v336
    %765 = vmatpush1.bf16.msra.mxu0 %v335
    %766 = vmatprep.subr.bf16.mxu0 %v340
    %767 = vmatpush1.bf16.msra.mxu0 %v339
    %768 = vmatprep.subr.bf16.mxu0 0
    %769 = vmatpush1.bf16.msra.mxu0 0
    %770 = vmatprep.subr.bf16.mxu0 0
    %771 = vmatpush1.bf16.msra.mxu0 0
    %772 = vmatprep.subr.bf16.mxu0 0
    %773 = vmatpush1.bf16.msra.mxu0 0
    %774 = vmatprep.subr.bf16.mxu0 0
    %775 = vmatpush1.bf16.msra.mxu0 0
    %776 = vmatprep.subr.bf16.mxu0 0
    %777 = vmatpush1.bf16.msra.mxu0 0
    %778 = vmatprep.subr.bf16.mxu0 0
    %779 = vmatpush1.bf16.msra.mxu0 0
    %780 = vmatprep.subr.bf16.mxu0 0
    %781 = vmatpush1.bf16.msra.mxu0 0
    %782 = vmatprep.subr.bf16.mxu0 0
    %783 = vmatpush1.bf16.msra.mxu0 0
    %784 = vmatprep.mubr.bf16.mxu0 0
    %785 = vmatmul.mubr.bf16.gmra.mrb[0].mxu0 %v708
    %v786 = vpop.f32.mrb[0].mxu0
    %v787 = vadd.f32 0.0, %v786
    %v788 = vpop.f32.mrb[0].mxu0
    %v789 = vadd.f32 0.0, %v788
    %v790 = vpop.f32.mrb[0].mxu0
    %v791 = vadd.f32 0.0, %v790
    %v792 = vpop.f32.mrb[0].mxu0
    %v793 = vadd.f32 0.0, %v792
    %794 = vdwg.mxu0
    %v795 = vadd.f32 %v700, %v744
    %v796 = vadd.f32 %v701, %v746
    %v797 = vadd.f32 %v702, %v787
    %v798 = vadd.f32 %v703, %v789
    %v799 = vadd.f32 %v704, %v748
    %v800 = vadd.f32 %v705, %v750
    %v801 = vadd.f32 %v706, %v791
    %v802 = vadd.f32 %v707, %v793
    %v804 = vlaneseq
    %v805 = vshrl.u32 %v804, 7
    %v806 = vsub.s32 0, %v805
    %v807 = vrot.slane %v341, %v806
    %v808 = vlaneseq
    %v809 = vshrl.u32 %v808, 7
    %v810 = vsub.s32 1, %v809
    %v811 = vrot.slane %v341, %v810
    %v812 = vlaneseq
    %v813 = vshrl.u32 %v812, 7
    %v814 = vsub.s32 2, %v813
    %v815 = vrot.slane %v341, %v814
    %v816 = vlaneseq
    %v817 = vshrl.u32 %v816, 7
    %v818 = vsub.s32 3, %v817
    %v819 = vrot.slane %v341, %v818
    %v824 = vadd.f32 %v795, %v807
    %v825 = vadd.f32 %v796, %v811
    %v826 = vadd.f32 %v797, %v815
    %v827 = vadd.f32 %v798, %v819
    %v828 = vadd.f32 %v799, %v807
    %v829 = vadd.f32 %v800, %v811
    %v830 = vadd.f32 %v801, %v815
    %v831 = vadd.f32 %v802, %v819
    %v832 = vmul.f32 %v824, 0.5
    %v833 = vmul.f32 %v828, 0.5
    %v834 = vtanh.pop %v832
    %v835 = vtanh.pop %v833
    %v836 = vmul.f32 %v834, 0.5
    %v837 = vmul.f32 %v835, 0.5
    %v838 = vadd.f32 %v836, 0.5
    %v839 = vadd.f32 %v837, 0.5
    %v840 = vmul.f32 %v825, 0.5
    %v841 = vmul.f32 %v829, 0.5
    %v842 = vtanh.pop %v840
    %v843 = vtanh.pop %v841
    %v844 = vmul.f32 %v842, 0.5
    %v845 = vmul.f32 %v843, 0.5
    %v846 = vadd.f32 %v844, 0.5
    %v847 = vadd.f32 %v845, 0.5
    %v848 = vtanh.pop %v826
    %v849 = vtanh.pop %v830
    %v850 = vmul.f32 %v827, 0.5
    %v851 = vmul.f32 %v831, 0.5
    %v852 = vtanh.pop %v850
    %v853 = vtanh.pop %v851
    %v854 = vmul.f32 %v852, 0.5
    %v855 = vmul.f32 %v853, 0.5
    %v856 = vadd.f32 %v854, 0.5
    %v857 = vadd.f32 %v855, 0.5
    %v858 = vmul.f32 %v846, %v698
    %v859 = vmul.f32 %v847, %v699
    %v860 = vmul.f32 %v838, %v848
    %v861 = vmul.f32 %v839, %v849
    %v862 = vadd.f32 %v858, %v860
    %v863 = vadd.f32 %v859, %v861
    %v864 = vtanh.pop %v862
    %v865 = vtanh.pop %v863
    %v866 = vmul.f32 %v856, %v864
    %v867 = vmul.f32 %v857, %v865
    %v868 = vpack.c.bf16 %v867, %v866
    %869 = vst [vmem:[#allocation5] sm:$0xff] %v868
    %s870 = scalar_lea.vmem [#allocation4], 64
    %v871 = vld [vmem:[%s870] sm:$0xff]
    %v872 = vld [vmem:[%s870 + $0x8] sm:$0xff]
    %v873 = vld [vmem:[%s870 + $0x10] sm:$0xff]
    %v874 = vld [vmem:[%s870 + $0x18] sm:$0xff]
    %v875 = vld [vmem:[%s870 + $0x20] sm:$0xff]
    %v876 = vld [vmem:[%s870 + $0x28] sm:$0xff]
    %v877 = vld [vmem:[%s870 + $0x30] sm:$0xff]
    %v878 = vld [vmem:[%s870 + $0x38] sm:$0xff]
    %879 = vmatprep.subr.bf16.mxu0 %v310
    %880 = vmatpush1.bf16.msra.mxu0 %v309
    %881 = vmatprep.subr.bf16.mxu0 %v314
    %882 = vmatpush1.bf16.msra.mxu0 %v313
    %883 = vmatprep.subr.bf16.mxu0 %v318
    %884 = vmatpush1.bf16.msra.mxu0 %v317
    %885 = vmatprep.subr.bf16.mxu0 %v322
    %886 = vmatpush1.bf16.msra.mxu0 %v321
    %887 = vmatprep.subr.bf16.mxu0 %v326
    %888 = vmatpush1.bf16.msra.mxu0 %v325
    %889 = vmatprep.subr.bf16.mxu0 %v330
    %890 = vmatpush1.bf16.msra.mxu0 %v329
    %891 = vmatprep.subr.bf16.mxu0 %v334
    %892 = vmatpush1.bf16.msra.mxu0 %v333
    %893 = vmatprep.subr.bf16.mxu0 %v338
    %894 = vmatpush1.bf16.msra.mxu0 %v337
    %895 = vmatprep.subr.bf16.mxu0 0
    %896 = vmatpush1.bf16.msra.mxu0 0
    %897 = vmatprep.subr.bf16.mxu0 0
    %898 = vmatpush1.bf16.msra.mxu0 0
    %899 = vmatprep.subr.bf16.mxu0 0
    %900 = vmatpush1.bf16.msra.mxu0 0
    %901 = vmatprep.subr.bf16.mxu0 0
    %902 = vmatpush1.bf16.msra.mxu0 0
    %903 = vmatprep.subr.bf16.mxu0 0
    %904 = vmatpush1.bf16.msra.mxu0 0
    %905 = vmatprep.subr.bf16.mxu0 0
    %906 = vmatpush1.bf16.msra.mxu0 0
    %907 = vmatprep.subr.bf16.mxu0 0
    %908 = vmatpush1.bf16.msra.mxu0 0
    %909 = vmatprep.subr.bf16.mxu0 0
    %910 = vmatpush1.bf16.msra.mxu0 0
    %911 = vmatprep.mubr.bf16.mxu0 0
    %912 = vmatmul.mubr.bf16.gmra.mrb[0].mxu0 %v868
    %v913 = vpop.f32.mrb[0].mxu0
    %v914 = vadd.f32 0.0, %v913
    %v915 = vpop.f32.mrb[0].mxu0
    %v916 = vadd.f32 0.0, %v915
    %v917 = vpop.f32.mrb[0].mxu0
    %v918 = vadd.f32 0.0, %v917
    %v919 = vpop.f32.mrb[0].mxu0
    %v920 = vadd.f32 0.0, %v919
    %921 = vdwg.mxu0
    %922 = vmatprep.subr.bf16.mxu0 %v312
    %923 = vmatpush1.bf16.msra.mxu0 %v311
    %924 = vmatprep.subr.bf16.mxu0 %v316
    %925 = vmatpush1.bf16.msra.mxu0 %v315
    %926 = vmatprep.subr.bf16.mxu0 %v320
    %927 = vmatpush1.bf16.msra.mxu0 %v319
    %928 = vmatprep.subr.bf16.mxu0 %v324
    %929 = vmatpush1.bf16.msra.mxu0 %v323
    %930 = vmatprep.subr.bf16.mxu0 %v328
    %931 = vmatpush1.bf16.msra.mxu0 %v327
    %932 = vmatprep.subr.bf16.mxu0 %v332
    %933 = vmatpush1.bf16.msra.mxu0 %v331
    %934 = vmatprep.subr.bf16.mxu0 %v336
    %935 = vmatpush1.bf16.msra.mxu0 %v335
    %936 = vmatprep.subr.bf16.mxu0 %v340
    %937 = vmatpush1.bf16.msra.mxu0 %v339
    %938 = vmatprep.subr.bf16.mxu0 0
    %939 = vmatpush1.bf16.msra.mxu0 0
    %940 = vmatprep.subr.bf16.mxu0 0
    %941 = vmatpush1.bf16.msra.mxu0 0
    %942 = vmatprep.subr.bf16.mxu0 0
    %943 = vmatpush1.bf16.msra.mxu0 0
    %944 = vmatprep.subr.bf16.mxu0 0
    %945 = vmatpush1.bf16.msra.mxu0 0
    %946 = vmatprep.subr.bf16.mxu0 0
    %947 = vmatpush1.bf16.msra.mxu0 0
    %948 = vmatprep.subr.bf16.mxu0 0
    %949 = vmatpush1.bf16.msra.mxu0 0
    %950 = vmatprep.subr.bf16.mxu0 0
    %951 = vmatpush1.bf16.msra.mxu0 0
    %952 = vmatprep.subr.bf16.mxu0 0
    %953 = vmatpush1.bf16.msra.mxu0 0
    %954 = vmatprep.mubr.bf16.mxu0 0
    %955 = vmatmul.mubr.bf16.gmra.mrb[0].mxu0 %v868
    %v956 = vpop.f32.mrb[0].mxu0
    %v957 = vadd.f32 0.0, %v956
    %v958 = vpop.f32.mrb[0].mxu0
    %v959 = vadd.f32 0.0, %v958
    %v960 = vpop.f32.mrb[0].mxu0
    %v961 = vadd.f32 0.0, %v960
    %v962 = vpop.f32.mrb[0].mxu0
    %v963 = vadd.f32 0.0, %v962
    %964 = vdwg.mxu0
    %v965 = vadd.f32 %v871, %v914
    %v966 = vadd.f32 %v872, %v916
    %v967 = vadd.f32 %v873, %v957
    %v968 = vadd.f32 %v874, %v959
    %v969 = vadd.f32 %v875, %v918
    %v970 = vadd.f32 %v876, %v920
    %v971 = vadd.f32 %v877, %v961
    %v972 = vadd.f32 %v878, %v963
    %v973 = vadd.f32 %v965, %v807
    %v974 = vadd.f32 %v966, %v811
    %v975 = vadd.f32 %v967, %v815
    %v976 = vadd.f32 %v968, %v819
    %v977 = vadd.f32 %v969, %v807
    %v978 = vadd.f32 %v970, %v811
    %v979 = vadd.f32 %v971, %v815
    %v980 = vadd.f32 %v972, %v819
    %v981 = vmul.f32 %v973, 0.5
    %v982 = vmul.f32 %v977, 0.5
    %v983 = vtanh.pop %v981
    %v984 = vtanh.pop %v982
    %v985 = vmul.f32 %v983, 0.5
    %v986 = vmul.f32 %v984, 0.5
    %v987 = vadd.f32 %v985, 0.5
    %v988 = vadd.f32 %v986, 0.5
    %v989 = vmul.f32 %v974, 0.5
    %v990 = vmul.f32 %v978, 0.5
    %v991 = vtanh.pop %v989
    %v992 = vtanh.pop %v990
    %v993 = vmul.f32 %v991, 0.5
    %v994 = vmul.f32 %v992, 0.5
    %v995 = vadd.f32 %v993, 0.5
    %v996 = vadd.f32 %v994, 0.5
    %v997 = vtanh.pop %v975
    %v998 = vtanh.pop %v979
    %v999 = vmul.f32 %v976, 0.5
    %v1000 = vmul.f32 %v980, 0.5
    %v1001 = vtanh.pop %v999
    %v1002 = vtanh.pop %v1000
    %v1003 = vmul.f32 %v1001, 0.5
    %v1004 = vmul.f32 %v1002, 0.5
    %v1005 = vadd.f32 %v1003, 0.5
    %v1006 = vadd.f32 %v1004, 0.5
    %v1007 = vmul.f32 %v995, %v862
    %v1008 = vmul.f32 %v996, %v863
    %v1009 = vmul.f32 %v987, %v997
    %v1010 = vmul.f32 %v988, %v998
    %v1011 = vadd.f32 %v1007, %v1009
    %v1012 = vadd.f32 %v1008, %v1010
    %v1013 = vtanh.pop %v1011
    %v1014 = vtanh.pop %v1012
    %v1015 = vmul.f32 %v1005, %v1013
    %v1016 = vmul.f32 %v1006, %v1014
    %v1017 = vpack.c.bf16 %v1016, %v1015
    %s1018 = scalar_lea.vmem [#allocation5], 8
    %1019 = vst [vmem:[%s1018] sm:$0xff] %v1017
    %s1020 = scalar_lea.vmem [#allocation4], 128
    %v1021 = vld [vmem:[%s1020] sm:$0xff]
    %v1022 = vld [vmem:[%s1020 + $0x8] sm:$0xff]
    %v1023 = vld [vmem:[%s1020 + $0x10] sm:$0xff]
    %v1024 = vld [vmem:[%s1020 + $0x18] sm:$0xff]
    %v1025 = vld [vmem:[%s1020 + $0x20] sm:$0xff]
    %v1026 = vld [vmem:[%s1020 + $0x28] sm:$0xff]
    %v1027 = vld [vmem:[%s1020 + $0x30] sm:$0xff]
    %v1028 = vld [vmem:[%s1020 + $0x38] sm:$0xff]
    %1029 = vmatprep.subr.bf16.mxu0 %v310
    %1030 = vmatpush1.bf16.msra.mxu0 %v309
    %1031 = vmatprep.subr.bf16.mxu0 %v314
    %1032 = vmatpush1.bf16.msra.mxu0 %v313
    %1033 = vmatprep.subr.bf16.mxu0 %v318
    %1034 = vmatpush1.bf16.msra.mxu0 %v317
    %1035 = vmatprep.subr.bf16.mxu0 %v322
    %1036 = vmatpush1.bf16.msra.mxu0 %v321
    %1037 = vmatprep.subr.bf16.mxu0 %v326
    %1038 = vmatpush1.bf16.msra.mxu0 %v325
    %1039 = vmatprep.subr.bf16.mxu0 %v330
    %1040 = vmatpush1.bf16.msra.mxu0 %v329
    %1041 = vmatprep.subr.bf16.mxu0 %v334
    %1042 = vmatpush1.bf16.msra.mxu0 %v333
    %1043 = vmatprep.subr.bf16.mxu0 %v338
    %1044 = vmatpush1.bf16.msra.mxu0 %v337
    %1045 = vmatprep.subr.bf16.mxu0 0
    %1046 = vmatpush1.bf16.msra.mxu0 0
    %1047 = vmatprep.subr.bf16.mxu0 0
    %1048 = vmatpush1.bf16.msra.mxu0 0
    %1049 = vmatprep.subr.bf16.mxu0 0
    %1050 = vmatpush1.bf16.msra.mxu0 0
    %1051 = vmatprep.subr.bf16.mxu0 0
    %1052 = vmatpush1.bf16.msra.mxu0 0
    %1053 = vmatprep.subr.bf16.mxu0 0
    %1054 = vmatpush1.bf16.msra.mxu0 0
    %1055 = vmatprep.subr.bf16.mxu0 0
    %1056 = vmatpush1.bf16.msra.mxu0 0
    %1057 = vmatprep.subr.bf16.mxu0 0
    %1058 = vmatpush1.bf16.msra.mxu0 0
    %1059 = vmatprep.subr.bf16.mxu0 0
    %1060 = vmatpush1.bf16.msra.mxu0 0
    %1061 = vmatprep.mubr.bf16.mxu0 0
    %1062 = vmatmul.mubr.bf16.gmra.mrb[0].mxu0 %v1017
    %v1063 = vpop.f32.mrb[0].mxu0
    %v1064 = vadd.f32 0.0, %v1063
    %v1065 = vpop.f32.mrb[0].mxu0
    %v1066 = vadd.f32 0.0, %v1065
    %v1067 = vpop.f32.mrb[0].mxu0
    %v1068 = vadd.f32 0.0, %v1067
    %v1069 = vpop.f32.mrb[0].mxu0
    %v1070 = vadd.f32 0.0, %v1069
    %1071 = vdwg.mxu0
    %1072 = vmatprep.subr.bf16.mxu0 %v312
    %1073 = vmatpush1.bf16.msra.mxu0 %v311
    %1074 = vmatprep.subr.bf16.mxu0 %v316
    %1075 = vmatpush1.bf16.msra.mxu0 %v315
    %1076 = vmatprep.subr.bf16.mxu0 %v320
    %1077 = vmatpush1.bf16.msra.mxu0 %v319
    %1078 = vmatprep.subr.bf16.mxu0 %v324
    %1079 = vmatpush1.bf16.msra.mxu0 %v323
    %1080 = vmatprep.subr.bf16.mxu0 %v328
    %1081 = vmatpush1.bf16.msra.mxu0 %v327
    %1082 = vmatprep.subr.bf16.mxu0 %v332
    %1083 = vmatpush1.bf16.msra.mxu0 %v331
    %1084 = vmatprep.subr.bf16.mxu0 %v336
    %1085 = vmatpush1.bf16.msra.mxu0 %v335
    %1086 = vmatprep.subr.bf16.mxu0 %v340
    %1087 = vmatpush1.bf16.msra.mxu0 %v339
    %1088 = vmatprep.subr.bf16.mxu0 0
    %1089 = vmatpush1.bf16.msra.mxu0 0
    %1090 = vmatprep.subr.bf16.mxu0 0
    %1091 = vmatpush1.bf16.msra.mxu0 0
    %1092 = vmatprep.subr.bf16.mxu0 0
    %1093 = vmatpush1.bf16.msra.mxu0 0
    %1094 = vmatprep.subr.bf16.mxu0 0
    %1095 = vmatpush1.bf16.msra.mxu0 0
    %1096 = vmatprep.subr.bf16.mxu0 0
    %1097 = vmatpush1.bf16.msra.mxu0 0
    %1098 = vmatprep.subr.bf16.mxu0 0
    %1099 = vmatpush1.bf16.msra.mxu0 0
    %1100 = vmatprep.subr.bf16.mxu0 0
    %1101 = vmatpush1.bf16.msra.mxu0 0
    %1102 = vmatprep.subr.bf16.mxu0 0
    %1103 = vmatpush1.bf16.msra.mxu0 0
    %1104 = vmatprep.mubr.bf16.mxu0 0
    %1105 = vmatmul.mubr.bf16.gmra.mrb[0].mxu0 %v1017
    %v1106 = vpop.f32.mrb[0].mxu0
    %v1107 = vadd.f32 0.0, %v1106
    %v1108 = vpop.f32.mrb[0].mxu0
    %v1109 = vadd.f32 0.0, %v1108
    %v1110 = vpop.f32.mrb[0].mxu0
    %v1111 = vadd.f32 0.0, %v1110
    %v1112 = vpop.f32.mrb[0].mxu0
    %v1113 = vadd.f32 0.0, %v1112
    %1114 = vdwg.mxu0
    %v1115 = vadd.f32 %v1021, %v1064
    %v1116 = vadd.f32 %v1022, %v1066
    %v1117 = vadd.f32 %v1023, %v1107
    %v1118 = vadd.f32 %v1024, %v1109
    %v1119 = vadd.f32 %v1025, %v1068
    %v1120 = vadd.f32 %v1026, %v1070
    %v1121 = vadd.f32 %v1027, %v1111
    %v1122 = vadd.f32 %v1028, %v1113
    %v1123 = vadd.f32 %v1115, %v807
    %v1124 = vadd.f32 %v1116, %v811
    %v1125 = vadd.f32 %v1117, %v815
    %v1126 = vadd.f32 %v1118, %v819
    %v1127 = vadd.f32 %v1119, %v807
    %v1128 = vadd.f32 %v1120, %v811
    %v1129 = vadd.f32 %v1121, %v815
    %v1130 = vadd.f32 %v1122, %v819
    %v1131 = vmul.f32 %v1123, 0.5
    %v1132 = vmul.f32 %v1127, 0.5
    %v1133 = vtanh.pop %v1131
    %v1134 = vtanh.pop %v1132
    %v1135 = vmul.f32 %v1133, 0.5
    %v1136 = vmul.f32 %v1134, 0.5
    %v1137 = vadd.f32 %v1135, 0.5
    %v1138 = vadd.f32 %v1136, 0.5
    %v1139 = vmul.f32 %v1124, 0.5
    %v1140 = vmul.f32 %v1128, 0.5
    %v1141 = vtanh.pop %v1139
    %v1142 = vtanh.pop %v1140
    %v1143 = vmul.f32 %v1141, 0.5
    %v1144 = vmul.f32 %v1142, 0.5
    %v1145 = vadd.f32 %v1143, 0.5
    %v1146 = vadd.f32 %v1144, 0.5
    %v1147 = vtanh.pop %v1125
    %v1148 = vtanh.pop %v1129
    %v1149 = vmul.f32 %v1126, 0.5
    %v1150 = vmul.f32 %v1130, 0.5
    %v1151 = vtanh.pop %v1149
    %v1152 = vtanh.pop %v1150
    %v1153 = vmul.f32 %v1151, 0.5
    %v1154 = vmul.f32 %v1152, 0.5
    %v1155 = vadd.f32 %v1153, 0.5
    %v1156 = vadd.f32 %v1154, 0.5
    %v1157 = vmul.f32 %v1145, %v1011
    %v1158 = vmul.f32 %v1146, %v1012
    %v1159 = vmul.f32 %v1137, %v1147
    %v1160 = vmul.f32 %v1138, %v1148
    %v1161 = vadd.f32 %v1157, %v1159
    %v1162 = vadd.f32 %v1158, %v1160
    %v1163 = vtanh.pop %v1161
    %v1164 = vtanh.pop %v1162
    %v1165 = vmul.f32 %v1155, %v1163
    %v1166 = vmul.f32 %v1156, %v1164
    %v1167 = vpack.c.bf16 %v1166, %v1165
    %s1168 = scalar_lea.vmem [#allocation5], 16
    %1169 = vst [vmem:[%s1168] sm:$0xff] %v1167
    %s1170 = scalar_lea.vmem [#allocation4], 192
    %v1171 = vld [vmem:[%s1170] sm:$0xff]
    %v1172 = vld [vmem:[%s1170 + $0x8] sm:$0xff]
    %v1173 = vld [vmem:[%s1170 + $0x10] sm:$0xff]
    %v1174 = vld [vmem:[%s1170 + $0x18] sm:$0xff]
    %v1175 = vld [vmem:[%s1170 + $0x20] sm:$0xff]
    %v1176 = vld [vmem:[%s1170 + $0x28] sm:$0xff]
    %v1177 = vld [vmem:[%s1170 + $0x30] sm:$0xff]
    %v1178 = vld [vmem:[%s1170 + $0x38] sm:$0xff]
    %1179 = vmatprep.subr.bf16.mxu0 %v310
    %1180 = vmatpush1.bf16.msra.mxu0 %v309
    %1181 = vmatprep.subr.bf16.mxu0 %v314
    %1182 = vmatpush1.bf16.msra.mxu0 %v313
    %1183 = vmatprep.subr.bf16.mxu0 %v318
    %1184 = vmatpush1.bf16.msra.mxu0 %v317
    %1185 = vmatprep.subr.bf16.mxu0 %v322
    %1186 = vmatpush1.bf16.msra.mxu0 %v321
    %1187 = vmatprep.subr.bf16.mxu0 %v326
    %1188 = vmatpush1.bf16.msra.mxu0 %v325
    %1189 = vmatprep.subr.bf16.mxu0 %v330
    %1190 = vmatpush1.bf16.msra.mxu0 %v329
    %1191 = vmatprep.subr.bf16.mxu0 %v334
    %1192 = vmatpush1.bf16.msra.mxu0 %v333
    %1193 = vmatprep.subr.bf16.mxu0 %v338
    %1194 = vmatpush1.bf16.msra.mxu0 %v337
    %1195 = vmatprep.subr.bf16.mxu0 0
    %1196 = vmatpush1.bf16.msra.mxu0 0
    %1197 = vmatprep.subr.bf16.mxu0 0
    %1198 = vmatpush1.bf16.msra.mxu0 0
    %1199 = vmatprep.subr.bf16.mxu0 0
    %1200 = vmatpush1.bf16.msra.mxu0 0
    %1201 = vmatprep.subr.bf16.mxu0 0
    %1202 = vmatpush1.bf16.msra.mxu0 0
    %1203 = vmatprep.subr.bf16.mxu0 0
    %1204 = vmatpush1.bf16.msra.mxu0 0
    %1205 = vmatprep.subr.bf16.mxu0 0
    %1206 = vmatpush1.bf16.msra.mxu0 0
    %1207 = vmatprep.subr.bf16.mxu0 0
    %1208 = vmatpush1.bf16.msra.mxu0 0
    %1209 = vmatprep.subr.bf16.mxu0 0
    %1210 = vmatpush1.bf16.msra.mxu0 0
    %1211 = vmatprep.mubr.bf16.mxu0 0
    %1212 = vmatmul.mubr.bf16.gmra.mrb[0].mxu0 %v1167
    %v1213 = vpop.f32.mrb[0].mxu0
    %v1214 = vadd.f32 0.0, %v1213
    %v1215 = vpop.f32.mrb[0].mxu0
    %v1216 = vadd.f32 0.0, %v1215
    %v1217 = vpop.f32.mrb[0].mxu0
    %v1218 = vadd.f32 0.0, %v1217
    %v1219 = vpop.f32.mrb[0].mxu0
    %v1220 = vadd.f32 0.0, %v1219
    %1221 = vdwg.mxu0
    %1222 = vmatprep.subr.bf16.mxu0 %v312
    %1223 = vmatpush1.bf16.msra.mxu0 %v311
    %1224 = vmatprep.subr.bf16.mxu0 %v316
    %1225 = vmatpush1.bf16.msra.mxu0 %v315
    %1226 = vmatprep.subr.bf16.mxu0 %v320
    %1227 = vmatpush1.bf16.msra.mxu0 %v319
    %1228 = vmatprep.subr.bf16.mxu0 %v324
    %1229 = vmatpush1.bf16.msra.mxu0 %v323
    %1230 = vmatprep.subr.bf16.mxu0 %v328
    %1231 = vmatpush1.bf16.msra.mxu0 %v327
    %1232 = vmatprep.subr.bf16.mxu0 %v332
    %1233 = vmatpush1.bf16.msra.mxu0 %v331
    %1234 = vmatprep.subr.bf16.mxu0 %v336
    %1235 = vmatpush1.bf16.msra.mxu0 %v335
    %1236 = vmatprep.subr.bf16.mxu0 %v340
    %1237 = vmatpush1.bf16.msra.mxu0 %v339
    %1238 = vmatprep.subr.bf16.mxu0 0
    %1239 = vmatpush1.bf16.msra.mxu0 0
    %1240 = vmatprep.subr.bf16.mxu0 0
    %1241 = vmatpush1.bf16.msra.mxu0 0
    %1242 = vmatprep.subr.bf16.mxu0 0
    %1243 = vmatpush1.bf16.msra.mxu0 0
    %1244 = vmatprep.subr.bf16.mxu0 0
    %1245 = vmatpush1.bf16.msra.mxu0 0
    %1246 = vmatprep.subr.bf16.mxu0 0
    %1247 = vmatpush1.bf16.msra.mxu0 0
    %1248 = vmatprep.subr.bf16.mxu0 0
    %1249 = vmatpush1.bf16.msra.mxu0 0
    %1250 = vmatprep.subr.bf16.mxu0 0
    %1251 = vmatpush1.bf16.msra.mxu0 0
    %1252 = vmatprep.subr.bf16.mxu0 0
    %1253 = vmatpush1.bf16.msra.mxu0 0
    %1254 = vmatprep.mubr.bf16.mxu0 0
    %1255 = vmatmul.mubr.bf16.gmra.mrb[0].mxu0 %v1167
    %v1256 = vpop.f32.mrb[0].mxu0
    %v1257 = vadd.f32 0.0, %v1256
    %v1258 = vpop.f32.mrb[0].mxu0
    %v1259 = vadd.f32 0.0, %v1258
    %v1260 = vpop.f32.mrb[0].mxu0
    %v1261 = vadd.f32 0.0, %v1260
    %v1262 = vpop.f32.mrb[0].mxu0
    %v1263 = vadd.f32 0.0, %v1262
    %1264 = vdwg.mxu0
    %v1265 = vadd.f32 %v1171, %v1214
    %v1266 = vadd.f32 %v1172, %v1216
    %v1267 = vadd.f32 %v1173, %v1257
    %v1268 = vadd.f32 %v1174, %v1259
    %v1269 = vadd.f32 %v1175, %v1218
    %v1270 = vadd.f32 %v1176, %v1220
    %v1271 = vadd.f32 %v1177, %v1261
    %v1272 = vadd.f32 %v1178, %v1263
    %v1273 = vadd.f32 %v1265, %v807
    %v1274 = vadd.f32 %v1266, %v811
    %v1275 = vadd.f32 %v1267, %v815
    %v1276 = vadd.f32 %v1268, %v819
    %v1277 = vadd.f32 %v1269, %v807
    %v1278 = vadd.f32 %v1270, %v811
    %v1279 = vadd.f32 %v1271, %v815
    %v1280 = vadd.f32 %v1272, %v819
    %v1281 = vmul.f32 %v1273, 0.5
    %v1282 = vmul.f32 %v1277, 0.5
    %v1283 = vtanh.pop %v1281
    %v1284 = vtanh.pop %v1282
    %v1285 = vmul.f32 %v1283, 0.5
    %v1286 = vmul.f32 %v1284, 0.5
    %v1287 = vadd.f32 %v1285, 0.5
    %v1288 = vadd.f32 %v1286, 0.5
    %v1289 = vmul.f32 %v1274, 0.5
    %v1290 = vmul.f32 %v1278, 0.5
    %v1291 = vtanh.pop %v1289
    %v1292 = vtanh.pop %v1290
    %v1293 = vmul.f32 %v1291, 0.5
    %v1294 = vmul.f32 %v1292, 0.5
    %v1295 = vadd.f32 %v1293, 0.5
    %v1296 = vadd.f32 %v1294, 0.5
    %v1297 = vtanh.pop %v1275
    %v1298 = vtanh.pop %v1279
    %v1299 = vmul.f32 %v1276, 0.5
    %v1300 = vmul.f32 %v1280, 0.5
    %v1301 = vtanh.pop %v1299
    %v1302 = vtanh.pop %v1300
    %v1303 = vmul.f32 %v1301, 0.5
    %v1304 = vmul.f32 %v1302, 0.5
    %v1305 = vadd.f32 %v1303, 0.5
    %v1306 = vadd.f32 %v1304, 0.5
    %v1307 = vmul.f32 %v1295, %v1161
    %v1308 = vmul.f32 %v1296, %v1162
    %v1309 = vmul.f32 %v1287, %v1297
    %v1310 = vmul.f32 %v1288, %v1298
    %v1311 = vadd.f32 %v1307, %v1309
    %v1312 = vadd.f32 %v1308, %v1310
    %v1313 = vtanh.pop %v1311
    %v1314 = vtanh.pop %v1312
    %v1315 = vmul.f32 %v1305, %v1313
    %v1316 = vmul.f32 %v1306, %v1314
    %v1317 = vpack.c.bf16 %v1316, %v1315
    %s1318 = scalar_lea.vmem [#allocation5], 24
    %1319 = vst [vmem:[%s1318] sm:$0xff] %v1317
    %s1320 = scalar_lea.vmem [#allocation4], 256
    %v1321 = vld [vmem:[%s1320] sm:$0xff]
    %v1322 = vld [vmem:[%s1320 + $0x8] sm:$0xff]
    %v1323 = vld [vmem:[%s1320 + $0x10] sm:$0xff]
    %v1324 = vld [vmem:[%s1320 + $0x18] sm:$0xff]
    %v1325 = vld [vmem:[%s1320 + $0x20] sm:$0xff]
    %v1326 = vld [vmem:[%s1320 + $0x28] sm:$0xff]
    %v1327 = vld [vmem:[%s1320 + $0x30] sm:$0xff]
    %v1328 = vld [vmem:[%s1320 + $0x38] sm:$0xff]
    %1329 = vmatprep.subr.bf16.mxu0 %v310
    %1330 = vmatpush1.bf16.msra.mxu0 %v309
    %1331 = vmatprep.subr.bf16.mxu0 %v314
    %1332 = vmatpush1.bf16.msra.mxu0 %v313
    %1333 = vmatprep.subr.bf16.mxu0 %v318
    %1334 = vmatpush1.bf16.msra.mxu0 %v317
    %1335 = vmatprep.subr.bf16.mxu0 %v322
    %1336 = vmatpush1.bf16.msra.mxu0 %v321
    %1337 = vmatprep.subr.bf16.mxu0 %v326
    %1338 = vmatpush1.bf16.msra.mxu0 %v325
    %1339 = vmatprep.subr.bf16.mxu0 %v330
    %1340 = vmatpush1.bf16.msra.mxu0 %v329
    %1341 = vmatprep.subr.bf16.mxu0 %v334
    %1342 = vmatpush1.bf16.msra.mxu0 %v333
    %1343 = vmatprep.subr.bf16.mxu0 %v338
    %1344 = vmatpush1.bf16.msra.mxu0 %v337
    %1345 = vmatprep.subr.bf16.mxu0 0
    %1346 = vmatpush1.bf16.msra.mxu0 0
    %1347 = vmatprep.subr.bf16.mxu0 0
    %1348 = vmatpush1.bf16.msra.mxu0 0
    %1349 = vmatprep.subr.bf16.mxu0 0
    %1350 = vmatpush1.bf16.msra.mxu0 0
    %1351 = vmatprep.subr.bf16.mxu0 0
    %1352 = vmatpush1.bf16.msra.mxu0 0
    %1353 = vmatprep.subr.bf16.mxu0 0
    %1354 = vmatpush1.bf16.msra.mxu0 0
    %1355 = vmatprep.subr.bf16.mxu0 0
    %1356 = vmatpush1.bf16.msra.mxu0 0
    %1357 = vmatprep.subr.bf16.mxu0 0
    %1358 = vmatpush1.bf16.msra.mxu0 0
    %1359 = vmatprep.subr.bf16.mxu0 0
    %1360 = vmatpush1.bf16.msra.mxu0 0
    %1361 = vmatprep.mubr.bf16.mxu0 0
    %1362 = vmatmul.mubr.bf16.gmra.mrb[0].mxu0 %v1317
    %v1363 = vpop.f32.mrb[0].mxu0
    %v1364 = vadd.f32 0.0, %v1363
    %v1365 = vpop.f32.mrb[0].mxu0
    %v1366 = vadd.f32 0.0, %v1365
    %v1367 = vpop.f32.mrb[0].mxu0
    %v1368 = vadd.f32 0.0, %v1367
    %v1369 = vpop.f32.mrb[0].mxu0
    %v1370 = vadd.f32 0.0, %v1369
    %1371 = vdwg.mxu0
    %1372 = vmatprep.subr.bf16.mxu0 %v312
    %1373 = vmatpush1.bf16.msra.mxu0 %v311
    %1374 = vmatprep.subr.bf16.mxu0 %v316
    %1375 = vmatpush1.bf16.msra.mxu0 %v315
    %1376 = vmatprep.subr.bf16.mxu0 %v320
    %1377 = vmatpush1.bf16.msra.mxu0 %v319
    %1378 = vmatprep.subr.bf16.mxu0 %v324
    %1379 = vmatpush1.bf16.msra.mxu0 %v323
    %1380 = vmatprep.subr.bf16.mxu0 %v328
    %1381 = vmatpush1.bf16.msra.mxu0 %v327
    %1382 = vmatprep.subr.bf16.mxu0 %v332
    %1383 = vmatpush1.bf16.msra.mxu0 %v331
    %1384 = vmatprep.subr.bf16.mxu0 %v336
    %1385 = vmatpush1.bf16.msra.mxu0 %v335
    %1386 = vmatprep.subr.bf16.mxu0 %v340
    %1387 = vmatpush1.bf16.msra.mxu0 %v339
    %1388 = vmatprep.subr.bf16.mxu0 0
    %1389 = vmatpush1.bf16.msra.mxu0 0
    %1390 = vmatprep.subr.bf16.mxu0 0
    %1391 = vmatpush1.bf16.msra.mxu0 0
    %1392 = vmatprep.subr.bf16.mxu0 0
    %1393 = vmatpush1.bf16.msra.mxu0 0
    %1394 = vmatprep.subr.bf16.mxu0 0
    %1395 = vmatpush1.bf16.msra.mxu0 0
    %1396 = vmatprep.subr.bf16.mxu0 0
    %1397 = vmatpush1.bf16.msra.mxu0 0
    %1398 = vmatprep.subr.bf16.mxu0 0
    %1399 = vmatpush1.bf16.msra.mxu0 0
    %1400 = vmatprep.subr.bf16.mxu0 0
    %1401 = vmatpush1.bf16.msra.mxu0 0
    %1402 = vmatprep.subr.bf16.mxu0 0
    %1403 = vmatpush1.bf16.msra.mxu0 0
    %1404 = vmatprep.mubr.bf16.mxu0 0
    %1405 = vmatmul.mubr.bf16.gmra.mrb[0].mxu0 %v1317
    %v1406 = vpop.f32.mrb[0].mxu0
    %v1407 = vadd.f32 0.0, %v1406
    %v1408 = vpop.f32.mrb[0].mxu0
    %v1409 = vadd.f32 0.0, %v1408
    %v1410 = vpop.f32.mrb[0].mxu0
    %v1411 = vadd.f32 0.0, %v1410
    %v1412 = vpop.f32.mrb[0].mxu0
    %v1413 = vadd.f32 0.0, %v1412
    %1414 = vdwg.mxu0
    %v1415 = vadd.f32 %v1321, %v1364
    %v1416 = vadd.f32 %v1322, %v1366
    %v1417 = vadd.f32 %v1323, %v1407
    %v1418 = vadd.f32 %v1324, %v1409
    %v1419 = vadd.f32 %v1325, %v1368
    %v1420 = vadd.f32 %v1326, %v1370
    %v1421 = vadd.f32 %v1327, %v1411
    %v1422 = vadd.f32 %v1328, %v1413
    %v1423 = vadd.f32 %v1415, %v807
    %v1424 = vadd.f32 %v1416, %v811
    %v1425 = vadd.f32 %v1417, %v815
    %v1426 = vadd.f32 %v1418, %v819
    %v1427 = vadd.f32 %v1419, %v807
    %v1428 = vadd.f32 %v1420, %v811
    %v1429 = vadd.f32 %v1421, %v815
    %v1430 = vadd.f32 %v1422, %v819
    %v1431 = vmul.f32 %v1423, 0.5
    %v1432 = vmul.f32 %v1427, 0.5
    %v1433 = vtanh.pop %v1431
    %v1434 = vtanh.pop %v1432
    %v1435 = vmul.f32 %v1433, 0.5
    %v1436 = vmul.f32 %v1434, 0.5
    %v1437 = vadd.f32 %v1435, 0.5
    %v1438 = vadd.f32 %v1436, 0.5
    %v1439 = vmul.f32 %v1424, 0.5
    %v1440 = vmul.f32 %v1428, 0.5
    %v1441 = vtanh.pop %v1439
    %v1442 = vtanh.pop %v1440
    %v1443 = vmul.f32 %v1441, 0.5
    %v1444 = vmul.f32 %v1442, 0.5
    %v1445 = vadd.f32 %v1443, 0.5
    %v1446 = vadd.f32 %v1444, 0.5
    %v1447 = vtanh.pop %v1425
    %v1448 = vtanh.pop %v1429
    %v1449 = vmul.f32 %v1426, 0.5
    %v1450 = vmul.f32 %v1430, 0.5
    %v1451 = vtanh.pop %v1449
    %v1452 = vtanh.pop %v1450
    %v1453 = vmul.f32 %v1451, 0.5
    %v1454 = vmul.f32 %v1452, 0.5
    %v1455 = vadd.f32 %v1453, 0.5
    %v1456 = vadd.f32 %v1454, 0.5
    %v1457 = vmul.f32 %v1445, %v1311
    %v1458 = vmul.f32 %v1446, %v1312
    %v1459 = vmul.f32 %v1437, %v1447
    %v1460 = vmul.f32 %v1438, %v1448
    %v1461 = vadd.f32 %v1457, %v1459
    %v1462 = vadd.f32 %v1458, %v1460
    %v1463 = vtanh.pop %v1461
    %v1464 = vtanh.pop %v1462
    %v1465 = vmul.f32 %v1455, %v1463
    %v1466 = vmul.f32 %v1456, %v1464
    %v1467 = vpack.c.bf16 %v1466, %v1465
    %s1468 = scalar_lea.vmem [#allocation5], 32
    %1469 = vst [vmem:[%s1468] sm:$0xff] %v1467
    %s1470 = scalar_lea.vmem [#allocation4], 320
    %v1471 = vld [vmem:[%s1470] sm:$0xff]
    %v1472 = vld [vmem:[%s1470 + $0x8] sm:$0xff]
    %v1473 = vld [vmem:[%s1470 + $0x10] sm:$0xff]
    %v1474 = vld [vmem:[%s1470 + $0x18] sm:$0xff]
    %v1475 = vld [vmem:[%s1470 + $0x20] sm:$0xff]
    %v1476 = vld [vmem:[%s1470 + $0x28] sm:$0xff]
    %v1477 = vld [vmem:[%s1470 + $0x30] sm:$0xff]
    %v1478 = vld [vmem:[%s1470 + $0x38] sm:$0xff]
    %1479 = vmatprep.subr.bf16.mxu0 %v310
    %1480 = vmatpush1.bf16.msra.mxu0 %v309
    %1481 = vmatprep.subr.bf16.mxu0 %v314
    %1482 = vmatpush1.bf16.msra.mxu0 %v313
    %1483 = vmatprep.subr.bf16.mxu0 %v318
    %1484 = vmatpush1.bf16.msra.mxu0 %v317
    %1485 = vmatprep.subr.bf16.mxu0 %v322
    %1486 = vmatpush1.bf16.msra.mxu0 %v321
    %1487 = vmatprep.subr.bf16.mxu0 %v326
    %1488 = vmatpush1.bf16.msra.mxu0 %v325
    %1489 = vmatprep.subr.bf16.mxu0 %v330
    %1490 = vmatpush1.bf16.msra.mxu0 %v329
    %1491 = vmatprep.subr.bf16.mxu0 %v334
    %1492 = vmatpush1.bf16.msra.mxu0 %v333
    %1493 = vmatprep.subr.bf16.mxu0 %v338
    %1494 = vmatpush1.bf16.msra.mxu0 %v337
    %1495 = vmatprep.subr.bf16.mxu0 0
    %1496 = vmatpush1.bf16.msra.mxu0 0
    %1497 = vmatprep.subr.bf16.mxu0 0
    %1498 = vmatpush1.bf16.msra.mxu0 0
    %1499 = vmatprep.subr.bf16.mxu0 0
    %1500 = vmatpush1.bf16.msra.mxu0 0
    %1501 = vmatprep.subr.bf16.mxu0 0
    %1502 = vmatpush1.bf16.msra.mxu0 0
    %1503 = vmatprep.subr.bf16.mxu0 0
    %1504 = vmatpush1.bf16.msra.mxu0 0
    %1505 = vmatprep.subr.bf16.mxu0 0
    %1506 = vmatpush1.bf16.msra.mxu0 0
    %1507 = vmatprep.subr.bf16.mxu0 0
    %1508 = vmatpush1.bf16.msra.mxu0 0
    %1509 = vmatprep.subr.bf16.mxu0 0
    %1510 = vmatpush1.bf16.msra.mxu0 0
    %1511 = vmatprep.mubr.bf16.mxu0 0
    %1512 = vmatmul.mubr.bf16.gmra.mrb[0].mxu0 %v1467
    %v1513 = vpop.f32.mrb[0].mxu0
    %v1514 = vadd.f32 0.0, %v1513
    %v1515 = vpop.f32.mrb[0].mxu0
    %v1516 = vadd.f32 0.0, %v1515
    %v1517 = vpop.f32.mrb[0].mxu0
    %v1518 = vadd.f32 0.0, %v1517
    %v1519 = vpop.f32.mrb[0].mxu0
    %v1520 = vadd.f32 0.0, %v1519
    %1521 = vdwg.mxu0
    %1522 = vmatprep.subr.bf16.mxu0 %v312
    %1523 = vmatpush1.bf16.msra.mxu0 %v311
    %1524 = vmatprep.subr.bf16.mxu0 %v316
    %1525 = vmatpush1.bf16.msra.mxu0 %v315
    %1526 = vmatprep.subr.bf16.mxu0 %v320
    %1527 = vmatpush1.bf16.msra.mxu0 %v319
    %1528 = vmatprep.subr.bf16.mxu0 %v324
    %1529 = vmatpush1.bf16.msra.mxu0 %v323
    %1530 = vmatprep.subr.bf16.mxu0 %v328
    %1531 = vmatpush1.bf16.msra.mxu0 %v327
    %1532 = vmatprep.subr.bf16.mxu0 %v332
    %1533 = vmatpush1.bf16.msra.mxu0 %v331
    %1534 = vmatprep.subr.bf16.mxu0 %v336
    %1535 = vmatpush1.bf16.msra.mxu0 %v335
    %1536 = vmatprep.subr.bf16.mxu0 %v340
    %1537 = vmatpush1.bf16.msra.mxu0 %v339
    %1538 = vmatprep.subr.bf16.mxu0 0
    %1539 = vmatpush1.bf16.msra.mxu0 0
    %1540 = vmatprep.subr.bf16.mxu0 0
    %1541 = vmatpush1.bf16.msra.mxu0 0
    %1542 = vmatprep.subr.bf16.mxu0 0
    %1543 = vmatpush1.bf16.msra.mxu0 0
    %1544 = vmatprep.subr.bf16.mxu0 0
    %1545 = vmatpush1.bf16.msra.mxu0 0
    %1546 = vmatprep.subr.bf16.mxu0 0
    %1547 = vmatpush1.bf16.msra.mxu0 0
    %1548 = vmatprep.subr.bf16.mxu0 0
    %1549 = vmatpush1.bf16.msra.mxu0 0
    %1550 = vmatprep.subr.bf16.mxu0 0
    %1551 = vmatpush1.bf16.msra.mxu0 0
    %1552 = vmatprep.subr.bf16.mxu0 0
    %1553 = vmatpush1.bf16.msra.mxu0 0
    %1554 = vmatprep.mubr.bf16.mxu0 0
    %1555 = vmatmul.mubr.bf16.gmra.mrb[0].mxu0 %v1467
    %v1556 = vpop.f32.mrb[0].mxu0
    %v1557 = vadd.f32 0.0, %v1556
    %v1558 = vpop.f32.mrb[0].mxu0
    %v1559 = vadd.f32 0.0, %v1558
    %v1560 = vpop.f32.mrb[0].mxu0
    %v1561 = vadd.f32 0.0, %v1560
    %v1562 = vpop.f32.mrb[0].mxu0
    %v1563 = vadd.f32 0.0, %v1562
    %1564 = vdwg.mxu0
    %v1565 = vadd.f32 %v1471, %v1514
    %v1566 = vadd.f32 %v1472, %v1516
    %v1567 = vadd.f32 %v1473, %v1557
    %v1568 = vadd.f32 %v1474, %v1559
    %v1569 = vadd.f32 %v1475, %v1518
    %v1570 = vadd.f32 %v1476, %v1520
    %v1571 = vadd.f32 %v1477, %v1561
    %v1572 = vadd.f32 %v1478, %v1563
    %v1573 = vadd.f32 %v1565, %v807
    %v1574 = vadd.f32 %v1566, %v811
    %v1575 = vadd.f32 %v1567, %v815
    %v1576 = vadd.f32 %v1568, %v819
    %v1577 = vadd.f32 %v1569, %v807
    %v1578 = vadd.f32 %v1570, %v811
    %v1579 = vadd.f32 %v1571, %v815
    %v1580 = vadd.f32 %v1572, %v819
    %v1581 = vmul.f32 %v1573, 0.5
    %v1582 = vmul.f32 %v1577, 0.5
    %v1583 = vtanh.pop %v1581
    %v1584 = vtanh.pop %v1582
    %v1585 = vmul.f32 %v1583, 0.5
    %v1586 = vmul.f32 %v1584, 0.5
    %v1587 = vadd.f32 %v1585, 0.5
    %v1588 = vadd.f32 %v1586, 0.5
    %v1589 = vmul.f32 %v1574, 0.5
    %v1590 = vmul.f32 %v1578, 0.5
    %v1591 = vtanh.pop %v1589
    %v1592 = vtanh.pop %v1590
    %v1593 = vmul.f32 %v1591, 0.5
    %v1594 = vmul.f32 %v1592, 0.5
    %v1595 = vadd.f32 %v1593, 0.5
    %v1596 = vadd.f32 %v1594, 0.5
    %v1597 = vtanh.pop %v1575
    %v1598 = vtanh.pop %v1579
    %v1599 = vmul.f32 %v1576, 0.5
    %v1600 = vmul.f32 %v1580, 0.5
    %v1601 = vtanh.pop %v1599
    %v1602 = vtanh.pop %v1600
    %v1603 = vmul.f32 %v1601, 0.5
    %v1604 = vmul.f32 %v1602, 0.5
    %v1605 = vadd.f32 %v1603, 0.5
    %v1606 = vadd.f32 %v1604, 0.5
    %v1607 = vmul.f32 %v1595, %v1461
    %v1608 = vmul.f32 %v1596, %v1462
    %v1609 = vmul.f32 %v1587, %v1597
    %v1610 = vmul.f32 %v1588, %v1598
    %v1611 = vadd.f32 %v1607, %v1609
    %v1612 = vadd.f32 %v1608, %v1610
    %v1613 = vtanh.pop %v1611
    %v1614 = vtanh.pop %v1612
    %v1615 = vmul.f32 %v1605, %v1613
    %v1616 = vmul.f32 %v1606, %v1614
    %v1617 = vpack.c.bf16 %v1616, %v1615
    %s1618 = scalar_lea.vmem [#allocation5], 40
    %1619 = vst [vmem:[%s1618] sm:$0xff] %v1617
    %s1620 = scalar_lea.vmem [#allocation4], 384
    %v1621 = vld [vmem:[%s1620] sm:$0xff]
    %v1622 = vld [vmem:[%s1620 + $0x8] sm:$0xff]
    %v1623 = vld [vmem:[%s1620 + $0x10] sm:$0xff]
    %v1624 = vld [vmem:[%s1620 + $0x18] sm:$0xff]
    %v1625 = vld [vmem:[%s1620 + $0x20] sm:$0xff]
    %v1626 = vld [vmem:[%s1620 + $0x28] sm:$0xff]
    %v1627 = vld [vmem:[%s1620 + $0x30] sm:$0xff]
    %v1628 = vld [vmem:[%s1620 + $0x38] sm:$0xff]
    %1629 = vmatprep.subr.bf16.mxu0 %v310
    %1630 = vmatpush1.bf16.msra.mxu0 %v309
    %1631 = vmatprep.subr.bf16.mxu0 %v314
    %1632 = vmatpush1.bf16.msra.mxu0 %v313
    %1633 = vmatprep.subr.bf16.mxu0 %v318
    %1634 = vmatpush1.bf16.msra.mxu0 %v317
    %1635 = vmatprep.subr.bf16.mxu0 %v322
    %1636 = vmatpush1.bf16.msra.mxu0 %v321
    %1637 = vmatprep.subr.bf16.mxu0 %v326
    %1638 = vmatpush1.bf16.msra.mxu0 %v325
    %1639 = vmatprep.subr.bf16.mxu0 %v330
    %1640 = vmatpush1.bf16.msra.mxu0 %v329
    %1641 = vmatprep.subr.bf16.mxu0 %v334
    %1642 = vmatpush1.bf16.msra.mxu0 %v333
    %1643 = vmatprep.subr.bf16.mxu0 %v338
    %1644 = vmatpush1.bf16.msra.mxu0 %v337
    %1645 = vmatprep.subr.bf16.mxu0 0
    %1646 = vmatpush1.bf16.msra.mxu0 0
    %1647 = vmatprep.subr.bf16.mxu0 0
    %1648 = vmatpush1.bf16.msra.mxu0 0
    %1649 = vmatprep.subr.bf16.mxu0 0
    %1650 = vmatpush1.bf16.msra.mxu0 0
    %1651 = vmatprep.subr.bf16.mxu0 0
    %1652 = vmatpush1.bf16.msra.mxu0 0
    %1653 = vmatprep.subr.bf16.mxu0 0
    %1654 = vmatpush1.bf16.msra.mxu0 0
    %1655 = vmatprep.subr.bf16.mxu0 0
    %1656 = vmatpush1.bf16.msra.mxu0 0
    %1657 = vmatprep.subr.bf16.mxu0 0
    %1658 = vmatpush1.bf16.msra.mxu0 0
    %1659 = vmatprep.subr.bf16.mxu0 0
    %1660 = vmatpush1.bf16.msra.mxu0 0
    %1661 = vmatprep.mubr.bf16.mxu0 0
    %1662 = vmatmul.mubr.bf16.gmra.mrb[0].mxu0 %v1617
    %v1663 = vpop.f32.mrb[0].mxu0
    %v1664 = vadd.f32 0.0, %v1663
    %v1665 = vpop.f32.mrb[0].mxu0
    %v1666 = vadd.f32 0.0, %v1665
    %v1667 = vpop.f32.mrb[0].mxu0
    %v1668 = vadd.f32 0.0, %v1667
    %v1669 = vpop.f32.mrb[0].mxu0
    %v1670 = vadd.f32 0.0, %v1669
    %1671 = vdwg.mxu0
    %1672 = vmatprep.subr.bf16.mxu0 %v312
    %1673 = vmatpush1.bf16.msra.mxu0 %v311
    %1674 = vmatprep.subr.bf16.mxu0 %v316
    %1675 = vmatpush1.bf16.msra.mxu0 %v315
    %1676 = vmatprep.subr.bf16.mxu0 %v320
    %1677 = vmatpush1.bf16.msra.mxu0 %v319
    %1678 = vmatprep.subr.bf16.mxu0 %v324
    %1679 = vmatpush1.bf16.msra.mxu0 %v323
    %1680 = vmatprep.subr.bf16.mxu0 %v328
    %1681 = vmatpush1.bf16.msra.mxu0 %v327
    %1682 = vmatprep.subr.bf16.mxu0 %v332
    %1683 = vmatpush1.bf16.msra.mxu0 %v331
    %1684 = vmatprep.subr.bf16.mxu0 %v336
    %1685 = vmatpush1.bf16.msra.mxu0 %v335
    %1686 = vmatprep.subr.bf16.mxu0 %v340
    %1687 = vmatpush1.bf16.msra.mxu0 %v339
    %1688 = vmatprep.subr.bf16.mxu0 0
    %1689 = vmatpush1.bf16.msra.mxu0 0
    %1690 = vmatprep.subr.bf16.mxu0 0
    %1691 = vmatpush1.bf16.msra.mxu0 0
    %1692 = vmatprep.subr.bf16.mxu0 0
    %1693 = vmatpush1.bf16.msra.mxu0 0
    %1694 = vmatprep.subr.bf16.mxu0 0
    %1695 = vmatpush1.bf16.msra.mxu0 0
    %1696 = vmatprep.subr.bf16.mxu0 0
    %1697 = vmatpush1.bf16.msra.mxu0 0
    %1698 = vmatprep.subr.bf16.mxu0 0
    %1699 = vmatpush1.bf16.msra.mxu0 0
    %1700 = vmatprep.subr.bf16.mxu0 0
    %1701 = vmatpush1.bf16.msra.mxu0 0
    %1702 = vmatprep.subr.bf16.mxu0 0
    %1703 = vmatpush1.bf16.msra.mxu0 0
    %1704 = vmatprep.mubr.bf16.mxu0 0
    %1705 = vmatmul.mubr.bf16.gmra.mrb[0].mxu0 %v1617
    %v1706 = vpop.f32.mrb[0].mxu0
    %v1707 = vadd.f32 0.0, %v1706
    %v1708 = vpop.f32.mrb[0].mxu0
    %v1709 = vadd.f32 0.0, %v1708
    %v1710 = vpop.f32.mrb[0].mxu0
    %v1711 = vadd.f32 0.0, %v1710
    %v1712 = vpop.f32.mrb[0].mxu0
    %v1713 = vadd.f32 0.0, %v1712
    %1714 = vdwg.mxu0
    %v1715 = vadd.f32 %v1621, %v1664
    %v1716 = vadd.f32 %v1622, %v1666
    %v1717 = vadd.f32 %v1623, %v1707
    %v1718 = vadd.f32 %v1624, %v1709
    %v1719 = vadd.f32 %v1625, %v1668
    %v1720 = vadd.f32 %v1626, %v1670
    %v1721 = vadd.f32 %v1627, %v1711
    %v1722 = vadd.f32 %v1628, %v1713
    %v1723 = vadd.f32 %v1715, %v807
    %v1724 = vadd.f32 %v1716, %v811
    %v1725 = vadd.f32 %v1717, %v815
    %v1726 = vadd.f32 %v1718, %v819
    %v1727 = vadd.f32 %v1719, %v807
    %v1728 = vadd.f32 %v1720, %v811
    %v1729 = vadd.f32 %v1721, %v815
    %v1730 = vadd.f32 %v1722, %v819
    %v1731 = vmul.f32 %v1723, 0.5
    %v1732 = vmul.f32 %v1727, 0.5
    %v1733 = vtanh.pop %v1731
    %v1734 = vtanh.pop %v1732
    %v1735 = vmul.f32 %v1733, 0.5
    %v1736 = vmul.f32 %v1734, 0.5
    %v1737 = vadd.f32 %v1735, 0.5
    %v1738 = vadd.f32 %v1736, 0.5
    %v1739 = vmul.f32 %v1724, 0.5
    %v1740 = vmul.f32 %v1728, 0.5
    %v1741 = vtanh.pop %v1739
    %v1742 = vtanh.pop %v1740
    %v1743 = vmul.f32 %v1741, 0.5
    %v1744 = vmul.f32 %v1742, 0.5
    %v1745 = vadd.f32 %v1743, 0.5
    %v1746 = vadd.f32 %v1744, 0.5
    %v1747 = vtanh.pop %v1725
    %v1748 = vtanh.pop %v1729
    %v1749 = vmul.f32 %v1726, 0.5
    %v1750 = vmul.f32 %v1730, 0.5
    %v1751 = vtanh.pop %v1749
    %v1752 = vtanh.pop %v1750
    %v1753 = vmul.f32 %v1751, 0.5
    %v1754 = vmul.f32 %v1752, 0.5
    %v1755 = vadd.f32 %v1753, 0.5
    %v1756 = vadd.f32 %v1754, 0.5
    %v1757 = vmul.f32 %v1745, %v1611
    %v1758 = vmul.f32 %v1746, %v1612
    %v1759 = vmul.f32 %v1737, %v1747
    %v1760 = vmul.f32 %v1738, %v1748
    %v1761 = vadd.f32 %v1757, %v1759
    %v1762 = vadd.f32 %v1758, %v1760
    %v1763 = vtanh.pop %v1761
    %v1764 = vtanh.pop %v1762
    %v1765 = vmul.f32 %v1755, %v1763
    %v1766 = vmul.f32 %v1756, %v1764
    %v1767 = vpack.c.bf16 %v1766, %v1765
    %s1768 = scalar_lea.vmem [#allocation5], 48
    %1769 = vst [vmem:[%s1768] sm:$0xff] %v1767
    %s1770 = scalar_lea.vmem [#allocation4], 448
    %v1771 = vld [vmem:[%s1770] sm:$0xff]
    %v1772 = vld [vmem:[%s1770 + $0x8] sm:$0xff]
    %v1773 = vld [vmem:[%s1770 + $0x10] sm:$0xff]
    %v1774 = vld [vmem:[%s1770 + $0x18] sm:$0xff]
    %v1775 = vld [vmem:[%s1770 + $0x20] sm:$0xff]
    %v1776 = vld [vmem:[%s1770 + $0x28] sm:$0xff]
    %v1777 = vld [vmem:[%s1770 + $0x30] sm:$0xff]
    %v1778 = vld [vmem:[%s1770 + $0x38] sm:$0xff]
    %1779 = vmatprep.subr.bf16.mxu0 %v310
    %1780 = vmatpush1.bf16.msra.mxu0 %v309
    %1781 = vmatprep.subr.bf16.mxu0 %v314
    %1782 = vmatpush1.bf16.msra.mxu0 %v313
    %1783 = vmatprep.subr.bf16.mxu0 %v318
    %1784 = vmatpush1.bf16.msra.mxu0 %v317
    %1785 = vmatprep.subr.bf16.mxu0 %v322
    %1786 = vmatpush1.bf16.msra.mxu0 %v321
    %1787 = vmatprep.subr.bf16.mxu0 %v326
    %1788 = vmatpush1.bf16.msra.mxu0 %v325
    %1789 = vmatprep.subr.bf16.mxu0 %v330
    %1790 = vmatpush1.bf16.msra.mxu0 %v329
    %1791 = vmatprep.subr.bf16.mxu0 %v334
    %1792 = vmatpush1.bf16.msra.mxu0 %v333
    %1793 = vmatprep.subr.bf16.mxu0 %v338
    %1794 = vmatpush1.bf16.msra.mxu0 %v337
    %1795 = vmatprep.subr.bf16.mxu0 0
    %1796 = vmatpush1.bf16.msra.mxu0 0
    %1797 = vmatprep.subr.bf16.mxu0 0
    %1798 = vmatpush1.bf16.msra.mxu0 0
    %1799 = vmatprep.subr.bf16.mxu0 0
    %1800 = vmatpush1.bf16.msra.mxu0 0
    %1801 = vmatprep.subr.bf16.mxu0 0
    %1802 = vmatpush1.bf16.msra.mxu0 0
    %1803 = vmatprep.subr.bf16.mxu0 0
    %1804 = vmatpush1.bf16.msra.mxu0 0
    %1805 = vmatprep.subr.bf16.mxu0 0
    %1806 = vmatpush1.bf16.msra.mxu0 0
    %1807 = vmatprep.subr.bf16.mxu0 0
    %1808 = vmatpush1.bf16.msra.mxu0 0
    %1809 = vmatprep.subr.bf16.mxu0 0
    %1810 = vmatpush1.bf16.msra.mxu0 0
    %1811 = vmatprep.mubr.bf16.mxu0 0
    %1812 = vmatmul.mubr.bf16.gmra.mrb[0].mxu0 %v1767
    %v1813 = vpop.f32.mrb[0].mxu0
    %v1814 = vadd.f32 0.0, %v1813
    %v1815 = vpop.f32.mrb[0].mxu0
    %v1816 = vadd.f32 0.0, %v1815
    %v1817 = vpop.f32.mrb[0].mxu0
    %v1818 = vadd.f32 0.0, %v1817
    %v1819 = vpop.f32.mrb[0].mxu0
    %v1820 = vadd.f32 0.0, %v1819
    %1821 = vdwg.mxu0
    %1822 = vmatprep.subr.bf16.mxu0 %v312
    %1823 = vmatpush1.bf16.msra.mxu0 %v311
    %1824 = vmatprep.subr.bf16.mxu0 %v316
    %1825 = vmatpush1.bf16.msra.mxu0 %v315
    %1826 = vmatprep.subr.bf16.mxu0 %v320
    %1827 = vmatpush1.bf16.msra.mxu0 %v319
    %1828 = vmatprep.subr.bf16.mxu0 %v324
    %1829 = vmatpush1.bf16.msra.mxu0 %v323
    %1830 = vmatprep.subr.bf16.mxu0 %v328
    %1831 = vmatpush1.bf16.msra.mxu0 %v327
    %1832 = vmatprep.subr.bf16.mxu0 %v332
    %1833 = vmatpush1.bf16.msra.mxu0 %v331
    %1834 = vmatprep.subr.bf16.mxu0 %v336
    %1835 = vmatpush1.bf16.msra.mxu0 %v335
    %1836 = vmatprep.subr.bf16.mxu0 %v340
    %1837 = vmatpush1.bf16.msra.mxu0 %v339
    %1838 = vmatprep.subr.bf16.mxu0 0
    %1839 = vmatpush1.bf16.msra.mxu0 0
    %1840 = vmatprep.subr.bf16.mxu0 0
    %1841 = vmatpush1.bf16.msra.mxu0 0
    %1842 = vmatprep.subr.bf16.mxu0 0
    %1843 = vmatpush1.bf16.msra.mxu0 0
    %1844 = vmatprep.subr.bf16.mxu0 0
    %1845 = vmatpush1.bf16.msra.mxu0 0
    %1846 = vmatprep.subr.bf16.mxu0 0
    %1847 = vmatpush1.bf16.msra.mxu0 0
    %1848 = vmatprep.subr.bf16.mxu0 0
    %1849 = vmatpush1.bf16.msra.mxu0 0
    %1850 = vmatprep.subr.bf16.mxu0 0
    %1851 = vmatpush1.bf16.msra.mxu0 0
    %1852 = vmatprep.subr.bf16.mxu0 0
    %1853 = vmatpush1.bf16.msra.mxu0 0
    %1854 = vmatprep.mubr.bf16.mxu0 0
    %1855 = vmatmul.mubr.bf16.gmra.mrb[0].mxu0 %v1767
    %v1856 = vpop.f32.mrb[0].mxu0
    %v1857 = vadd.f32 0.0, %v1856
    %v1858 = vpop.f32.mrb[0].mxu0
    %v1859 = vadd.f32 0.0, %v1858
    %v1860 = vpop.f32.mrb[0].mxu0
    %v1861 = vadd.f32 0.0, %v1860
    %v1862 = vpop.f32.mrb[0].mxu0
    %v1863 = vadd.f32 0.0, %v1862
    %1864 = vdwg.mxu0
    %v1865 = vadd.f32 %v1771, %v1814
    %v1866 = vadd.f32 %v1772, %v1816
    %v1867 = vadd.f32 %v1773, %v1857
    %v1868 = vadd.f32 %v1774, %v1859
    %v1869 = vadd.f32 %v1775, %v1818
    %v1870 = vadd.f32 %v1776, %v1820
    %v1871 = vadd.f32 %v1777, %v1861
    %v1872 = vadd.f32 %v1778, %v1863
    %v1873 = vadd.f32 %v1865, %v807
    %v1874 = vadd.f32 %v1866, %v811
    %v1875 = vadd.f32 %v1867, %v815
    %v1876 = vadd.f32 %v1868, %v819
    %v1877 = vadd.f32 %v1869, %v807
    %v1878 = vadd.f32 %v1870, %v811
    %v1879 = vadd.f32 %v1871, %v815
    %v1880 = vadd.f32 %v1872, %v819
    %v1881 = vmul.f32 %v1873, 0.5
    %v1882 = vmul.f32 %v1877, 0.5
    %v1883 = vtanh.pop %v1881
    %v1884 = vtanh.pop %v1882
    %v1885 = vmul.f32 %v1883, 0.5
    %v1886 = vmul.f32 %v1884, 0.5
    %v1887 = vadd.f32 %v1885, 0.5
    %v1888 = vadd.f32 %v1886, 0.5
    %v1889 = vmul.f32 %v1874, 0.5
    %v1890 = vmul.f32 %v1878, 0.5
    %v1891 = vtanh.pop %v1889
    %v1892 = vtanh.pop %v1890
    %v1893 = vmul.f32 %v1891, 0.5
    %v1894 = vmul.f32 %v1892, 0.5
    %v1895 = vadd.f32 %v1893, 0.5
    %v1896 = vadd.f32 %v1894, 0.5
    %v1897 = vtanh.pop %v1875
    %v1898 = vtanh.pop %v1879
    %v1899 = vmul.f32 %v1876, 0.5
    %v1900 = vmul.f32 %v1880, 0.5
    %v1901 = vtanh.pop %v1899
    %v1902 = vtanh.pop %v1900
    %v1903 = vmul.f32 %v1901, 0.5
    %v1904 = vmul.f32 %v1902, 0.5
    %v1905 = vadd.f32 %v1903, 0.5
    %v1906 = vadd.f32 %v1904, 0.5
    %v1907 = vmul.f32 %v1895, %v1761
    %v1908 = vmul.f32 %v1896, %v1762
    %v1909 = vmul.f32 %v1887, %v1897
    %v1910 = vmul.f32 %v1888, %v1898
    %v1911 = vadd.f32 %v1907, %v1909
    %v1912 = vadd.f32 %v1908, %v1910
    %v1913 = vtanh.pop %v1911
    %v1914 = vtanh.pop %v1912
    %v1915 = vmul.f32 %v1905, %v1913
    %v1916 = vmul.f32 %v1906, %v1914
    %v1917 = vpack.c.bf16 %v1916, %v1915
    %s1918 = scalar_lea.vmem [#allocation5], 56
    %1919 = vst [vmem:[%s1918] sm:$0xff] %v1917
    %1920 = vst [vmem:[#allocation16] sm:$0xff] %v1915
    %1921 = vst [vmem:[#allocation16 + $0x8] sm:$0xff] %v1916
    %1922 = vst [vmem:[#allocation18] sm:$0xff] %v1911
    %1923 = vst [vmem:[#allocation18 + $0x8] sm:$0xff] %v1912
    // Predicated region
    $region50: #{tpu_custom_call.1} parent=1 // pred_check
      %p1924 = pneg %p86
    $region51: #{tpu_custom_call.1} parent=1 // pred_check_branch
      %1926 = sbr.rel (%p1924) target = $region53
    $region52: #{tpu_custom_call.1} parent=1 // pred_region
      %s1927 = scalar_lea.sflag [#allocation6], 1
      %s1928 = smul.u32 4, 16
      %s1929 = smul.u32 %s1928, 4
      %s1930 = sshll.u32 %s1929, 4
      %1931 = dma.done %s1927, %s1930
      %s1932 = scalar_lea.sflag [#allocation6], 3
      %s1933 = sshll.u32 %s1929, 4
      %1934 = dma.done %s1932, %s1933
    $region53: #{tpu_custom_call.1} parent=1 // pred_fallthru
      _
    %s1935 = scalar_lea.vmem [#allocation2], 256
    %v1936 = vld [vmem:[%s1935] sm:$0xff]
    %v1937 = vld [vmem:[%s1935 + $0x8] sm:$0xff]
    %v1938 = vld [vmem:[%s1935 + $0x10] sm:$0xff]
    %v1939 = vld [vmem:[%s1935 + $0x18] sm:$0xff]
    %v1940 = vld [vmem:[%s1935 + $0x20] sm:$0xff]
    %v1941 = vld [vmem:[%s1935 + $0x28] sm:$0xff]
    %v1942 = vld [vmem:[%s1935 + $0x30] sm:$0xff]
    %v1943 = vld [vmem:[%s1935 + $0x38] sm:$0xff]
    %v1944 = vld [vmem:[%s1935 + $0x40] sm:$0xff]
    %v1945 = vld [vmem:[%s1935 + $0x48] sm:$0xff]
    %v1946 = vld [vmem:[%s1935 + $0x50] sm:$0xff]
    %v1947 = vld [vmem:[%s1935 + $0x58] sm:$0xff]
    %v1948 = vld [vmem:[%s1935 + $0x60] sm:$0xff]
    %v1949 = vld [vmem:[%s1935 + $0x68] sm:$0xff]
    %v1950 = vld [vmem:[%s1935 + $0x70] sm:$0xff]
    %v1951 = vld [vmem:[%s1935 + $0x78] sm:$0xff]
    %v1952 = vld [vmem:[%s1935 + $0x80] sm:$0xff]
    %v1953 = vld [vmem:[%s1935 + $0x88] sm:$0xff]
    %v1954 = vld [vmem:[%s1935 + $0x90] sm:$0xff]
    %v1955 = vld [vmem:[%s1935 + $0x98] sm:$0xff]
    %v1956 = vld [vmem:[%s1935 + $0xa0] sm:$0xff]
    %v1957 = vld [vmem:[%s1935 + $0xa8] sm:$0xff]
    %v1958 = vld [vmem:[%s1935 + $0xb0] sm:$0xff]
    %v1959 = vld [vmem:[%s1935 + $0xb8] sm:$0xff]
    %v1960 = vld [vmem:[%s1935 + $0xc0] sm:$0xff]
    %v1961 = vld [vmem:[%s1935 + $0xc8] sm:$0xff]
    %v1962 = vld [vmem:[%s1935 + $0xd0] sm:$0xff]
    %v1963 = vld [vmem:[%s1935 + $0xd8] sm:$0xff]
    %v1964 = vld [vmem:[%s1935 + $0xe0] sm:$0xff]
    %v1965 = vld [vmem:[%s1935 + $0xe8] sm:$0xff]
    %v1966 = vld [vmem:[%s1935 + $0xf0] sm:$0xff]
    %v1967 = vld [vmem:[%s1935 + $0xf8] sm:$0xff]
    %s1968 = scalar_lea.vmem [#allocation3], 256
    %v1969 = vld [vmem:[%s1968] sm:$0xff]
    %v1970 = vld [vmem:[%s1968 + $0x8] sm:$0xff]
    %v1971 = vld [vmem:[%s1968 + $0x10] sm:$0xff]
    %v1972 = vld [vmem:[%s1968 + $0x18] sm:$0xff]
    %v1973 = vld [vmem:[%s1968 + $0x20] sm:$0xff]
    %v1974 = vld [vmem:[%s1968 + $0x28] sm:$0xff]
    %v1975 = vld [vmem:[%s1968 + $0x30] sm:$0xff]
    %v1976 = vld [vmem:[%s1968 + $0x38] sm:$0xff]
    %v1977 = vld [vmem:[%s1968 + $0x40] sm:$0xff]
    %v1978 = vld [vmem:[%s1968 + $0x48] sm:$0xff]
    %v1979 = vld [vmem:[%s1968 + $0x50] sm:$0xff]
    %v1980 = vld [vmem:[%s1968 + $0x58] sm:$0xff]
    %v1981 = vld [vmem:[%s1968 + $0x60] sm:$0xff]
    %v1982 = vld [vmem:[%s1968 + $0x68] sm:$0xff]
    %v1983 = vld [vmem:[%s1968 + $0x70] sm:$0xff]
    %v1984 = vld [vmem:[%s1968 + $0x78] sm:$0xff]
    %v1985 = vld [vmem:[%s1968 + $0x80] sm:$0xff]
    %v1986 = vld [vmem:[%s1968 + $0x88] sm:$0xff]
    %v1987 = vld [vmem:[%s1968 + $0x90] sm:$0xff]
    %v1988 = vld [vmem:[%s1968 + $0x98] sm:$0xff]
    %v1989 = vld [vmem:[%s1968 + $0xa0] sm:$0xff]
    %v1990 = vld [vmem:[%s1968 + $0xa8] sm:$0xff]
    %v1991 = vld [vmem:[%s1968 + $0xb0] sm:$0xff]
    %v1992 = vld [vmem:[%s1968 + $0xb8] sm:$0xff]
    %v1993 = vld [vmem:[%s1968 + $0xc0] sm:$0xff]
    %v1994 = vld [vmem:[%s1968 + $0xc8] sm:$0xff]
    %v1995 = vld [vmem:[%s1968 + $0xd0] sm:$0xff]
    %v1996 = vld [vmem:[%s1968 + $0xd8] sm:$0xff]
    %v1997 = vld [vmem:[%s1968 + $0xe0] sm:$0xff]
    %v1998 = vld [vmem:[%s1968 + $0xe8] sm:$0xff]
    %v1999 = vld [vmem:[%s1968 + $0xf0] sm:$0xff]
    %v2000 = vld [vmem:[%s1968 + $0xf8] sm:$0xff]
    %s2001 = scalar_lea.vmem %s3, 4
    %v2002 = vld [vmem:[%s2001] sm:$0xf]
    %v2003 = vld [vmem:[#allocation5] sm:$0xff]
    %v2004 = vld [vmem:[#allocation5 + $0x8] sm:$0xff]
    %v2005 = vld [vmem:[#allocation5 + $0x10] sm:$0xff]
    %v2006 = vld [vmem:[#allocation5 + $0x18] sm:$0xff]
    %v2007 = vld [vmem:[#allocation5 + $0x20] sm:$0xff]
    %v2008 = vld [vmem:[#allocation5 + $0x28] sm:$0xff]
    %v2009 = vld [vmem:[#allocation5 + $0x30] sm:$0xff]
    %v2010 = vld [vmem:[#allocation5 + $0x38] sm:$0xff]
    %2011 = vmatprep.subr.bf16.mxu0 %v1937
    %2012 = vmatpush1.bf16.msra.mxu0 %v1936
    %2013 = vmatprep.subr.bf16.mxu0 %v1941
    %2014 = vmatpush1.bf16.msra.mxu0 %v1940
    %2015 = vmatprep.subr.bf16.mxu0 %v1945
    %2016 = vmatpush1.bf16.msra.mxu0 %v1944
    %2017 = vmatprep.subr.bf16.mxu0 %v1949
    %2018 = vmatpush1.bf16.msra.mxu0 %v1948
    %2019 = vmatprep.subr.bf16.mxu0 %v1953
    %2020 = vmatpush1.bf16.msra.mxu0 %v1952
    %2021 = vmatprep.subr.bf16.mxu0 %v1957
    %2022 = vmatpush1.bf16.msra.mxu0 %v1956
    %2023 = vmatprep.subr.bf16.mxu0 %v1961
    %2024 = vmatpush1.bf16.msra.mxu0 %v1960
    %2025 = vmatprep.subr.bf16.mxu0 %v1965
    %2026 = vmatpush1.bf16.msra.mxu0 %v1964
    %2027 = vmatprep.subr.bf16.mxu0 0
    %2028 = vmatpush1.bf16.msra.mxu0 0
    %2029 = vmatprep.subr.bf16.mxu0 0
    %2030 = vmatpush1.bf16.msra.mxu0 0
    %2031 = vmatprep.subr.bf16.mxu0 0
    %2032 = vmatpush1.bf16.msra.mxu0 0
    %2033 = vmatprep.subr.bf16.mxu0 0
    %2034 = vmatpush1.bf16.msra.mxu0 0
    %2035 = vmatprep.subr.bf16.mxu0 0
    %2036 = vmatpush1.bf16.msra.mxu0 0
    %2037 = vmatprep.subr.bf16.mxu0 0
    %2038 = vmatpush1.bf16.msra.mxu0 0
    %2039 = vmatprep.subr.bf16.mxu0 0
    %2040 = vmatpush1.bf16.msra.mxu0 0
    %2041 = vmatprep.subr.bf16.mxu0 0
    %2042 = vmatpush1.bf16.msra.mxu0 0
    %2043 = vmatprep.mubr.bf16.mxu0 0
    %2044 = vmatmul.mubr.bf16.gmra.mrb[0].mxu0 %v2003
    %v2045 = vpop.f32.mrb[0].mxu0
    %v2046 = vadd.f32 0.0, %v2045
    %v2047 = vpop.f32.mrb[0].mxu0
    %v2048 = vadd.f32 0.0, %v2047
    %v2049 = vpop.f32.mrb[0].mxu0
    %v2050 = vadd.f32 0.0, %v2049
    %v2051 = vpop.f32.mrb[0].mxu0
    %v2052 = vadd.f32 0.0, %v2051
    %2053 = vmatprep.mubr.bf16.mxu0 0
    %2054 = vmatmul.mubr.bf16.gmra.mrb[0].mxu0 %v2004
    %v2055 = vpop.f32.mrb[0].mxu0
    %v2056 = vadd.f32 0.0, %v2055
    %v2057 = vpop.f32.mrb[0].mxu0
    %v2058 = vadd.f32 0.0, %v2057
    %v2059 = vpop.f32.mrb[0].mxu0
    %v2060 = vadd.f32 0.0, %v2059
    %v2061 = vpop.f32.mrb[0].mxu0
    %v2062 = vadd.f32 0.0, %v2061
    %2063 = vmatprep.mubr.bf16.mxu0 0
    %2064 = vmatmul.mubr.bf16.gmra.mrb[0].mxu0 %v2005
    %v2065 = vpop.f32.mrb[0].mxu0
    %v2066 = vadd.f32 0.0, %v2065
    %v2067 = vpop.f32.mrb[0].mxu0
    %v2068 = vadd.f32 0.0, %v2067
    %v2069 = vpop.f32.mrb[0].mxu0
    %v2070 = vadd.f32 0.0, %v2069
    %v2071 = vpop.f32.mrb[0].mxu0
    %v2072 = vadd.f32 0.0, %v2071
    %2073 = vmatprep.mubr.bf16.mxu0 0
    %2074 = vmatmul.mubr.bf16.gmra.mrb[0].mxu0 %v2006
    %v2075 = vpop.f32.mrb[0].mxu0
    %v2076 = vadd.f32 0.0, %v2075
    %v2077 = vpop.f32.mrb[0].mxu0
    %v2078 = vadd.f32 0.0, %v2077
    %v2079 = vpop.f32.mrb[0].mxu0
    %v2080 = vadd.f32 0.0, %v2079
    %v2081 = vpop.f32.mrb[0].mxu0
    %v2082 = vadd.f32 0.0, %v2081
    %2083 = vmatprep.mubr.bf16.mxu0 0
    %2084 = vmatmul.mubr.bf16.gmra.mrb[0].mxu0 %v2007
    %v2085 = vpop.f32.mrb[0].mxu0
    %v2086 = vadd.f32 0.0, %v2085
    %v2087 = vpop.f32.mrb[0].mxu0
    %v2088 = vadd.f32 0.0, %v2087
    %v2089 = vpop.f32.mrb[0].mxu0
    %v2090 = vadd.f32 0.0, %v2089
    %v2091 = vpop.f32.mrb[0].mxu0
    %v2092 = vadd.f32 0.0, %v2091
    %2093 = vmatprep.mubr.bf16.mxu0 0
    %2094 = vmatmul.mubr.bf16.gmra.mrb[0].mxu0 %v2008
    %v2095 = vpop.f32.mrb[0].mxu0
    %v2096 = vadd.f32 0.0, %v2095
    %v2097 = vpop.f32.mrb[0].mxu0
    %v2098 = vadd.f32 0.0, %v2097
    %v2099 = vpop.f32.mrb[0].mxu0
    %v2100 = vadd.f32 0.0, %v2099
    %v2101 = vpop.f32.mrb[0].mxu0
    %v2102 = vadd.f32 0.0, %v2101
    %2103 = vmatprep.mubr.bf16.mxu0 0
    %2104 = vmatmul.mubr.bf16.gmra.mrb[0].mxu0 %v2009
    %v2105 = vpop.f32.mrb[0].mxu0
    %v2106 = vadd.f32 0.0, %v2105
    %v2107 = vpop.f32.mrb[0].mxu0
    %v2108 = vadd.f32 0.0, %v2107
    %v2109 = vpop.f32.mrb[0].mxu0
    %v2110 = vadd.f32 0.0, %v2109
    %v2111 = vpop.f32.mrb[0].mxu0
    %v2112 = vadd.f32 0.0, %v2111
    %2113 = vmatprep.mubr.bf16.mxu0 0
    %2114 = vmatmul.mubr.bf16.gmra.mrb[0].mxu0 %v2010
    %v2115 = vpop.f32.mrb[0].mxu0
    %v2116 = vadd.f32 0.0, %v2115
    %v2117 = vpop.f32.mrb[0].mxu0
    %v2118 = vadd.f32 0.0, %v2117
    %v2119 = vpop.f32.mrb[0].mxu0
    %v2120 = vadd.f32 0.0, %v2119
    %v2121 = vpop.f32.mrb[0].mxu0
    %v2122 = vadd.f32 0.0, %v2121
    %2123 = vdwg.mxu0
    %2124 = vmatprep.subr.bf16.mxu0 %v1939
    %2125 = vmatpush1.bf16.msra.mxu0 %v1938
    %2126 = vmatprep.subr.bf16.mxu0 %v1943
    %2127 = vmatpush1.bf16.msra.mxu0 %v1942
    %2128 = vmatprep.subr.bf16.mxu0 %v1947
    %2129 = vmatpush1.bf16.msra.mxu0 %v1946
    %2130 = vmatprep.subr.bf16.mxu0 %v1951
    %2131 = vmatpush1.bf16.msra.mxu0 %v1950
    %2132 = vmatprep.subr.bf16.mxu0 %v1955
    %2133 = vmatpush1.bf16.msra.mxu0 %v1954
    %2134 = vmatprep.subr.bf16.mxu0 %v1959
    %2135 = vmatpush1.bf16.msra.mxu0 %v1958
    %2136 = vmatprep.subr.bf16.mxu0 %v1963
    %2137 = vmatpush1.bf16.msra.mxu0 %v1962
    %2138 = vmatprep.subr.bf16.mxu0 %v1967
    %2139 = vmatpush1.bf16.msra.mxu0 %v1966
    %2140 = vmatprep.subr.bf16.mxu0 0
    %2141 = vmatpush1.bf16.msra.mxu0 0
    %2142 = vmatprep.subr.bf16.mxu0 0
    %2143 = vmatpush1.bf16.msra.mxu0 0
    %2144 = vmatprep.subr.bf16.mxu0 0
    %2145 = vmatpush1.bf16.msra.mxu0 0
    %2146 = vmatprep.subr.bf16.mxu0 0
    %2147 = vmatpush1.bf16.msra.mxu0 0
    %2148 = vmatprep.subr.bf16.mxu0 0
    %2149 = vmatpush1.bf16.msra.mxu0 0
    %2150 = vmatprep.subr.bf16.mxu0 0
    %2151 = vmatpush1.bf16.msra.mxu0 0
    %2152 = vmatprep.subr.bf16.mxu0 0
    %2153 = vmatpush1.bf16.msra.mxu0 0
    %2154 = vmatprep.subr.bf16.mxu0 0
    %2155 = vmatpush1.bf16.msra.mxu0 0
    %2156 = vmatprep.mubr.bf16.mxu0 0
    %2157 = vmatmul.mubr.bf16.gmra.mrb[0].mxu0 %v2003
    %v2158 = vpop.f32.mrb[0].mxu0
    %v2159 = vadd.f32 0.0, %v2158
    %v2160 = vpop.f32.mrb[0].mxu0
    %v2161 = vadd.f32 0.0, %v2160
    %v2162 = vpop.f32.mrb[0].mxu0
    %v2163 = vadd.f32 0.0, %v2162
    %v2164 = vpop.f32.mrb[0].mxu0
    %v2165 = vadd.f32 0.0, %v2164
    %2166 = vmatprep.mubr.bf16.mxu0 0
    %2167 = vmatmul.mubr.bf16.gmra.mrb[0].mxu0 %v2004
    %v2168 = vpop.f32.mrb[0].mxu0
    %v2169 = vadd.f32 0.0, %v2168
    %v2170 = vpop.f32.mrb[0].mxu0
    %v2171 = vadd.f32 0.0, %v2170
    %v2172 = vpop.f32.mrb[0].mxu0
    %v2173 = vadd.f32 0.0, %v2172
    %v2174 = vpop.f32.mrb[0].mxu0
    %v2175 = vadd.f32 0.0, %v2174
    %2176 = vmatprep.mubr.bf16.mxu0 0
    %2177 = vmatmul.mubr.bf16.gmra.mrb[0].mxu0 %v2005
    %v2178 = vpop.f32.mrb[0].mxu0
    %v2179 = vadd.f32 0.0, %v2178
    %v2180 = vpop.f32.mrb[0].mxu0
    %v2181 = vadd.f32 0.0, %v2180
    %v2182 = vpop.f32.mrb[0].mxu0
    %v2183 = vadd.f32 0.0, %v2182
    %v2184 = vpop.f32.mrb[0].mxu0
    %v2185 = vadd.f32 0.0, %v2184
    %2186 = vmatprep.mubr.bf16.mxu0 0
    %2187 = vmatmul.mubr.bf16.gmra.mrb[0].mxu0 %v2006
    %v2188 = vpop.f32.mrb[0].mxu0
    %v2189 = vadd.f32 0.0, %v2188
    %v2190 = vpop.f32.mrb[0].mxu0
    %v2191 = vadd.f32 0.0, %v2190
    %v2192 = vpop.f32.mrb[0].mxu0
    %v2193 = vadd.f32 0.0, %v2192
    %v2194 = vpop.f32.mrb[0].mxu0
    %v2195 = vadd.f32 0.0, %v2194
    %2196 = vmatprep.mubr.bf16.mxu0 0
    %2197 = vmatmul.mubr.bf16.gmra.mrb[0].mxu0 %v2007
    %v2198 = vpop.f32.mrb[0].mxu0
    %v2199 = vadd.f32 0.0, %v2198
    %v2200 = vpop.f32.mrb[0].mxu0
    %v2201 = vadd.f32 0.0, %v2200
    %v2202 = vpop.f32.mrb[0].mxu0
    %v2203 = vadd.f32 0.0, %v2202
    %v2204 = vpop.f32.mrb[0].mxu0
    %v2205 = vadd.f32 0.0, %v2204
    %2206 = vmatprep.mubr.bf16.mxu0 0
    %2207 = vmatmul.mubr.bf16.gmra.mrb[0].mxu0 %v2008
    %v2208 = vpop.f32.mrb[0].mxu0
    %v2209 = vadd.f32 0.0, %v2208
    %v2210 = vpop.f32.mrb[0].mxu0
    %v2211 = vadd.f32 0.0, %v2210
    %v2212 = vpop.f32.mrb[0].mxu0
    %v2213 = vadd.f32 0.0, %v2212
    %v2214 = vpop.f32.mrb[0].mxu0
    %v2215 = vadd.f32 0.0, %v2214
    %2216 = vmatprep.mubr.bf16.mxu0 0
    %2217 = vmatmul.mubr.bf16.gmra.mrb[0].mxu0 %v2009
    %v2218 = vpop.f32.mrb[0].mxu0
    %v2219 = vadd.f32 0.0, %v2218
    %v2220 = vpop.f32.mrb[0].mxu0
    %v2221 = vadd.f32 0.0, %v2220
    %v2222 = vpop.f32.mrb[0].mxu0
    %v2223 = vadd.f32 0.0, %v2222
    %v2224 = vpop.f32.mrb[0].mxu0
    %v2225 = vadd.f32 0.0, %v2224
    %2226 = vmatprep.mubr.bf16.mxu0 0
    %2227 = vmatmul.mubr.bf16.gmra.mrb[0].mxu0 %v2010
    %v2228 = vpop.f32.mrb[0].mxu0
    %v2229 = vadd.f32 0.0, %v2228
    %v2230 = vpop.f32.mrb[0].mxu0
    %v2231 = vadd.f32 0.0, %v2230
    %v2232 = vpop.f32.mrb[0].mxu0
    %v2233 = vadd.f32 0.0, %v2232
    %v2234 = vpop.f32.mrb[0].mxu0
    %v2235 = vadd.f32 0.0, %v2234
    %2236 = vdwg.mxu0
    %2237 = vst [vmem:[#allocation4] sm:$0xff] %v2046
    %2238 = vst [vmem:[#allocation4 + $0x8] sm:$0xff] %v2048
    %2239 = vst [vmem:[#allocation4 + $0x10] sm:$0xff] %v2159
    %2240 = vst [vmem:[#allocation4 + $0x18] sm:$0xff] %v2161
    %2241 = vst [vmem:[#allocation4 + $0x20] sm:$0xff] %v2050
    %2242 = vst [vmem:[#allocation4 + $0x28] sm:$0xff] %v2052
    %2243 = vst [vmem:[#allocation4 + $0x30] sm:$0xff] %v2163
    %2244 = vst [vmem:[#allocation4 + $0x38] sm:$0xff] %v2165
    %2245 = vst [vmem:[#allocation4 + $0x40] sm:$0xff] %v2056
    %2246 = vst [vmem:[#allocation4 + $0x48] sm:$0xff] %v2058
    %2247 = vst [vmem:[#allocation4 + $0x50] sm:$0xff] %v2169
    %2248 = vst [vmem:[#allocation4 + $0x58] sm:$0xff] %v2171
    %2249 = vst [vmem:[#allocation4 + $0x60] sm:$0xff] %v2060
    %2250 = vst [vmem:[#allocation4 + $0x68] sm:$0xff] %v2062
    %2251 = vst [vmem:[#allocation4 + $0x70] sm:$0xff] %v2173
    %2252 = vst [vmem:[#allocation4 + $0x78] sm:$0xff] %v2175
    %2253 = vst [vmem:[#allocation4 + $0x80] sm:$0xff] %v2066
    %2254 = vst [vmem:[#allocation4 + $0x88] sm:$0xff] %v2068
    %2255 = vst [vmem:[#allocation4 + $0x90] sm:$0xff] %v2179
    %2256 = vst [vmem:[#allocation4 + $0x98] sm:$0xff] %v2181
    %2257 = vst [vmem:[#allocation4 + $0xa0] sm:$0xff] %v2070
    %2258 = vst [vmem:[#allocation4 + $0xa8] sm:$0xff] %v2072
    %2259 = vst [vmem:[#allocation4 + $0xb0] sm:$0xff] %v2183
    %2260 = vst [vmem:[#allocation4 + $0xb8] sm:$0xff] %v2185
    %2261 = vst [vmem:[#allocation4 + $0xc0] sm:$0xff] %v2076
    %2262 = vst [vmem:[#allocation4 + $0xc8] sm:$0xff] %v2078
    %2263 = vst [vmem:[#allocation4 + $0xd0] sm:$0xff] %v2189
    %2264 = vst [vmem:[#allocation4 + $0xd8] sm:$0xff] %v2191
    %2265 = vst [vmem:[#allocation4 + $0xe0] sm:$0xff] %v2080
    %2266 = vst [vmem:[#allocation4 + $0xe8] sm:$0xff] %v2082
    %2267 = vst [vmem:[#allocation4 + $0xf0] sm:$0xff] %v2193
    %2268 = vst [vmem:[#allocation4 + $0xf8] sm:$0xff] %v2195
    %2269 = vst [vmem:[#allocation4 + $0x100] sm:$0xff] %v2086
    %2270 = vst [vmem:[#allocation4 + $0x108] sm:$0xff] %v2088
    %2271 = vst [vmem:[#allocation4 + $0x110] sm:$0xff] %v2199
    %2272 = vst [vmem:[#allocation4 + $0x118] sm:$0xff] %v2201
    %2273 = vst [vmem:[#allocation4 + $0x120] sm:$0xff] %v2090
    %2274 = vst [vmem:[#allocation4 + $0x128] sm:$0xff] %v2092
    %2275 = vst [vmem:[#allocation4 + $0x130] sm:$0xff] %v2203
    %2276 = vst [vmem:[#allocation4 + $0x138] sm:$0xff] %v2205
    %2277 = vst [vmem:[#allocation4 + $0x140] sm:$0xff] %v2096
    %2278 = vst [vmem:[#allocation4 + $0x148] sm:$0xff] %v2098
    %2279 = vst [vmem:[#allocation4 + $0x150] sm:$0xff] %v2209
    %2280 = vst [vmem:[#allocation4 + $0x158] sm:$0xff] %v2211
    %2281 = vst [vmem:[#allocation4 + $0x160] sm:$0xff] %v2100
    %2282 = vst [vmem:[#allocation4 + $0x168] sm:$0xff] %v2102
    %2283 = vst [vmem:[#allocation4 + $0x170] sm:$0xff] %v2213
    %2284 = vst [vmem:[#allocation4 + $0x178] sm:$0xff] %v2215
    %2285 = vst [vmem:[#allocation4 + $0x180] sm:$0xff] %v2106
    %2286 = vst [vmem:[#allocation4 + $0x188] sm:$0xff] %v2108
    %2287 = vst [vmem:[#allocation4 + $0x190] sm:$0xff] %v2219
    %2288 = vst [vmem:[#allocation4 + $0x198] sm:$0xff] %v2221
    %2289 = vst [vmem:[#allocation4 + $0x1a0] sm:$0xff] %v2110
    %2290 = vst [vmem:[#allocation4 + $0x1a8] sm:$0xff] %v2112
    %2291 = vst [vmem:[#allocation4 + $0x1b0] sm:$0xff] %v2223
    %2292 = vst [vmem:[#allocation4 + $0x1b8] sm:$0xff] %v2225
    %2293 = vst [vmem:[#allocation4 + $0x1c0] sm:$0xff] %v2116
    %2294 = vst [vmem:[#allocation4 + $0x1c8] sm:$0xff] %v2118
    %2295 = vst [vmem:[#allocation4 + $0x1d0] sm:$0xff] %v2229
    %2296 = vst [vmem:[#allocation4 + $0x1d8] sm:$0xff] %v2231
    %2297 = vst [vmem:[#allocation4 + $0x1e0] sm:$0xff] %v2120
    %2298 = vst [vmem:[#allocation4 + $0x1e8] sm:$0xff] %v2122
    %2299 = vst [vmem:[#allocation4 + $0x1f0] sm:$0xff] %v2233
    %2300 = vst [vmem:[#allocation4 + $0x1f8] sm:$0xff] %v2235
    %s2301 = scalar_lea.vmem [#allocation16], 16
    %v2302 = vld [vmem:[%s2301] sm:$0xff]
    %v2303 = vld [vmem:[%s2301 + $0x8] sm:$0xff]
    %s2304 = scalar_lea.vmem [#allocation18], 16
    %v2305 = vld [vmem:[%s2304] sm:$0xff]
    %v2306 = vld [vmem:[%s2304 + $0x8] sm:$0xff]
    %v2307 = vld [vmem:[#allocation4] sm:$0xff]
    %v2308 = vld [vmem:[#allocation4 + $0x8] sm:$0xff]
    %v2309 = vld [vmem:[#allocation4 + $0x10] sm:$0xff]
    %v2310 = vld [vmem:[#allocation4 + $0x18] sm:$0xff]
    %v2311 = vld [vmem:[#allocation4 + $0x20] sm:$0xff]
    %v2312 = vld [vmem:[#allocation4 + $0x28] sm:$0xff]
    %v2313 = vld [vmem:[#allocation4 + $0x30] sm:$0xff]
    %v2314 = vld [vmem:[#allocation4 + $0x38] sm:$0xff]
    %v2315 = vpack.c.bf16 %v2303, %v2302
    %2316 = vmatprep.subr.bf16.mxu0 %v1970
    %2317 = vmatpush1.bf16.msra.mxu0 %v1969
    %2318 = vmatprep.subr.bf16.mxu0 %v1974
    %2319 = vmatpush1.bf16.msra.mxu0 %v1973
    %2320 = vmatprep.subr.bf16.mxu0 %v1978
    %2321 = vmatpush1.bf16.msra.mxu0 %v1977
    %2322 = vmatprep.subr.bf16.mxu0 %v1982
    %2323 = vmatpush1.bf16.msra.mxu0 %v1981
    %2324 = vmatprep.subr.bf16.mxu0 %v1986
    %2325 = vmatpush1.bf16.msra.mxu0 %v1985
    %2326 = vmatprep.subr.bf16.mxu0 %v1990
    %2327 = vmatpush1.bf16.msra.mxu0 %v1989
    %2328 = vmatprep.subr.bf16.mxu0 %v1994
    %2329 = vmatpush1.bf16.msra.mxu0 %v1993
    %2330 = vmatprep.subr.bf16.mxu0 %v1998
    %2331 = vmatpush1.bf16.msra.mxu0 %v1997
    %2332 = vmatprep.subr.bf16.mxu0 0
    %2333 = vmatpush1.bf16.msra.mxu0 0
    %2334 = vmatprep.subr.bf16.mxu0 0
    %2335 = vmatpush1.bf16.msra.mxu0 0
    %2336 = vmatprep.subr.bf16.mxu0 0
    %2337 = vmatpush1.bf16.msra.mxu0 0
    %2338 = vmatprep.subr.bf16.mxu0 0
    %2339 = vmatpush1.bf16.msra.mxu0 0
    %2340 = vmatprep.subr.bf16.mxu0 0
    %2341 = vmatpush1.bf16.msra.mxu0 0
    %2342 = vmatprep.subr.bf16.mxu0 0
    %2343 = vmatpush1.bf16.msra.mxu0 0
    %2344 = vmatprep.subr.bf16.mxu0 0
    %2345 = vmatpush1.bf16.msra.mxu0 0
    %2346 = vmatprep.subr.bf16.mxu0 0
    %2347 = vmatpush1.bf16.msra.mxu0 0
    %2348 = vmatprep.mubr.bf16.mxu0 0
    %2349 = vmatmul.mubr.bf16.gmra.mrb[0].mxu0 %v2315
    %v2350 = vpop.f32.mrb[0].mxu0
    %v2351 = vadd.f32 0.0, %v2350
    %v2352 = vpop.f32.mrb[0].mxu0
    %v2353 = vadd.f32 0.0, %v2352
    %v2354 = vpop.f32.mrb[0].mxu0
    %v2355 = vadd.f32 0.0, %v2354
    %v2356 = vpop.f32.mrb[0].mxu0
    %v2357 = vadd.f32 0.0, %v2356
    %2358 = vdwg.mxu0
    %2359 = vmatprep.subr.bf16.mxu0 %v1972
    %2360 = vmatpush1.bf16.msra.mxu0 %v1971
    %2361 = vmatprep.subr.bf16.mxu0 %v1976
    %2362 = vmatpush1.bf16.msra.mxu0 %v1975
    %2363 = vmatprep.subr.bf16.mxu0 %v1980
    %2364 = vmatpush1.bf16.msra.mxu0 %v1979
    %2365 = vmatprep.subr.bf16.mxu0 %v1984
    %2366 = vmatpush1.bf16.msra.mxu0 %v1983
    %2367 = vmatprep.subr.bf16.mxu0 %v1988
    %2368 = vmatpush1.bf16.msra.mxu0 %v1987
    %2369 = vmatprep.subr.bf16.mxu0 %v1992
    %2370 = vmatpush1.bf16.msra.mxu0 %v1991
    %2371 = vmatprep.subr.bf16.mxu0 %v1996
    %2372 = vmatpush1.bf16.msra.mxu0 %v1995
    %2373 = vmatprep.subr.bf16.mxu0 %v2000
    %2374 = vmatpush1.bf16.msra.mxu0 %v1999
    %2375 = vmatprep.subr.bf16.mxu0 0
    %2376 = vmatpush1.bf16.msra.mxu0 0
    %2377 = vmatprep.subr.bf16.mxu0 0
    %2378 = vmatpush1.bf16.msra.mxu0 0
    %2379 = vmatprep.subr.bf16.mxu0 0
    %2380 = vmatpush1.bf16.msra.mxu0 0
    %2381 = vmatprep.subr.bf16.mxu0 0
    %2382 = vmatpush1.bf16.msra.mxu0 0
    %2383 = vmatprep.subr.bf16.mxu0 0
    %2384 = vmatpush1.bf16.msra.mxu0 0
    %2385 = vmatprep.subr.bf16.mxu0 0
    %2386 = vmatpush1.bf16.msra.mxu0 0
    %2387 = vmatprep.subr.bf16.mxu0 0
    %2388 = vmatpush1.bf16.msra.mxu0 0
    %2389 = vmatprep.subr.bf16.mxu0 0
    %2390 = vmatpush1.bf16.msra.mxu0 0
    %2391 = vmatprep.mubr.bf16.mxu0 0
    %2392 = vmatmul.mubr.bf16.gmra.mrb[0].mxu0 %v2315
    %v2393 = vpop.f32.mrb[0].mxu0
    %v2394 = vadd.f32 0.0, %v2393
    %v2395 = vpop.f32.mrb[0].mxu0
    %v2396 = vadd.f32 0.0, %v2395
    %v2397 = vpop.f32.mrb[0].mxu0
    %v2398 = vadd.f32 0.0, %v2397
    %v2399 = vpop.f32.mrb[0].mxu0
    %v2400 = vadd.f32 0.0, %v2399
    %2401 = vdwg.mxu0
    %v2402 = vadd.f32 %v2307, %v2351
    %v2403 = vadd.f32 %v2308, %v2353
    %v2404 = vadd.f32 %v2309, %v2394
    %v2405 = vadd.f32 %v2310, %v2396
    %v2406 = vadd.f32 %v2311, %v2355
    %v2407 = vadd.f32 %v2312, %v2357
    %v2408 = vadd.f32 %v2313, %v2398
    %v2409 = vadd.f32 %v2314, %v2400
    %v2411 = vlaneseq
    %v2412 = vshrl.u32 %v2411, 7
    %v2413 = vsub.s32 0, %v2412
    %v2414 = vrot.slane %v2002, %v2413
    %v2415 = vlaneseq
    %v2416 = vshrl.u32 %v2415, 7
    %v2417 = vsub.s32 1, %v2416
    %v2418 = vrot.slane %v2002, %v2417
    %v2419 = vlaneseq
    %v2420 = vshrl.u32 %v2419, 7
    %v2421 = vsub.s32 2, %v2420
    %v2422 = vrot.slane %v2002, %v2421
    %v2423 = vlaneseq
    %v2424 = vshrl.u32 %v2423, 7
    %v2425 = vsub.s32 3, %v2424
    %v2426 = vrot.slane %v2002, %v2425
    %v2431 = vadd.f32 %v2402, %v2414
    %v2432 = vadd.f32 %v2403, %v2418
    %v2433 = vadd.f32 %v2404, %v2422
    %v2434 = vadd.f32 %v2405, %v2426
    %v2435 = vadd.f32 %v2406, %v2414
    %v2436 = vadd.f32 %v2407, %v2418
    %v2437 = vadd.f32 %v2408, %v2422
    %v2438 = vadd.f32 %v2409, %v2426
    %v2439 = vmul.f32 %v2431, 0.5
    %v2440 = vmul.f32 %v2435, 0.5
    %v2441 = vtanh.pop %v2439
    %v2442 = vtanh.pop %v2440
    %v2443 = vmul.f32 %v2441, 0.5
    %v2444 = vmul.f32 %v2442, 0.5
    %v2445 = vadd.f32 %v2443, 0.5
    %v2446 = vadd.f32 %v2444, 0.5
    %v2447 = vmul.f32 %v2432, 0.5
    %v2448 = vmul.f32 %v2436, 0.5
    %v2449 = vtanh.pop %v2447
    %v2450 = vtanh.pop %v2448
    %v2451 = vmul.f32 %v2449, 0.5
    %v2452 = vmul.f32 %v2450, 0.5
    %v2453 = vadd.f32 %v2451, 0.5
    %v2454 = vadd.f32 %v2452, 0.5
    %v2455 = vtanh.pop %v2433
    %v2456 = vtanh.pop %v2437
    %v2457 = vmul.f32 %v2434, 0.5
    %v2458 = vmul.f32 %v2438, 0.5
    %v2459 = vtanh.pop %v2457
    %v2460 = vtanh.pop %v2458
    %v2461 = vmul.f32 %v2459, 0.5
    %v2462 = vmul.f32 %v2460, 0.5
    %v2463 = vadd.f32 %v2461, 0.5
    %v2464 = vadd.f32 %v2462, 0.5
    %v2465 = vmul.f32 %v2453, %v2305
    %v2466 = vmul.f32 %v2454, %v2306
    %v2467 = vmul.f32 %v2445, %v2455
    %v2468 = vmul.f32 %v2446, %v2456
    %v2469 = vadd.f32 %v2465, %v2467
    %v2470 = vadd.f32 %v2466, %v2468
    %v2471 = vtanh.pop %v2469
    %v2472 = vtanh.pop %v2470
    %v2473 = vmul.f32 %v2463, %v2471
    %v2474 = vmul.f32 %v2464, %v2472
    %v2475 = vpack.c.bf16 %v2474, %v2473
    %2476 = vst [vmem:[#allocation5] sm:$0xff] %v2475
    %v2477 = vld [vmem:[%s870] sm:$0xff]
    %v2478 = vld [vmem:[%s870 + $0x8] sm:$0xff]
    %v2479 = vld [vmem:[%s870 + $0x10] sm:$0xff]
    %v2480 = vld [vmem:[%s870 + $0x18] sm:$0xff]
    %v2481 = vld [vmem:[%s870 + $0x20] sm:$0xff]
    %v2482 = vld [vmem:[%s870 + $0x28] sm:$0xff]
    %v2483 = vld [vmem:[%s870 + $0x30] sm:$0xff]
    %v2484 = vld [vmem:[%s870 + $0x38] sm:$0xff]
    %2485 = vmatprep.subr.bf16.mxu0 %v1970
    %2486 = vmatpush1.bf16.msra.mxu0 %v1969
    %2487 = vmatprep.subr.bf16.mxu0 %v1974
    %2488 = vmatpush1.bf16.msra.mxu0 %v1973
    %2489 = vmatprep.subr.bf16.mxu0 %v1978
    %2490 = vmatpush1.bf16.msra.mxu0 %v1977
    %2491 = vmatprep.subr.bf16.mxu0 %v1982
    %2492 = vmatpush1.bf16.msra.mxu0 %v1981
    %2493 = vmatprep.subr.bf16.mxu0 %v1986
    %2494 = vmatpush1.bf16.msra.mxu0 %v1985
    %2495 = vmatprep.subr.bf16.mxu0 %v1990
    %2496 = vmatpush1.bf16.msra.mxu0 %v1989
    %2497 = vmatprep.subr.bf16.mxu0 %v1994
    %2498 = vmatpush1.bf16.msra.mxu0 %v1993
    %2499 = vmatprep.subr.bf16.mxu0 %v1998
    %2500 = vmatpush1.bf16.msra.mxu0 %v1997
    %2501 = vmatprep.subr.bf16.mxu0 0
    %2502 = vmatpush1.bf16.msra.mxu0 0
    %2503 = vmatprep.subr.bf16.mxu0 0
    %2504 = vmatpush1.bf16.msra.mxu0 0
    %2505 = vmatprep.subr.bf16.mxu0 0
    %2506 = vmatpush1.bf16.msra.mxu0 0
    %2507 = vmatprep.subr.bf16.mxu0 0
    %2508 = vmatpush1.bf16.msra.mxu0 0
    %2509 = vmatprep.subr.bf16.mxu0 0
    %2510 = vmatpush1.bf16.msra.mxu0 0
    %2511 = vmatprep.subr.bf16.mxu0 0
    %2512 = vmatpush1.bf16.msra.mxu0 0
    %2513 = vmatprep.subr.bf16.mxu0 0
    %2514 = vmatpush1.bf16.msra.mxu0 0
    %2515 = vmatprep.subr.bf16.mxu0 0
    %2516 = vmatpush1.bf16.msra.mxu0 0
    %2517 = vmatprep.mubr.bf16.mxu0 0
    %2518 = vmatmul.mubr.bf16.gmra.mrb[0].mxu0 %v2475
    %v2519 = vpop.f32.mrb[0].mxu0
    %v2520 = vadd.f32 0.0, %v2519
    %v2521 = vpop.f32.mrb[0].mxu0
    %v2522 = vadd.f32 0.0, %v2521
    %v2523 = vpop.f32.mrb[0].mxu0
    %v2524 = vadd.f32 0.0, %v2523
    %v2525 = vpop.f32.mrb[0].mxu0
    %v2526 = vadd.f32 0.0, %v2525
    %2527 = vdwg.mxu0
    %2528 = vmatprep.subr.bf16.mxu0 %v1972
    %2529 = vmatpush1.bf16.msra.mxu0 %v1971
    %2530 = vmatprep.subr.bf16.mxu0 %v1976
    %2531 = vmatpush1.bf16.msra.mxu0 %v1975
    %2532 = vmatprep.subr.bf16.mxu0 %v1980
    %2533 = vmatpush1.bf16.msra.mxu0 %v1979
    %2534 = vmatprep.subr.bf16.mxu0 %v1984
    %2535 = vmatpush1.bf16.msra.mxu0 %v1983
    %2536 = vmatprep.subr.bf16.mxu0 %v1988
    %2537 = vmatpush1.bf16.msra.mxu0 %v1987
    %2538 = vmatprep.subr.bf16.mxu0 %v1992
    %2539 = vmatpush1.bf16.msra.mxu0 %v1991
    %2540 = vmatprep.subr.bf16.mxu0 %v1996
    %2541 = vmatpush1.bf16.msra.mxu0 %v1995
    %2542 = vmatprep.subr.bf16.mxu0 %v2000
    %2543 = vmatpush1.bf16.msra.mxu0 %v1999
    %2544 = vmatprep.subr.bf16.mxu0 0
    %2545 = vmatpush1.bf16.msra.mxu0 0
    %2546 = vmatprep.subr.bf16.mxu0 0
    %2547 = vmatpush1.bf16.msra.mxu0 0
    %2548 = vmatprep.subr.bf16.mxu0 0
    %2549 = vmatpush1.bf16.msra.mxu0 0
    %2550 = vmatprep.subr.bf16.mxu0 0
    %2551 = vmatpush1.bf16.msra.mxu0 0
    %2552 = vmatprep.subr.bf16.mxu0 0
    %2553 = vmatpush1.bf16.msra.mxu0 0
    %2554 = vmatprep.subr.bf16.mxu0 0
    %2555 = vmatpush1.bf16.msra.mxu0 0
    %2556 = vmatprep.subr.bf16.mxu0 0
    %2557 = vmatpush1.bf16.msra.mxu0 0
    %2558 = vmatprep.subr.bf16.mxu0 0
    %2559 = vmatpush1.bf16.msra.mxu0 0
    %2560 = vmatprep.mubr.bf16.mxu0 0
    %2561 = vmatmul.mubr.bf16.gmra.mrb[0].mxu0 %v2475
    %v2562 = vpop.f32.mrb[0].mxu0
    %v2563 = vadd.f32 0.0, %v2562
    %v2564 = vpop.f32.mrb[0].mxu0
    %v2565 = vadd.f32 0.0, %v2564
    %v2566 = vpop.f32.mrb[0].mxu0
    %v2567 = vadd.f32 0.0, %v2566
    %v2568 = vpop.f32.mrb[0].mxu0
    %v2569 = vadd.f32 0.0, %v2568
    %2570 = vdwg.mxu0
    %v2571 = vadd.f32 %v2477, %v2520
    %v2572 = vadd.f32 %v2478, %v2522
    %v2573 = vadd.f32 %v2479, %v2563
    %v2574 = vadd.f32 %v2480, %v2565
    %v2575 = vadd.f32 %v2481, %v2524
    %v2576 = vadd.f32 %v2482, %v2526
    %v2577 = vadd.f32 %v2483, %v2567
    %v2578 = vadd.f32 %v2484, %v2569
    %v2579 = vadd.f32 %v2571, %v2414
    %v2580 = vadd.f32 %v2572, %v2418
    %v2581 = vadd.f32 %v2573, %v2422
    %v2582 = vadd.f32 %v2574, %v2426
    %v2583 = vadd.f32 %v2575, %v2414
    %v2584 = vadd.f32 %v2576, %v2418
    %v2585 = vadd.f32 %v2577, %v2422
    %v2586 = vadd.f32 %v2578, %v2426
    %v2587 = vmul.f32 %v2579, 0.5
    %v2588 = vmul.f32 %v2583, 0.5
    %v2589 = vtanh.pop %v2587
    %v2590 = vtanh.pop %v2588
    %v2591 = vmul.f32 %v2589, 0.5
    %v2592 = vmul.f32 %v2590, 0.5
    %v2593 = vadd.f32 %v2591, 0.5
    %v2594 = vadd.f32 %v2592, 0.5
    %v2595 = vmul.f32 %v2580, 0.5
    %v2596 = vmul.f32 %v2584, 0.5
    %v2597 = vtanh.pop %v2595
    %v2598 = vtanh.pop %v2596
    %v2599 = vmul.f32 %v2597, 0.5
    %v2600 = vmul.f32 %v2598, 0.5
    %v2601 = vadd.f32 %v2599, 0.5
    %v2602 = vadd.f32 %v2600, 0.5
    %v2603 = vtanh.pop %v2581
    %v2604 = vtanh.pop %v2585
    %v2605 = vmul.f32 %v2582, 0.5
    %v2606 = vmul.f32 %v2586, 0.5
    %v2607 = vtanh.pop %v2605
    %v2608 = vtanh.pop %v2606
    %v2609 = vmul.f32 %v2607, 0.5
    %v2610 = vmul.f32 %v2608, 0.5
    %v2611 = vadd.f32 %v2609, 0.5
    %v2612 = vadd.f32 %v2610, 0.5
    %v2613 = vmul.f32 %v2601, %v2469
    %v2614 = vmul.f32 %v2602, %v2470
    %v2615 = vmul.f32 %v2593, %v2603
    %v2616 = vmul.f32 %v2594, %v2604
    %v2617 = vadd.f32 %v2613, %v2615
    %v2618 = vadd.f32 %v2614, %v2616
    %v2619 = vtanh.pop %v2617
    %v2620 = vtanh.pop %v2618
    %v2621 = vmul.f32 %v2611, %v2619
    %v2622 = vmul.f32 %v2612, %v2620
    %v2623 = vpack.c.bf16 %v2622, %v2621
    %2624 = vst [vmem:[%s1018] sm:$0xff] %v2623
    %v2625 = vld [vmem:[%s1020] sm:$0xff]
    %v2626 = vld [vmem:[%s1020 + $0x8] sm:$0xff]
    %v2627 = vld [vmem:[%s1020 + $0x10] sm:$0xff]
    %v2628 = vld [vmem:[%s1020 + $0x18] sm:$0xff]
    %v2629 = vld [vmem:[%s1020 + $0x20] sm:$0xff]
    %v2630 = vld [vmem:[%s1020 + $0x28] sm:$0xff]
    %v2631 = vld [vmem:[%s1020 + $0x30] sm:$0xff]
    %v2632 = vld [vmem:[%s1020 + $0x38] sm:$0xff]
    %2633 = vmatprep.subr.bf16.mxu0 %v1970
    %2634 = vmatpush1.bf16.msra.mxu0 %v1969
    %2635 = vmatprep.subr.bf16.mxu0 %v1974
    %2636 = vmatpush1.bf16.msra.mxu0 %v1973
    %2637 = vmatprep.subr.bf16.mxu0 %v1978
    %2638 = vmatpush1.bf16.msra.mxu0 %v1977
    %2639 = vmatprep.subr.bf16.mxu0 %v1982
    %2640 = vmatpush1.bf16.msra.mxu0 %v1981
    %2641 = vmatprep.subr.bf16.mxu0 %v1986
    %2642 = vmatpush1.bf16.msra.mxu0 %v1985
    %2643 = vmatprep.subr.bf16.mxu0 %v1990
    %2644 = vmatpush1.bf16.msra.mxu0 %v1989
    %2645 = vmatprep.subr.bf16.mxu0 %v1994
    %2646 = vmatpush1.bf16.msra.mxu0 %v1993
    %2647 = vmatprep.subr.bf16.mxu0 %v1998
    %2648 = vmatpush1.bf16.msra.mxu0 %v1997
    %2649 = vmatprep.subr.bf16.mxu0 0
    %2650 = vmatpush1.bf16.msra.mxu0 0
    %2651 = vmatprep.subr.bf16.mxu0 0
    %2652 = vmatpush1.bf16.msra.mxu0 0
    %2653 = vmatprep.subr.bf16.mxu0 0
    %2654 = vmatpush1.bf16.msra.mxu0 0
    %2655 = vmatprep.subr.bf16.mxu0 0
    %2656 = vmatpush1.bf16.msra.mxu0 0
    %2657 = vmatprep.subr.bf16.mxu0 0
    %2658 = vmatpush1.bf16.msra.mxu0 0
    %2659 = vmatprep.subr.bf16.mxu0 0
    %2660 = vmatpush1.bf16.msra.mxu0 0
    %2661 = vmatprep.subr.bf16.mxu0 0
    %2662 = vmatpush1.bf16.msra.mxu0 0
    %2663 = vmatprep.subr.bf16.mxu0 0
    %2664 = vmatpush1.bf16.msra.mxu0 0
    %2665 = vmatprep.mubr.bf16.mxu0 0
    %2666 = vmatmul.mubr.bf16.gmra.mrb[0].mxu0 %v2623
    %v2667 = vpop.f32.mrb[0].mxu0
    %v2668 = vadd.f32 0.0, %v2667
    %v2669 = vpop.f32.mrb[0].mxu0
    %v2670 = vadd.f32 0.0, %v2669
    %v2671 = vpop.f32.mrb[0].mxu0
    %v2672 = vadd.f32 0.0, %v2671
    %v2673 = vpop.f32.mrb[0].mxu0
    %v2674 = vadd.f32 0.0, %v2673
    %2675 = vdwg.mxu0
    %2676 = vmatprep.subr.bf16.mxu0 %v1972
    %2677 = vmatpush1.bf16.msra.mxu0 %v1971
    %2678 = vmatprep.subr.bf16.mxu0 %v1976
    %2679 = vmatpush1.bf16.msra.mxu0 %v1975
    %2680 = vmatprep.subr.bf16.mxu0 %v1980
    %2681 = vmatpush1.bf16.msra.mxu0 %v1979
    %2682 = vmatprep.subr.bf16.mxu0 %v1984
    %2683 = vmatpush1.bf16.msra.mxu0 %v1983
    %2684 = vmatprep.subr.bf16.mxu0 %v1988
    %2685 = vmatpush1.bf16.msra.mxu0 %v1987
    %2686 = vmatprep.subr.bf16.mxu0 %v1992
    %2687 = vmatpush1.bf16.msra.mxu0 %v1991
    %2688 = vmatprep.subr.bf16.mxu0 %v1996
    %2689 = vmatpush1.bf16.msra.mxu0 %v1995
    %2690 = vmatprep.subr.bf16.mxu0 %v2000
    %2691 = vmatpush1.bf16.msra.mxu0 %v1999
    %2692 = vmatprep.subr.bf16.mxu0 0
    %2693 = vmatpush1.bf16.msra.mxu0 0
    %2694 = vmatprep.subr.bf16.mxu0 0
    %2695 = vmatpush1.bf16.msra.mxu0 0
    %2696 = vmatprep.subr.bf16.mxu0 0
    %2697 = vmatpush1.bf16.msra.mxu0 0
    %2698 = vmatprep.subr.bf16.mxu0 0
    %2699 = vmatpush1.bf16.msra.mxu0 0
    %2700 = vmatprep.subr.bf16.mxu0 0
    %2701 = vmatpush1.bf16.msra.mxu0 0
    %2702 = vmatprep.subr.bf16.mxu0 0
    %2703 = vmatpush1.bf16.msra.mxu0 0
    %2704 = vmatprep.subr.bf16.mxu0 0
    %2705 = vmatpush1.bf16.msra.mxu0 0
    %2706 = vmatprep.subr.bf16.mxu0 0
    %2707 = vmatpush1.bf16.msra.mxu0 0
    %2708 = vmatprep.mubr.bf16.mxu0 0
    %2709 = vmatmul.mubr.bf16.gmra.mrb[0].mxu0 %v2623
    %v2710 = vpop.f32.mrb[0].mxu0
    %v2711 = vadd.f32 0.0, %v2710
    %v2712 = vpop.f32.mrb[0].mxu0
    %v2713 = vadd.f32 0.0, %v2712
    %v2714 = vpop.f32.mrb[0].mxu0
    %v2715 = vadd.f32 0.0, %v2714
    %v2716 = vpop.f32.mrb[0].mxu0
    %v2717 = vadd.f32 0.0, %v2716
    %2718 = vdwg.mxu0
    %v2719 = vadd.f32 %v2625, %v2668
    %v2720 = vadd.f32 %v2626, %v2670
    %v2721 = vadd.f32 %v2627, %v2711
    %v2722 = vadd.f32 %v2628, %v2713
    %v2723 = vadd.f32 %v2629, %v2672
    %v2724 = vadd.f32 %v2630, %v2674
    %v2725 = vadd.f32 %v2631, %v2715
    %v2726 = vadd.f32 %v2632, %v2717
    %v2727 = vadd.f32 %v2719, %v2414
    %v2728 = vadd.f32 %v2720, %v2418
    %v2729 = vadd.f32 %v2721, %v2422
    %v2730 = vadd.f32 %v2722, %v2426
    %v2731 = vadd.f32 %v2723, %v2414
    %v2732 = vadd.f32 %v2724, %v2418
    %v2733 = vadd.f32 %v2725, %v2422
    %v2734 = vadd.f32 %v2726, %v2426
    %v2735 = vmul.f32 %v2727, 0.5
    %v2736 = vmul.f32 %v2731, 0.5
    %v2737 = vtanh.pop %v2735
    %v2738 = vtanh.pop %v2736
    %v2739 = vmul.f32 %v2737, 0.5
    %v2740 = vmul.f32 %v2738, 0.5
    %v2741 = vadd.f32 %v2739, 0.5
    %v2742 = vadd.f32 %v2740, 0.5
    %v2743 = vmul.f32 %v2728, 0.5
    %v2744 = vmul.f32 %v2732, 0.5
    %v2745 = vtanh.pop %v2743
    %v2746 = vtanh.pop %v2744
    %v2747 = vmul.f32 %v2745, 0.5
    %v2748 = vmul.f32 %v2746, 0.5
    %v2749 = vadd.f32 %v2747, 0.5
    %v2750 = vadd.f32 %v2748, 0.5
    %v2751 = vtanh.pop %v2729
    %v2752 = vtanh.pop %v2733
    %v2753 = vmul.f32 %v2730, 0.5
    %v2754 = vmul.f32 %v2734, 0.5
    %v2755 = vtanh.pop %v2753
    %v2756 = vtanh.pop %v2754
    %v2757 = vmul.f32 %v2755, 0.5
    %v2758 = vmul.f32 %v2756, 0.5
    %v2759 = vadd.f32 %v2757, 0.5
    %v2760 = vadd.f32 %v2758, 0.5
    %v2761 = vmul.f32 %v2749, %v2617
    %v2762 = vmul.f32 %v2750, %v2618
    %v2763 = vmul.f32 %v2741, %v2751
    %v2764 = vmul.f32 %v2742, %v2752
    %v2765 = vadd.f32 %v2761, %v2763
    %v2766 = vadd.f32 %v2762, %v2764
    %v2767 = vtanh.pop %v2765
    %v2768 = vtanh.pop %v2766
    %v2769 = vmul.f32 %v2759, %v2767
    %v2770 = vmul.f32 %v2760, %v2768
    %v2771 = vpack.c.bf16 %v2770, %v2769
    %2772 = vst [vmem:[%s1168] sm:$0xff] %v2771
    %v2773 = vld [vmem:[%s1170] sm:$0xff]
    %v2774 = vld [vmem:[%s1170 + $0x8] sm:$0xff]
    %v2775 = vld [vmem:[%s1170 + $0x10] sm:$0xff]
    %v2776 = vld [vmem:[%s1170 + $0x18] sm:$0xff]
    %v2777 = vld [vmem:[%s1170 + $0x20] sm:$0xff]
    %v2778 = vld [vmem:[%s1170 + $0x28] sm:$0xff]
    %v2779 = vld [vmem:[%s1170 + $0x30] sm:$0xff]
    %v2780 = vld [vmem:[%s1170 + $0x38] sm:$0xff]
    %2781 = vmatprep.subr.bf16.mxu0 %v1970
    %2782 = vmatpush1.bf16.msra.mxu0 %v1969
    %2783 = vmatprep.subr.bf16.mxu0 %v1974
    %2784 = vmatpush1.bf16.msra.mxu0 %v1973
    %2785 = vmatprep.subr.bf16.mxu0 %v1978
    %2786 = vmatpush1.bf16.msra.mxu0 %v1977
    %2787 = vmatprep.subr.bf16.mxu0 %v1982
    %2788 = vmatpush1.bf16.msra.mxu0 %v1981
    %2789 = vmatprep.subr.bf16.mxu0 %v1986
    %2790 = vmatpush1.bf16.msra.mxu0 %v1985
    %2791 = vmatprep.subr.bf16.mxu0 %v1990
    %2792 = vmatpush1.bf16.msra.mxu0 %v1989
    %2793 = vmatprep.subr.bf16.mxu0 %v1994
    %2794 = vmatpush1.bf16.msra.mxu0 %v1993
    %2795 = vmatprep.subr.bf16.mxu0 %v1998
    %2796 = vmatpush1.bf16.msra.mxu0 %v1997
    %2797 = vmatprep.subr.bf16.mxu0 0
    %2798 = vmatpush1.bf16.msra.mxu0 0
    %2799 = vmatprep.subr.bf16.mxu0 0
    %2800 = vmatpush1.bf16.msra.mxu0 0
    %2801 = vmatprep.subr.bf16.mxu0 0
    %2802 = vmatpush1.bf16.msra.mxu0 0
    %2803 = vmatprep.subr.bf16.mxu0 0
    %2804 = vmatpush1.bf16.msra.mxu0 0
    %2805 = vmatprep.subr.bf16.mxu0 0
    %2806 = vmatpush1.bf16.msra.mxu0 0
    %2807 = vmatprep.subr.bf16.mxu0 0
    %2808 = vmatpush1.bf16.msra.mxu0 0
    %2809 = vmatprep.subr.bf16.mxu0 0
    %2810 = vmatpush1.bf16.msra.mxu0 0
    %2811 = vmatprep.subr.bf16.mxu0 0
    %2812 = vmatpush1.bf16.msra.mxu0 0
    %2813 = vmatprep.mubr.bf16.mxu0 0
    %2814 = vmatmul.mubr.bf16.gmra.mrb[0].mxu0 %v2771
    %v2815 = vpop.f32.mrb[0].mxu0
    %v2816 = vadd.f32 0.0, %v2815
    %v2817 = vpop.f32.mrb[0].mxu0
    %v2818 = vadd.f32 0.0, %v2817
    %v2819 = vpop.f32.mrb[0].mxu0
    %v2820 = vadd.f32 0.0, %v2819
    %v2821 = vpop.f32.mrb[0].mxu0
    %v2822 = vadd.f32 0.0, %v2821
    %2823 = vdwg.mxu0
    %2824 = vmatprep.subr.bf16.mxu0 %v1972
    %2825 = vmatpush1.bf16.msra.mxu0 %v1971
    %2826 = vmatprep.subr.bf16.mxu0 %v1976
    %2827 = vmatpush1.bf16.msra.mxu0 %v1975
    %2828 = vmatprep.subr.bf16.mxu0 %v1980
    %2829 = vmatpush1.bf16.msra.mxu0 %v1979
    %2830 = vmatprep.subr.bf16.mxu0 %v1984
    %2831 = vmatpush1.bf16.msra.mxu0 %v1983
    %2832 = vmatprep.subr.bf16.mxu0 %v1988
    %2833 = vmatpush1.bf16.msra.mxu0 %v1987
    %2834 = vmatprep.subr.bf16.mxu0 %v1992
    %2835 = vmatpush1.bf16.msra.mxu0 %v1991
    %2836 = vmatprep.subr.bf16.mxu0 %v1996
    %2837 = vmatpush1.bf16.msra.mxu0 %v1995
    %2838 = vmatprep.subr.bf16.mxu0 %v2000
    %2839 = vmatpush1.bf16.msra.mxu0 %v1999
    %2840 = vmatprep.subr.bf16.mxu0 0
    %2841 = vmatpush1.bf16.msra.mxu0 0
    %2842 = vmatprep.subr.bf16.mxu0 0
    %2843 = vmatpush1.bf16.msra.mxu0 0
    %2844 = vmatprep.subr.bf16.mxu0 0
    %2845 = vmatpush1.bf16.msra.mxu0 0
    %2846 = vmatprep.subr.bf16.mxu0 0
    %2847 = vmatpush1.bf16.msra.mxu0 0
    %2848 = vmatprep.subr.bf16.mxu0 0
    %2849 = vmatpush1.bf16.msra.mxu0 0
    %2850 = vmatprep.subr.bf16.mxu0 0
    %2851 = vmatpush1.bf16.msra.mxu0 0
    %2852 = vmatprep.subr.bf16.mxu0 0
    %2853 = vmatpush1.bf16.msra.mxu0 0
    %2854 = vmatprep.subr.bf16.mxu0 0
    %2855 = vmatpush1.bf16.msra.mxu0 0
    %2856 = vmatprep.mubr.bf16.mxu0 0
    %2857 = vmatmul.mubr.bf16.gmra.mrb[0].mxu0 %v2771
    %v2858 = vpop.f32.mrb[0].mxu0
    %v2859 = vadd.f32 0.0, %v2858
    %v2860 = vpop.f32.mrb[0].mxu0
    %v2861 = vadd.f32 0.0, %v2860
    %v2862 = vpop.f32.mrb[0].mxu0
    %v2863 = vadd.f32 0.0, %v2862
    %v2864 = vpop.f32.mrb[0].mxu0
    %v2865 = vadd.f32 0.0, %v2864
    %2866 = vdwg.mxu0
    %v2867 = vadd.f32 %v2773, %v2816
    %v2868 = vadd.f32 %v2774, %v2818
    %v2869 = vadd.f32 %v2775, %v2859
    %v2870 = vadd.f32 %v2776, %v2861
    %v2871 = vadd.f32 %v2777, %v2820
    %v2872 = vadd.f32 %v2778, %v2822
    %v2873 = vadd.f32 %v2779, %v2863
    %v2874 = vadd.f32 %v2780, %v2865
    %v2875 = vadd.f32 %v2867, %v2414
    %v2876 = vadd.f32 %v2868, %v2418
    %v2877 = vadd.f32 %v2869, %v2422
    %v2878 = vadd.f32 %v2870, %v2426
    %v2879 = vadd.f32 %v2871, %v2414
    %v2880 = vadd.f32 %v2872, %v2418
    %v2881 = vadd.f32 %v2873, %v2422
    %v2882 = vadd.f32 %v2874, %v2426
    %v2883 = vmul.f32 %v2875, 0.5
    %v2884 = vmul.f32 %v2879, 0.5
    %v2885 = vtanh.pop %v2883
    %v2886 = vtanh.pop %v2884
    %v2887 = vmul.f32 %v2885, 0.5
    %v2888 = vmul.f32 %v2886, 0.5
    %v2889 = vadd.f32 %v2887, 0.5
    %v2890 = vadd.f32 %v2888, 0.5
    %v2891 = vmul.f32 %v2876, 0.5
    %v2892 = vmul.f32 %v2880, 0.5
    %v2893 = vtanh.pop %v2891
    %v2894 = vtanh.pop %v2892
    %v2895 = vmul.f32 %v2893, 0.5
    %v2896 = vmul.f32 %v2894, 0.5
    %v2897 = vadd.f32 %v2895, 0.5
    %v2898 = vadd.f32 %v2896, 0.5
    %v2899 = vtanh.pop %v2877
    %v2900 = vtanh.pop %v2881
    %v2901 = vmul.f32 %v2878, 0.5
    %v2902 = vmul.f32 %v2882, 0.5
    %v2903 = vtanh.pop %v2901
    %v2904 = vtanh.pop %v2902
    %v2905 = vmul.f32 %v2903, 0.5
    %v2906 = vmul.f32 %v2904, 0.5
    %v2907 = vadd.f32 %v2905, 0.5
    %v2908 = vadd.f32 %v2906, 0.5
    %v2909 = vmul.f32 %v2897, %v2765
    %v2910 = vmul.f32 %v2898, %v2766
    %v2911 = vmul.f32 %v2889, %v2899
    %v2912 = vmul.f32 %v2890, %v2900
    %v2913 = vadd.f32 %v2909, %v2911
    %v2914 = vadd.f32 %v2910, %v2912
    %v2915 = vtanh.pop %v2913
    %v2916 = vtanh.pop %v2914
    %v2917 = vmul.f32 %v2907, %v2915
    %v2918 = vmul.f32 %v2908, %v2916
    %v2919 = vpack.c.bf16 %v2918, %v2917
    %2920 = vst [vmem:[%s1318] sm:$0xff] %v2919
    %v2921 = vld [vmem:[%s1320] sm:$0xff]
    %v2922 = vld [vmem:[%s1320 + $0x8] sm:$0xff]
    %v2923 = vld [vmem:[%s1320 + $0x10] sm:$0xff]
    %v2924 = vld [vmem:[%s1320 + $0x18] sm:$0xff]
    %v2925 = vld [vmem:[%s1320 + $0x20] sm:$0xff]
    %v2926 = vld [vmem:[%s1320 + $0x28] sm:$0xff]
    %v2927 = vld [vmem:[%s1320 + $0x30] sm:$0xff]
    %v2928 = vld [vmem:[%s1320 + $0x38] sm:$0xff]
    %2929 = vmatprep.subr.bf16.mxu0 %v1970
    %2930 = vmatpush1.bf16.msra.mxu0 %v1969
    %2931 = vmatprep.subr.bf16.mxu0 %v1974
    %2932 = vmatpush1.bf16.msra.mxu0 %v1973
    %2933 = vmatprep.subr.bf16.mxu0 %v1978
    %2934 = vmatpush1.bf16.msra.mxu0 %v1977
    %2935 = vmatprep.subr.bf16.mxu0 %v1982
    %2936 = vmatpush1.bf16.msra.mxu0 %v1981
    %2937 = vmatprep.subr.bf16.mxu0 %v1986
    %2938 = vmatpush1.bf16.msra.mxu0 %v1985
    %2939 = vmatprep.subr.bf16.mxu0 %v1990
    %2940 = vmatpush1.bf16.msra.mxu0 %v1989
    %2941 = vmatprep.subr.bf16.mxu0 %v1994
    %2942 = vmatpush1.bf16.msra.mxu0 %v1993
    %2943 = vmatprep.subr.bf16.mxu0 %v1998
    %2944 = vmatpush1.bf16.msra.mxu0 %v1997
    %2945 = vmatprep.subr.bf16.mxu0 0
    %2946 = vmatpush1.bf16.msra.mxu0 0
    %2947 = vmatprep.subr.bf16.mxu0 0
    %2948 = vmatpush1.bf16.msra.mxu0 0
    %2949 = vmatprep.subr.bf16.mxu0 0
    %2950 = vmatpush1.bf16.msra.mxu0 0
    %2951 = vmatprep.subr.bf16.mxu0 0
    %2952 = vmatpush1.bf16.msra.mxu0 0
    %2953 = vmatprep.subr.bf16.mxu0 0
    %2954 = vmatpush1.bf16.msra.mxu0 0
    %2955 = vmatprep.subr.bf16.mxu0 0
    %2956 = vmatpush1.bf16.msra.mxu0 0
    %2957 = vmatprep.subr.bf16.mxu0 0
    %2958 = vmatpush1.bf16.msra.mxu0 0
    %2959 = vmatprep.subr.bf16.mxu0 0
    %2960 = vmatpush1.bf16.msra.mxu0 0
    %2961 = vmatprep.mubr.bf16.mxu0 0
    %2962 = vmatmul.mubr.bf16.gmra.mrb[0].mxu0 %v2919
    %v2963 = vpop.f32.mrb[0].mxu0
    %v2964 = vadd.f32 0.0, %v2963
    %v2965 = vpop.f32.mrb[0].mxu0
    %v2966 = vadd.f32 0.0, %v2965
    %v2967 = vpop.f32.mrb[0].mxu0
    %v2968 = vadd.f32 0.0, %v2967
    %v2969 = vpop.f32.mrb[0].mxu0
    %v2970 = vadd.f32 0.0, %v2969
    %2971 = vdwg.mxu0
    %2972 = vmatprep.subr.bf16.mxu0 %v1972
    %2973 = vmatpush1.bf16.msra.mxu0 %v1971
    %2974 = vmatprep.subr.bf16.mxu0 %v1976
    %2975 = vmatpush1.bf16.msra.mxu0 %v1975
    %2976 = vmatprep.subr.bf16.mxu0 %v1980
    %2977 = vmatpush1.bf16.msra.mxu0 %v1979
    %2978 = vmatprep.subr.bf16.mxu0 %v1984
    %2979 = vmatpush1.bf16.msra.mxu0 %v1983
    %2980 = vmatprep.subr.bf16.mxu0 %v1988
    %2981 = vmatpush1.bf16.msra.mxu0 %v1987
    %2982 = vmatprep.subr.bf16.mxu0 %v1992
    %2983 = vmatpush1.bf16.msra.mxu0 %v1991
    %2984 = vmatprep.subr.bf16.mxu0 %v1996
    %2985 = vmatpush1.bf16.msra.mxu0 %v1995
    %2986 = vmatprep.subr.bf16.mxu0 %v2000
    %2987 = vmatpush1.bf16.msra.mxu0 %v1999
    %2988 = vmatprep.subr.bf16.mxu0 0
    %2989 = vmatpush1.bf16.msra.mxu0 0
    %2990 = vmatprep.subr.bf16.mxu0 0
    %2991 = vmatpush1.bf16.msra.mxu0 0
    %2992 = vmatprep.subr.bf16.mxu0 0
    %2993 = vmatpush1.bf16.msra.mxu0 0
    %2994 = vmatprep.subr.bf16.mxu0 0
    %2995 = vmatpush1.bf16.msra.mxu0 0
    %2996 = vmatprep.subr.bf16.mxu0 0
    %2997 = vmatpush1.bf16.msra.mxu0 0
    %2998 = vmatprep.subr.bf16.mxu0 0
    %2999 = vmatpush1.bf16.msra.mxu0 0
    %3000 = vmatprep.subr.bf16.mxu0 0
    %3001 = vmatpush1.bf16.msra.mxu0 0
    %3002 = vmatprep.subr.bf16.mxu0 0
    %3003 = vmatpush1.bf16.msra.mxu0 0
    %3004 = vmatprep.mubr.bf16.mxu0 0
    %3005 = vmatmul.mubr.bf16.gmra.mrb[0].mxu0 %v2919
    %v3006 = vpop.f32.mrb[0].mxu0
    %v3007 = vadd.f32 0.0, %v3006
    %v3008 = vpop.f32.mrb[0].mxu0
    %v3009 = vadd.f32 0.0, %v3008
    %v3010 = vpop.f32.mrb[0].mxu0
    %v3011 = vadd.f32 0.0, %v3010
    %v3012 = vpop.f32.mrb[0].mxu0
    %v3013 = vadd.f32 0.0, %v3012
    %3014 = vdwg.mxu0
    %v3015 = vadd.f32 %v2921, %v2964
    %v3016 = vadd.f32 %v2922, %v2966
    %v3017 = vadd.f32 %v2923, %v3007
    %v3018 = vadd.f32 %v2924, %v3009
    %v3019 = vadd.f32 %v2925, %v2968
    %v3020 = vadd.f32 %v2926, %v2970
    %v3021 = vadd.f32 %v2927, %v3011
    %v3022 = vadd.f32 %v2928, %v3013
    %v3023 = vadd.f32 %v3015, %v2414
    %v3024 = vadd.f32 %v3016, %v2418
    %v3025 = vadd.f32 %v3017, %v2422
    %v3026 = vadd.f32 %v3018, %v2426
    %v3027 = vadd.f32 %v3019, %v2414
    %v3028 = vadd.f32 %v3020, %v2418
    %v3029 = vadd.f32 %v3021, %v2422
    %v3030 = vadd.f32 %v3022, %v2426
    %v3031 = vmul.f32 %v3023, 0.5
    %v3032 = vmul.f32 %v3027, 0.5
    %v3033 = vtanh.pop %v3031
    %v3034 = vtanh.pop %v3032
    %v3035 = vmul.f32 %v3033, 0.5
    %v3036 = vmul.f32 %v3034, 0.5
    %v3037 = vadd.f32 %v3035, 0.5
    %v3038 = vadd.f32 %v3036, 0.5
    %v3039 = vmul.f32 %v3024, 0.5
    %v3040 = vmul.f32 %v3028, 0.5
    %v3041 = vtanh.pop %v3039
    %v3042 = vtanh.pop %v3040
    %v3043 = vmul.f32 %v3041, 0.5
    %v3044 = vmul.f32 %v3042, 0.5
    %v3045 = vadd.f32 %v3043, 0.5
    %v3046 = vadd.f32 %v3044, 0.5
    %v3047 = vtanh.pop %v3025
    %v3048 = vtanh.pop %v3029
    %v3049 = vmul.f32 %v3026, 0.5
    %v3050 = vmul.f32 %v3030, 0.5
    %v3051 = vtanh.pop %v3049
    %v3052 = vtanh.pop %v3050
    %v3053 = vmul.f32 %v3051, 0.5
    %v3054 = vmul.f32 %v3052, 0.5
    %v3055 = vadd.f32 %v3053, 0.5
    %v3056 = vadd.f32 %v3054, 0.5
    %v3057 = vmul.f32 %v3045, %v2913
    %v3058 = vmul.f32 %v3046, %v2914
    %v3059 = vmul.f32 %v3037, %v3047
    %v3060 = vmul.f32 %v3038, %v3048
    %v3061 = vadd.f32 %v3057, %v3059
    %v3062 = vadd.f32 %v3058, %v3060
    %v3063 = vtanh.pop %v3061
    %v3064 = vtanh.pop %v3062
    %v3065 = vmul.f32 %v3055, %v3063
    %v3066 = vmul.f32 %v3056, %v3064
    %v3067 = vpack.c.bf16 %v3066, %v3065
    %3068 = vst [vmem:[%s1468] sm:$0xff] %v3067
    %v3069 = vld [vmem:[%s1470] sm:$0xff]
    %v3070 = vld [vmem:[%s1470 + $0x8] sm:$0xff]
    %v3071 = vld [vmem:[%s1470 + $0x10] sm:$0xff]
    %v3072 = vld [vmem:[%s1470 + $0x18] sm:$0xff]
    %v3073 = vld [vmem:[%s1470 + $0x20] sm:$0xff]
    %v3074 = vld [vmem:[%s1470 + $0x28] sm:$0xff]
    %v3075 = vld [vmem:[%s1470 + $0x30] sm:$0xff]
    %v3076 = vld [vmem:[%s1470 + $0x38] sm:$0xff]
    %3077 = vmatprep.subr.bf16.mxu0 %v1970
    %3078 = vmatpush1.bf16.msra.mxu0 %v1969
    %3079 = vmatprep.subr.bf16.mxu0 %v1974
    %3080 = vmatpush1.bf16.msra.mxu0 %v1973
    %3081 = vmatprep.subr.bf16.mxu0 %v1978
    %3082 = vmatpush1.bf16.msra.mxu0 %v1977
    %3083 = vmatprep.subr.bf16.mxu0 %v1982
    %3084 = vmatpush1.bf16.msra.mxu0 %v1981
    %3085 = vmatprep.subr.bf16.mxu0 %v1986
    %3086 = vmatpush1.bf16.msra.mxu0 %v1985
    %3087 = vmatprep.subr.bf16.mxu0 %v1990
    %3088 = vmatpush1.bf16.msra.mxu0 %v1989
    %3089 = vmatprep.subr.bf16.mxu0 %v1994
    %3090 = vmatpush1.bf16.msra.mxu0 %v1993
    %3091 = vmatprep.subr.bf16.mxu0 %v1998
    %3092 = vmatpush1.bf16.msra.mxu0 %v1997
    %3093 = vmatprep.subr.bf16.mxu0 0
    %3094 = vmatpush1.bf16.msra.mxu0 0
    %3095 = vmatprep.subr.bf16.mxu0 0
    %3096 = vmatpush1.bf16.msra.mxu0 0
    %3097 = vmatprep.subr.bf16.mxu0 0
    %3098 = vmatpush1.bf16.msra.mxu0 0
    %3099 = vmatprep.subr.bf16.mxu0 0
    %3100 = vmatpush1.bf16.msra.mxu0 0
    %3101 = vmatprep.subr.bf16.mxu0 0
    %3102 = vmatpush1.bf16.msra.mxu0 0
    %3103 = vmatprep.subr.bf16.mxu0 0
    %3104 = vmatpush1.bf16.msra.mxu0 0
    %3105 = vmatprep.subr.bf16.mxu0 0
    %3106 = vmatpush1.bf16.msra.mxu0 0
    %3107 = vmatprep.subr.bf16.mxu0 0
    %3108 = vmatpush1.bf16.msra.mxu0 0
    %3109 = vmatprep.mubr.bf16.mxu0 0
    %3110 = vmatmul.mubr.bf16.gmra.mrb[0].mxu0 %v3067
    %v3111 = vpop.f32.mrb[0].mxu0
    %v3112 = vadd.f32 0.0, %v3111
    %v3113 = vpop.f32.mrb[0].mxu0
    %v3114 = vadd.f32 0.0, %v3113
    %v3115 = vpop.f32.mrb[0].mxu0
    %v3116 = vadd.f32 0.0, %v3115
    %v3117 = vpop.f32.mrb[0].mxu0
    %v3118 = vadd.f32 0.0, %v3117
    %3119 = vdwg.mxu0
    %3120 = vmatprep.subr.bf16.mxu0 %v1972
    %3121 = vmatpush1.bf16.msra.mxu0 %v1971
    %3122 = vmatprep.subr.bf16.mxu0 %v1976
    %3123 = vmatpush1.bf16.msra.mxu0 %v1975
    %3124 = vmatprep.subr.bf16.mxu0 %v1980
    %3125 = vmatpush1.bf16.msra.mxu0 %v1979
    %3126 = vmatprep.subr.bf16.mxu0 %v1984
    %3127 = vmatpush1.bf16.msra.mxu0 %v1983
    %3128 = vmatprep.subr.bf16.mxu0 %v1988
    %3129 = vmatpush1.bf16.msra.mxu0 %v1987
    %3130 = vmatprep.subr.bf16.mxu0 %v1992
    %3131 = vmatpush1.bf16.msra.mxu0 %v1991
    %3132 = vmatprep.subr.bf16.mxu0 %v1996
    %3133 = vmatpush1.bf16.msra.mxu0 %v1995
    %3134 = vmatprep.subr.bf16.mxu0 %v2000
    %3135 = vmatpush1.bf16.msra.mxu0 %v1999
    %3136 = vmatprep.subr.bf16.mxu0 0
    %3137 = vmatpush1.bf16.msra.mxu0 0
    %3138 = vmatprep.subr.bf16.mxu0 0
    %3139 = vmatpush1.bf16.msra.mxu0 0
    %3140 = vmatprep.subr.bf16.mxu0 0
    %3141 = vmatpush1.bf16.msra.mxu0 0
    %3142 = vmatprep.subr.bf16.mxu0 0
    %3143 = vmatpush1.bf16.msra.mxu0 0
    %3144 = vmatprep.subr.bf16.mxu0 0
    %3145 = vmatpush1.bf16.msra.mxu0 0
    %3146 = vmatprep.subr.bf16.mxu0 0
    %3147 = vmatpush1.bf16.msra.mxu0 0
    %3148 = vmatprep.subr.bf16.mxu0 0
    %3149 = vmatpush1.bf16.msra.mxu0 0
    %3150 = vmatprep.subr.bf16.mxu0 0
    %3151 = vmatpush1.bf16.msra.mxu0 0
    %3152 = vmatprep.mubr.bf16.mxu0 0
    %3153 = vmatmul.mubr.bf16.gmra.mrb[0].mxu0 %v3067
    %v3154 = vpop.f32.mrb[0].mxu0
    %v3155 = vadd.f32 0.0, %v3154
    %v3156 = vpop.f32.mrb[0].mxu0
    %v3157 = vadd.f32 0.0, %v3156
    %v3158 = vpop.f32.mrb[0].mxu0
    %v3159 = vadd.f32 0.0, %v3158
    %v3160 = vpop.f32.mrb[0].mxu0
    %v3161 = vadd.f32 0.0, %v3160
    %3162 = vdwg.mxu0
    %v3163 = vadd.f32 %v3069, %v3112
    %v3164 = vadd.f32 %v3070, %v3114
    %v3165 = vadd.f32 %v3071, %v3155
    %v3166 = vadd.f32 %v3072, %v3157
    %v3167 = vadd.f32 %v3073, %v3116
    %v3168 = vadd.f32 %v3074, %v3118
    %v3169 = vadd.f32 %v3075, %v3159
    %v3170 = vadd.f32 %v3076, %v3161
    %v3171 = vadd.f32 %v3163, %v2414
    %v3172 = vadd.f32 %v3164, %v2418
    %v3173 = vadd.f32 %v3165, %v2422
    %v3174 = vadd.f32 %v3166, %v2426
    %v3175 = vadd.f32 %v3167, %v2414
    %v3176 = vadd.f32 %v3168, %v2418
    %v3177 = vadd.f32 %v3169, %v2422
    %v3178 = vadd.f32 %v3170, %v2426
    %v3179 = vmul.f32 %v3171, 0.5
    %v3180 = vmul.f32 %v3175, 0.5
    %v3181 = vtanh.pop %v3179
    %v3182 = vtanh.pop %v3180
    %v3183 = vmul.f32 %v3181, 0.5
    %v3184 = vmul.f32 %v3182, 0.5
    %v3185 = vadd.f32 %v3183, 0.5
    %v3186 = vadd.f32 %v3184, 0.5
    %v3187 = vmul.f32 %v3172, 0.5
    %v3188 = vmul.f32 %v3176, 0.5
    %v3189 = vtanh.pop %v3187
    %v3190 = vtanh.pop %v3188
    %v3191 = vmul.f32 %v3189, 0.5
    %v3192 = vmul.f32 %v3190, 0.5
    %v3193 = vadd.f32 %v3191, 0.5
    %v3194 = vadd.f32 %v3192, 0.5
    %v3195 = vtanh.pop %v3173
    %v3196 = vtanh.pop %v3177
    %v3197 = vmul.f32 %v3174, 0.5
    %v3198 = vmul.f32 %v3178, 0.5
    %v3199 = vtanh.pop %v3197
    %v3200 = vtanh.pop %v3198
    %v3201 = vmul.f32 %v3199, 0.5
    %v3202 = vmul.f32 %v3200, 0.5
    %v3203 = vadd.f32 %v3201, 0.5
    %v3204 = vadd.f32 %v3202, 0.5
    %v3205 = vmul.f32 %v3193, %v3061
    %v3206 = vmul.f32 %v3194, %v3062
    %v3207 = vmul.f32 %v3185, %v3195
    %v3208 = vmul.f32 %v3186, %v3196
    %v3209 = vadd.f32 %v3205, %v3207
    %v3210 = vadd.f32 %v3206, %v3208
    %v3211 = vtanh.pop %v3209
    %v3212 = vtanh.pop %v3210
    %v3213 = vmul.f32 %v3203, %v3211
    %v3214 = vmul.f32 %v3204, %v3212
    %v3215 = vpack.c.bf16 %v3214, %v3213
    %3216 = vst [vmem:[%s1618] sm:$0xff] %v3215
    %v3217 = vld [vmem:[%s1620] sm:$0xff]
    %v3218 = vld [vmem:[%s1620 + $0x8] sm:$0xff]
    %v3219 = vld [vmem:[%s1620 + $0x10] sm:$0xff]
    %v3220 = vld [vmem:[%s1620 + $0x18] sm:$0xff]
    %v3221 = vld [vmem:[%s1620 + $0x20] sm:$0xff]
    %v3222 = vld [vmem:[%s1620 + $0x28] sm:$0xff]
    %v3223 = vld [vmem:[%s1620 + $0x30] sm:$0xff]
    %v3224 = vld [vmem:[%s1620 + $0x38] sm:$0xff]
    %3225 = vmatprep.subr.bf16.mxu0 %v1970
    %3226 = vmatpush1.bf16.msra.mxu0 %v1969
    %3227 = vmatprep.subr.bf16.mxu0 %v1974
    %3228 = vmatpush1.bf16.msra.mxu0 %v1973
    %3229 = vmatprep.subr.bf16.mxu0 %v1978
    %3230 = vmatpush1.bf16.msra.mxu0 %v1977
    %3231 = vmatprep.subr.bf16.mxu0 %v1982
    %3232 = vmatpush1.bf16.msra.mxu0 %v1981
    %3233 = vmatprep.subr.bf16.mxu0 %v1986
    %3234 = vmatpush1.bf16.msra.mxu0 %v1985
    %3235 = vmatprep.subr.bf16.mxu0 %v1990
    %3236 = vmatpush1.bf16.msra.mxu0 %v1989
    %3237 = vmatprep.subr.bf16.mxu0 %v1994
    %3238 = vmatpush1.bf16.msra.mxu0 %v1993
    %3239 = vmatprep.subr.bf16.mxu0 %v1998
    %3240 = vmatpush1.bf16.msra.mxu0 %v1997
    %3241 = vmatprep.subr.bf16.mxu0 0
    %3242 = vmatpush1.bf16.msra.mxu0 0
    %3243 = vmatprep.subr.bf16.mxu0 0
    %3244 = vmatpush1.bf16.msra.mxu0 0
    %3245 = vmatprep.subr.bf16.mxu0 0
    %3246 = vmatpush1.bf16.msra.mxu0 0
    %3247 = vmatprep.subr.bf16.mxu0 0
    %3248 = vmatpush1.bf16.msra.mxu0 0
    %3249 = vmatprep.subr.bf16.mxu0 0
    %3250 = vmatpush1.bf16.msra.mxu0 0
    %3251 = vmatprep.subr.bf16.mxu0 0
    %3252 = vmatpush1.bf16.msra.mxu0 0
    %3253 = vmatprep.subr.bf16.mxu0 0
    %3254 = vmatpush1.bf16.msra.mxu0 0
    %3255 = vmatprep.subr.bf16.mxu0 0
    %3256 = vmatpush1.bf16.msra.mxu0 0
    %3257 = vmatprep.mubr.bf16.mxu0 0
    %3258 = vmatmul.mubr.bf16.gmra.mrb[0].mxu0 %v3215
    %v3259 = vpop.f32.mrb[0].mxu0
    %v3260 = vadd.f32 0.0, %v3259
    %v3261 = vpop.f32.mrb[0].mxu0
    %v3262 = vadd.f32 0.0, %v3261
    %v3263 = vpop.f32.mrb[0].mxu0
    %v3264 = vadd.f32 0.0, %v3263
    %v3265 = vpop.f32.mrb[0].mxu0
    %v3266 = vadd.f32 0.0, %v3265
    %3267 = vdwg.mxu0
    %3268 = vmatprep.subr.bf16.mxu0 %v1972
    %3269 = vmatpush1.bf16.msra.mxu0 %v1971
    %3270 = vmatprep.subr.bf16.mxu0 %v1976
    %3271 = vmatpush1.bf16.msra.mxu0 %v1975
    %3272 = vmatprep.subr.bf16.mxu0 %v1980
    %3273 = vmatpush1.bf16.msra.mxu0 %v1979
    %3274 = vmatprep.subr.bf16.mxu0 %v1984
    %3275 = vmatpush1.bf16.msra.mxu0 %v1983
    %3276 = vmatprep.subr.bf16.mxu0 %v1988
    %3277 = vmatpush1.bf16.msra.mxu0 %v1987
    %3278 = vmatprep.subr.bf16.mxu0 %v1992
    %3279 = vmatpush1.bf16.msra.mxu0 %v1991
    %3280 = vmatprep.subr.bf16.mxu0 %v1996
    %3281 = vmatpush1.bf16.msra.mxu0 %v1995
    %3282 = vmatprep.subr.bf16.mxu0 %v2000
    %3283 = vmatpush1.bf16.msra.mxu0 %v1999
    %3284 = vmatprep.subr.bf16.mxu0 0
    %3285 = vmatpush1.bf16.msra.mxu0 0
    %3286 = vmatprep.subr.bf16.mxu0 0
    %3287 = vmatpush1.bf16.msra.mxu0 0
    %3288 = vmatprep.subr.bf16.mxu0 0
    %3289 = vmatpush1.bf16.msra.mxu0 0
    %3290 = vmatprep.subr.bf16.mxu0 0
    %3291 = vmatpush1.bf16.msra.mxu0 0
    %3292 = vmatprep.subr.bf16.mxu0 0
    %3293 = vmatpush1.bf16.msra.mxu0 0
    %3294 = vmatprep.subr.bf16.mxu0 0
    %3295 = vmatpush1.bf16.msra.mxu0 0
    %3296 = vmatprep.subr.bf16.mxu0 0
    %3297 = vmatpush1.bf16.msra.mxu0 0
    %3298 = vmatprep.subr.bf16.mxu0 0
    %3299 = vmatpush1.bf16.msra.mxu0 0
    %3300 = vmatprep.mubr.bf16.mxu0 0
    %3301 = vmatmul.mubr.bf16.gmra.mrb[0].mxu0 %v3215
    %v3302 = vpop.f32.mrb[0].mxu0
    %v3303 = vadd.f32 0.0, %v3302
    %v3304 = vpop.f32.mrb[0].mxu0
    %v3305 = vadd.f32 0.0, %v3304
    %v3306 = vpop.f32.mrb[0].mxu0
    %v3307 = vadd.f32 0.0, %v3306
    %v3308 = vpop.f32.mrb[0].mxu0
    %v3309 = vadd.f32 0.0, %v3308
    %3310 = vdwg.mxu0
    %v3311 = vadd.f32 %v3217, %v3260
    %v3312 = vadd.f32 %v3218, %v3262
    %v3313 = vadd.f32 %v3219, %v3303
    %v3314 = vadd.f32 %v3220, %v3305
    %v3315 = vadd.f32 %v3221, %v3264
    %v3316 = vadd.f32 %v3222, %v3266
    %v3317 = vadd.f32 %v3223, %v3307
    %v3318 = vadd.f32 %v3224, %v3309
    %v3319 = vadd.f32 %v3311, %v2414
    %v3320 = vadd.f32 %v3312, %v2418
    %v3321 = vadd.f32 %v3313, %v2422
    %v3322 = vadd.f32 %v3314, %v2426
    %v3323 = vadd.f32 %v3315, %v2414
    %v3324 = vadd.f32 %v3316, %v2418
    %v3325 = vadd.f32 %v3317, %v2422
    %v3326 = vadd.f32 %v3318, %v2426
    %v3327 = vmul.f32 %v3319, 0.5
    %v3328 = vmul.f32 %v3323, 0.5
    %v3329 = vtanh.pop %v3327
    %v3330 = vtanh.pop %v3328
    %v3331 = vmul.f32 %v3329, 0.5
    %v3332 = vmul.f32 %v3330, 0.5
    %v3333 = vadd.f32 %v3331, 0.5
    %v3334 = vadd.f32 %v3332, 0.5
    %v3335 = vmul.f32 %v3320, 0.5
    %v3336 = vmul.f32 %v3324, 0.5
    %v3337 = vtanh.pop %v3335
    %v3338 = vtanh.pop %v3336
    %v3339 = vmul.f32 %v3337, 0.5
    %v3340 = vmul.f32 %v3338, 0.5
    %v3341 = vadd.f32 %v3339, 0.5
    %v3342 = vadd.f32 %v3340, 0.5
    %v3343 = vtanh.pop %v3321
    %v3344 = vtanh.pop %v3325
    %v3345 = vmul.f32 %v3322, 0.5
    %v3346 = vmul.f32 %v3326, 0.5
    %v3347 = vtanh.pop %v3345
    %v3348 = vtanh.pop %v3346
    %v3349 = vmul.f32 %v3347, 0.5
    %v3350 = vmul.f32 %v3348, 0.5
    %v3351 = vadd.f32 %v3349, 0.5
    %v3352 = vadd.f32 %v3350, 0.5
    %v3353 = vmul.f32 %v3341, %v3209
    %v3354 = vmul.f32 %v3342, %v3210
    %v3355 = vmul.f32 %v3333, %v3343
    %v3356 = vmul.f32 %v3334, %v3344
    %v3357 = vadd.f32 %v3353, %v3355
    %v3358 = vadd.f32 %v3354, %v3356
    %v3359 = vtanh.pop %v3357
    %v3360 = vtanh.pop %v3358
    %v3361 = vmul.f32 %v3351, %v3359
    %v3362 = vmul.f32 %v3352, %v3360
    %v3363 = vpack.c.bf16 %v3362, %v3361
    %3364 = vst [vmem:[%s1768] sm:$0xff] %v3363
    %v3365 = vld [vmem:[%s1770] sm:$0xff]
    %v3366 = vld [vmem:[%s1770 + $0x8] sm:$0xff]
    %v3367 = vld [vmem:[%s1770 + $0x10] sm:$0xff]
    %v3368 = vld [vmem:[%s1770 + $0x18] sm:$0xff]
    %v3369 = vld [vmem:[%s1770 + $0x20] sm:$0xff]
    %v3370 = vld [vmem:[%s1770 + $0x28] sm:$0xff]
    %v3371 = vld [vmem:[%s1770 + $0x30] sm:$0xff]
    %v3372 = vld [vmem:[%s1770 + $0x38] sm:$0xff]
    %3373 = vmatprep.subr.bf16.mxu0 %v1970
    %3374 = vmatpush1.bf16.msra.mxu0 %v1969
    %3375 = vmatprep.subr.bf16.mxu0 %v1974
    %3376 = vmatpush1.bf16.msra.mxu0 %v1973
    %3377 = vmatprep.subr.bf16.mxu0 %v1978
    %3378 = vmatpush1.bf16.msra.mxu0 %v1977
    %3379 = vmatprep.subr.bf16.mxu0 %v1982
    %3380 = vmatpush1.bf16.msra.mxu0 %v1981
    %3381 = vmatprep.subr.bf16.mxu0 %v1986
    %3382 = vmatpush1.bf16.msra.mxu0 %v1985
    %3383 = vmatprep.subr.bf16.mxu0 %v1990
    %3384 = vmatpush1.bf16.msra.mxu0 %v1989
    %3385 = vmatprep.subr.bf16.mxu0 %v1994
    %3386 = vmatpush1.bf16.msra.mxu0 %v1993
    %3387 = vmatprep.subr.bf16.mxu0 %v1998
    %3388 = vmatpush1.bf16.msra.mxu0 %v1997
    %3389 = vmatprep.subr.bf16.mxu0 0
    %3390 = vmatpush1.bf16.msra.mxu0 0
    %3391 = vmatprep.subr.bf16.mxu0 0
    %3392 = vmatpush1.bf16.msra.mxu0 0
    %3393 = vmatprep.subr.bf16.mxu0 0
    %3394 = vmatpush1.bf16.msra.mxu0 0
    %3395 = vmatprep.subr.bf16.mxu0 0
    %3396 = vmatpush1.bf16.msra.mxu0 0
    %3397 = vmatprep.subr.bf16.mxu0 0
    %3398 = vmatpush1.bf16.msra.mxu0 0
    %3399 = vmatprep.subr.bf16.mxu0 0
    %3400 = vmatpush1.bf16.msra.mxu0 0
    %3401 = vmatprep.subr.bf16.mxu0 0
    %3402 = vmatpush1.bf16.msra.mxu0 0
    %3403 = vmatprep.subr.bf16.mxu0 0
    %3404 = vmatpush1.bf16.msra.mxu0 0
    %3405 = vmatprep.mubr.bf16.mxu0 0
    %3406 = vmatmul.mubr.bf16.gmra.mrb[0].mxu0 %v3363
    %v3407 = vpop.f32.mrb[0].mxu0
    %v3408 = vadd.f32 0.0, %v3407
    %v3409 = vpop.f32.mrb[0].mxu0
    %v3410 = vadd.f32 0.0, %v3409
    %v3411 = vpop.f32.mrb[0].mxu0
    %v3412 = vadd.f32 0.0, %v3411
    %v3413 = vpop.f32.mrb[0].mxu0
    %v3414 = vadd.f32 0.0, %v3413
    %3415 = vdwg.mxu0
    %3416 = vmatprep.subr.bf16.mxu0 %v1972
    %3417 = vmatpush1.bf16.msra.mxu0 %v1971
    %3418 = vmatprep.subr.bf16.mxu0 %v1976
    %3419 = vmatpush1.bf16.msra.mxu0 %v1975
    %3420 = vmatprep.subr.bf16.mxu0 %v1980
    %3421 = vmatpush1.bf16.msra.mxu0 %v1979
    %3422 = vmatprep.subr.bf16.mxu0 %v1984
    %3423 = vmatpush1.bf16.msra.mxu0 %v1983
    %3424 = vmatprep.subr.bf16.mxu0 %v1988
    %3425 = vmatpush1.bf16.msra.mxu0 %v1987
    %3426 = vmatprep.subr.bf16.mxu0 %v1992
    %3427 = vmatpush1.bf16.msra.mxu0 %v1991
    %3428 = vmatprep.subr.bf16.mxu0 %v1996
    %3429 = vmatpush1.bf16.msra.mxu0 %v1995
    %3430 = vmatprep.subr.bf16.mxu0 %v2000
    %3431 = vmatpush1.bf16.msra.mxu0 %v1999
    %3432 = vmatprep.subr.bf16.mxu0 0
    %3433 = vmatpush1.bf16.msra.mxu0 0
    %3434 = vmatprep.subr.bf16.mxu0 0
    %3435 = vmatpush1.bf16.msra.mxu0 0
    %3436 = vmatprep.subr.bf16.mxu0 0
    %3437 = vmatpush1.bf16.msra.mxu0 0
    %3438 = vmatprep.subr.bf16.mxu0 0
    %3439 = vmatpush1.bf16.msra.mxu0 0
    %3440 = vmatprep.subr.bf16.mxu0 0
    %3441 = vmatpush1.bf16.msra.mxu0 0
    %3442 = vmatprep.subr.bf16.mxu0 0
    %3443 = vmatpush1.bf16.msra.mxu0 0
    %3444 = vmatprep.subr.bf16.mxu0 0
    %3445 = vmatpush1.bf16.msra.mxu0 0
    %3446 = vmatprep.subr.bf16.mxu0 0
    %3447 = vmatpush1.bf16.msra.mxu0 0
    %3448 = vmatprep.mubr.bf16.mxu0 0
    %3449 = vmatmul.mubr.bf16.gmra.mrb[0].mxu0 %v3363
    %v3450 = vpop.f32.mrb[0].mxu0
    %v3451 = vadd.f32 0.0, %v3450
    %v3452 = vpop.f32.mrb[0].mxu0
    %v3453 = vadd.f32 0.0, %v3452
    %v3454 = vpop.f32.mrb[0].mxu0
    %v3455 = vadd.f32 0.0, %v3454
    %v3456 = vpop.f32.mrb[0].mxu0
    %v3457 = vadd.f32 0.0, %v3456
    %3458 = vdwg.mxu0
    %v3459 = vadd.f32 %v3365, %v3408
    %v3460 = vadd.f32 %v3366, %v3410
    %v3461 = vadd.f32 %v3367, %v3451
    %v3462 = vadd.f32 %v3368, %v3453
    %v3463 = vadd.f32 %v3369, %v3412
    %v3464 = vadd.f32 %v3370, %v3414
    %v3465 = vadd.f32 %v3371, %v3455
    %v3466 = vadd.f32 %v3372, %v3457
    %v3467 = vadd.f32 %v3459, %v2414
    %v3468 = vadd.f32 %v3460, %v2418
    %v3469 = vadd.f32 %v3461, %v2422
    %v3470 = vadd.f32 %v3462, %v2426
    %v3471 = vadd.f32 %v3463, %v2414
    %v3472 = vadd.f32 %v3464, %v2418
    %v3473 = vadd.f32 %v3465, %v2422
    %v3474 = vadd.f32 %v3466, %v2426
    %v3475 = vmul.f32 %v3467, 0.5
    %v3476 = vmul.f32 %v3471, 0.5
    %v3477 = vtanh.pop %v3475
    %v3478 = vtanh.pop %v3476
    %v3479 = vmul.f32 %v3477, 0.5
    %v3480 = vmul.f32 %v3478, 0.5
    %v3481 = vadd.f32 %v3479, 0.5
    %v3482 = vadd.f32 %v3480, 0.5
    %v3483 = vmul.f32 %v3468, 0.5
    %v3484 = vmul.f32 %v3472, 0.5
    %v3485 = vtanh.pop %v3483
    %v3486 = vtanh.pop %v3484
    %v3487 = vmul.f32 %v3485, 0.5
    %v3488 = vmul.f32 %v3486, 0.5
    %v3489 = vadd.f32 %v3487, 0.5
    %v3490 = vadd.f32 %v3488, 0.5
    %v3491 = vtanh.pop %v3469
    %v3492 = vtanh.pop %v3473
    %v3493 = vmul.f32 %v3470, 0.5
    %v3494 = vmul.f32 %v3474, 0.5
    %v3495 = vtanh.pop %v3493
    %v3496 = vtanh.pop %v3494
    %v3497 = vmul.f32 %v3495, 0.5
    %v3498 = vmul.f32 %v3496, 0.5
    %v3499 = vadd.f32 %v3497, 0.5
    %v3500 = vadd.f32 %v3498, 0.5
    %v3501 = vmul.f32 %v3489, %v3357
    %v3502 = vmul.f32 %v3490, %v3358
    %v3503 = vmul.f32 %v3481, %v3491
    %v3504 = vmul.f32 %v3482, %v3492
    %v3505 = vadd.f32 %v3501, %v3503
    %v3506 = vadd.f32 %v3502, %v3504
    %v3507 = vtanh.pop %v3505
    %v3508 = vtanh.pop %v3506
    %v3509 = vmul.f32 %v3499, %v3507
    %v3510 = vmul.f32 %v3500, %v3508
    %v3511 = vpack.c.bf16 %v3510, %v3509
    %3512 = vst [vmem:[%s1918] sm:$0xff] %v3511
    %3513 = vst [vmem:[%s2301] sm:$0xff] %v3509
    %3514 = vst [vmem:[%s2301 + $0x8] sm:$0xff] %v3510
    %3515 = vst [vmem:[%s2304] sm:$0xff] %v3505
    %3516 = vst [vmem:[%s2304 + $0x8] sm:$0xff] %v3506
    %v3517 = vld [vmem:[#allocation5] sm:$0xff]
    %v3518 = vld [vmem:[#allocation5 + $0x8] sm:$0xff]
    %v3519 = vld [vmem:[#allocation5 + $0x10] sm:$0xff]
    %v3520 = vld [vmem:[#allocation5 + $0x18] sm:$0xff]
    %v3521 = vld [vmem:[#allocation5 + $0x20] sm:$0xff]
    %v3522 = vld [vmem:[#allocation5 + $0x28] sm:$0xff]
    %v3523 = vld [vmem:[#allocation5 + $0x30] sm:$0xff]
    %v3524 = vld [vmem:[#allocation5 + $0x38] sm:$0xff]
    %v3526 = vlaneseq
    %v3527 = vshrl.u32 %v3526, 7
    %v3528 = vsub.s32 0, %v3527
    %v3529 = vrot.slane %v266, %v3528
    %v3547 = vunpack.c.l.b16 %v250
    %v3548 = vunpack.c.l.b16 %v251
    %v3549 = vunpack.c.l.b16 %v252
    %v3550 = vunpack.c.l.b16 %v253
    %v3551 = vunpack.c.l.b16 %v254
    %v3552 = vunpack.c.l.b16 %v255
    %v3553 = vunpack.c.l.b16 %v256
    %v3554 = vunpack.c.l.b16 %v257
    %v3555 = vunpack.c.l.b16 %v258
    %v3556 = vunpack.c.l.b16 %v259
    %v3557 = vunpack.c.l.b16 %v260
    %v3558 = vunpack.c.l.b16 %v261
    %v3559 = vunpack.c.l.b16 %v262
    %v3560 = vunpack.c.l.b16 %v263
    %v3561 = vunpack.c.l.b16 %v264
    %v3562 = vunpack.c.l.b16 %v265
    %v3563 = vpack.c.b16 %v3548, %v3547
    %v3564 = vpack.c.b16 %v3550, %v3549
    %v3565 = vpack.c.b16 %v3552, %v3551
    %v3566 = vpack.c.b16 %v3554, %v3553
    %v3567 = vpack.c.b16 %v3556, %v3555
    %v3568 = vpack.c.b16 %v3558, %v3557
    %v3569 = vpack.c.b16 %v3560, %v3559
    %v3570 = vpack.c.b16 %v3562, %v3561
    %3579 = vmatprep.subr.bf16.mxu0 0
    %3580 = vmatpush1.bf16.msra.mxu0 %v3563
    %3581 = vmatprep.subr.bf16.mxu0 0
    %3582 = vmatpush1.bf16.msra.mxu0 %v3564
    %3583 = vmatprep.subr.bf16.mxu0 0
    %3584 = vmatpush1.bf16.msra.mxu0 %v3565
    %3585 = vmatprep.subr.bf16.mxu0 0
    %3586 = vmatpush1.bf16.msra.mxu0 %v3566
    %3587 = vmatprep.subr.bf16.mxu0 0
    %3588 = vmatpush1.bf16.msra.mxu0 %v3567
    %3589 = vmatprep.subr.bf16.mxu0 0
    %3590 = vmatpush1.bf16.msra.mxu0 %v3568
    %3591 = vmatprep.subr.bf16.mxu0 0
    %3592 = vmatpush1.bf16.msra.mxu0 %v3569
    %3593 = vmatprep.subr.bf16.mxu0 0
    %3594 = vmatpush1.bf16.msra.mxu0 %v3570
    %3595 = vmatprep.subr.bf16.mxu0 0
    %3596 = vmatpush1.bf16.msra.mxu0 0
    %3597 = vmatprep.subr.bf16.mxu0 0
    %3598 = vmatpush1.bf16.msra.mxu0 0
    %3599 = vmatprep.subr.bf16.mxu0 0
    %3600 = vmatpush1.bf16.msra.mxu0 0
    %3601 = vmatprep.subr.bf16.mxu0 0
    %3602 = vmatpush1.bf16.msra.mxu0 0
    %3603 = vmatprep.subr.bf16.mxu0 0
    %3604 = vmatpush1.bf16.msra.mxu0 0
    %3605 = vmatprep.subr.bf16.mxu0 0
    %3606 = vmatpush1.bf16.msra.mxu0 0
    %3607 = vmatprep.subr.bf16.mxu0 0
    %3608 = vmatpush1.bf16.msra.mxu0 0
    %3609 = vmatprep.subr.bf16.mxu0 0
    %3610 = vmatpush1.bf16.msra.mxu0 0
    %3611 = vmatprep.mubr.bf16.mxu0 0
    %3612 = vmatmul.mubr.bf16.gmra.mrb[0].mxu0 %v3517
    %v3613 = vpop.f32.mrb[0].mxu0
    %v3614 = vadd.f32 %v3529, %v3613
    %v3615 = vpop.f32.mrb[0].mxu0
    %v3616 = vpop.f32.mrb[0].mxu0
    %v3617 = vadd.f32 %v3529, %v3616
    %v3618 = vpop.f32.mrb[0].mxu0
    %3619 = vmatprep.mubr.bf16.mxu0 0
    %3620 = vmatmul.mubr.bf16.gmra.mrb[0].mxu0 %v3518
    %v3621 = vpop.f32.mrb[0].mxu0
    %v3622 = vadd.f32 %v3529, %v3621
    %v3623 = vpop.f32.mrb[0].mxu0
    %v3624 = vpop.f32.mrb[0].mxu0
    %v3625 = vadd.f32 %v3529, %v3624
    %v3626 = vpop.f32.mrb[0].mxu0
    %3627 = vmatprep.mubr.bf16.mxu0 0
    %3628 = vmatmul.mubr.bf16.gmra.mrb[0].mxu0 %v3519
    %v3629 = vpop.f32.mrb[0].mxu0
    %v3630 = vadd.f32 %v3529, %v3629
    %v3631 = vpop.f32.mrb[0].mxu0
    %v3632 = vpop.f32.mrb[0].mxu0
    %v3633 = vadd.f32 %v3529, %v3632
    %v3634 = vpop.f32.mrb[0].mxu0
    %3635 = vmatprep.mubr.bf16.mxu0 0
    %3636 = vmatmul.mubr.bf16.gmra.mrb[0].mxu0 %v3520
    %v3637 = vpop.f32.mrb[0].mxu0
    %v3638 = vadd.f32 %v3529, %v3637
    %v3639 = vpop.f32.mrb[0].mxu0
    %v3640 = vpop.f32.mrb[0].mxu0
    %v3641 = vadd.f32 %v3529, %v3640
    %v3642 = vpop.f32.mrb[0].mxu0
    %3643 = vmatprep.mubr.bf16.mxu0 0
    %3644 = vmatmul.mubr.bf16.gmra.mrb[0].mxu0 %v3521
    %v3645 = vpop.f32.mrb[0].mxu0
    %v3646 = vadd.f32 %v3529, %v3645
    %v3647 = vpop.f32.mrb[0].mxu0
    %v3648 = vpop.f32.mrb[0].mxu0
    %v3649 = vadd.f32 %v3529, %v3648
    %v3650 = vpop.f32.mrb[0].mxu0
    %3651 = vmatprep.mubr.bf16.mxu0 0
    %3652 = vmatmul.mubr.bf16.gmra.mrb[0].mxu0 %v3522
    %v3653 = vpop.f32.mrb[0].mxu0
    %v3654 = vadd.f32 %v3529, %v3653
    %v3655 = vpop.f32.mrb[0].mxu0
    %v3656 = vpop.f32.mrb[0].mxu0
    %v3657 = vadd.f32 %v3529, %v3656
    %v3658 = vpop.f32.mrb[0].mxu0
    %3659 = vmatprep.mubr.bf16.mxu0 0
    %3660 = vmatmul.mubr.bf16.gmra.mrb[0].mxu0 %v3523
    %v3661 = vpop.f32.mrb[0].mxu0
    %v3662 = vadd.f32 %v3529, %v3661
    %v3663 = vpop.f32.mrb[0].mxu0
    %v3664 = vpop.f32.mrb[0].mxu0
    %v3665 = vadd.f32 %v3529, %v3664
    %v3666 = vpop.f32.mrb[0].mxu0
    %3667 = vmatprep.mubr.bf16.mxu0 0
    %3668 = vmatmul.mubr.bf16.gmra.mrb[0].mxu0 %v3524
    %v3669 = vpop.f32.mrb[0].mxu0
    %v3670 = vadd.f32 %v3529, %v3669
    %v3671 = vpop.f32.mrb[0].mxu0
    %v3672 = vpop.f32.mrb[0].mxu0
    %v3673 = vadd.f32 %v3529, %v3672
    %v3674 = vpop.f32.mrb[0].mxu0
    %3675 = vdwg.mxu0
    %3676 = vst [vmem:[#allocation15] sm:$0xff] %v3614
    %3677 = vst [vmem:[#allocation15 + $0x8] sm:$0xff] %v3617
    %3678 = vst [vmem:[#allocation15 + $0x10] sm:$0xff] %v3622
    %3679 = vst [vmem:[#allocation15 + $0x18] sm:$0xff] %v3625
    %3680 = vst [vmem:[#allocation15 + $0x20] sm:$0xff] %v3630
    %3681 = vst [vmem:[#allocation15 + $0x28] sm:$0xff] %v3633
    %3682 = vst [vmem:[#allocation15 + $0x30] sm:$0xff] %v3638
    %3683 = vst [vmem:[#allocation15 + $0x38] sm:$0xff] %v3641
    %3684 = vst [vmem:[#allocation15 + $0x40] sm:$0xff] %v3646
    %3685 = vst [vmem:[#allocation15 + $0x48] sm:$0xff] %v3649
    %3686 = vst [vmem:[#allocation15 + $0x50] sm:$0xff] %v3654
    %3687 = vst [vmem:[#allocation15 + $0x58] sm:$0xff] %v3657
    %3688 = vst [vmem:[#allocation15 + $0x60] sm:$0xff] %v3662
    %3689 = vst [vmem:[#allocation15 + $0x68] sm:$0xff] %v3665
    %3690 = vst [vmem:[#allocation15 + $0x70] sm:$0xff] %v3670
    %3691 = vst [vmem:[#allocation15 + $0x78] sm:$0xff] %v3673
    // Predicated region
    $region54: #{tpu_custom_call.1} parent=1 // pred_check
      _
    $region55: #{tpu_custom_call.1} parent=1 // pred_check_branch
      %3693 = sbr.rel (0) target = $region57
    $region56: #{tpu_custom_call.1} parent=1 // pred_region
      %s3695 = ssub.s32 2048, 2048
      %3696 = vsyncadd [#allocation9], %s3695
      %s3697 = sshll.u32 [#allocation15], 4
      %s3698 = int_to_ptr.vmem [resolvable:$true] %s3697
      %3703 = dma.vmem_to_hbm [thread:$0]  %s3698, 2048, %s8, [#allocation9], 128, 128, 8
    $region57: #{tpu_custom_call.1} parent=1 // pred_fallthru
      _
    // Predicated region
    $region58: #{tpu_custom_call.1} parent=1 // pred_check
      _
    $region59: #{tpu_custom_call.1} parent=1 // pred_check_branch
      %3705 = sbr.rel (0) target = $region61
    $region60: #{tpu_custom_call.1} parent=1 // pred_region
      %s3707 = ssub.s32 512, 512
      %3708 = vsyncadd [#allocation17], %s3707
      %s3709 = sshll.u32 [#allocation16], 4
      %s3710 = int_to_ptr.vmem [resolvable:$true] %s3709
      %3715 = dma.vmem_to_hbm [thread:$0]  %s3710, 512, %s9, [#allocation17], 128, 128, 8
    $region61: #{tpu_custom_call.1} parent=1 // pred_fallthru
      _
    // Predicated region
    $region62: #{tpu_custom_call.1} parent=1 // pred_check
      _
    $region63: #{tpu_custom_call.1} parent=1 // pred_check_branch
      %3717 = sbr.rel (0) target = $region65
    $region64: #{tpu_custom_call.1} parent=1 // pred_region
      %s3719 = ssub.s32 512, 512
      %3720 = vsyncadd [#allocation17], %s3719
      %s3721 = sshll.u32 [#allocation18], 4
      %s3722 = int_to_ptr.vmem [resolvable:$true] %s3721
      %3727 = dma.vmem_to_hbm [thread:$0]  %s3722, 512, %s10, [#allocation17], 128, 128, 8
    $region65: #{tpu_custom_call.1} parent=1 // pred_fallthru
      _
    // Predicated region
    $region66: #{tpu_custom_call.1} parent=1 // pred_check
      _
    $region67: #{tpu_custom_call.1} parent=1 // pred_check_branch
      %3729 = sbr.rel (0) target = $region69
    $region68: #{tpu_custom_call.1} parent=1 // pred_region
      %3730 = dma.done [#allocation9], 2048
    $region69: #{tpu_custom_call.1} parent=1 // pred_fallthru
      _
    // Predicated region
    $region70: #{tpu_custom_call.1} parent=1 // pred_check
      _
    $region71: #{tpu_custom_call.1} parent=1 // pred_check_branch
      %3732 = sbr.rel (0) target = $region73
    $region72: #{tpu_custom_call.1} parent=1 // pred_region
      %3733 = dma.done [#allocation17], 512
    $region73: #{tpu_custom_call.1} parent=1 // pred_fallthru
      _
    // Predicated region
    $region74: #{tpu_custom_call.1} parent=1 // pred_check
      _
    $region75: #{tpu_custom_call.1} parent=1 // pred_check_branch
      %3735 = sbr.rel (0) target = $region77
    $region76: #{tpu_custom_call.1} parent=1 // pred_region
      %3736 = dma.done [#allocation17], 512
    $region77: #{tpu_custom_call.1} parent=1 // pred_fallthru
      _
    %3737 = vsyncpa [#allocation8], 1
    %3738 = vsyncpa [#allocation11], 1
    %3739 = vsyncpa [#allocation14], 1
    %3740 = vsyncpa [#allocation9], 1
    %3741 = vsyncpa [#allocation17], 1
  %3742 = vsyncmov [#allocation6]
  %s3743 = vpop.sfrf %3742
  %p3744 = scmp.eq.s32.totalorder %s3743, 0
  %p3745 = pneg %p3744
  %3747 = shalt.err (%p3745)
  %s3748 = scalar_lea.sflag [#allocation6], 1
  %3749 = vsyncmov %s3748
  %s3750 = vpop.sfrf %3749
  %p3751 = scmp.eq.s32.totalorder %s3750, 0
  %p3752 = pneg %p3751
  %3754 = shalt.err (%p3752)
  %s3755 = scalar_lea.sflag [#allocation6], 2
  %3756 = vsyncmov %s3755
  %s3757 = vpop.sfrf %3756
  %p3758 = scmp.eq.s32.totalorder %s3757, 0
  %p3759 = pneg %p3758
  %3761 = shalt.err (%p3759)
  %s3762 = scalar_lea.sflag [#allocation6], 3
  %3763 = vsyncmov %s3762
  %s3764 = vpop.sfrf %3763
  %p3765 = scmp.eq.s32.totalorder %s3764, 0
  %p3766 = pneg %p3765
  %3768 = shalt.err (%p3766)

</llo_original>
